<compile_context>
chip_gen: v7x
topology: tpu7x:2x2x1
jax: 0.10.0
libtpu: 0.0.40
codegen_flags: <defaults>
</compile_context>

<pallas_src>
import functools

import jax
import jax.numpy as jnp
from jax.experimental import pallas as pl
from jax.experimental.pallas import tpu as pltpu

EPS = 1e-5


def _conv3x3_kernel(xp_ref, w_ref, y_ref, st_ref, *, h, w, c, cout):
    """3x3 / stride-1 conv of one pre-padded image as 9 tap-wise MXU matmuls.

    xp_ref: (1, h+2, w+2, c) bf16 zero-padded input tile.
    w_ref : (9, c, cout)     bf16 tap-major weight slices.
    y_ref : (1, h, w, cout)  bf16 raw conv output.
    st_ref: (1, 1, 2*cout)   f32  per-image (sum | sum_sq) BatchNorm partials.
    """
    xp = xp_ref[0]                                    # (h+2, w+2, c) bf16
    acc = jnp.zeros((h * w, cout), jnp.float32)
    for t in range(9):                                # unrolled at trace time
        ky, kx = divmod(t, 3)
        lhs = xp[ky:ky + h, kx:kx + w, :].reshape(h * w, c)
        acc = acc + jnp.dot(lhs, w_ref[t], preferred_element_type=jnp.float32)
    y_ref[0] = acc.reshape(h, w, cout).astype(y_ref.dtype)
    # Stats from the f32 accumulator (before the bf16 downcast), lane-dense.
    st_ref[0] = jnp.concatenate(
        [jnp.sum(acc, axis=0, keepdims=True),
         jnp.sum(acc * acc, axis=0, keepdims=True)], axis=-1)   # (1, 2*cout)


def _conv_pass(xpad, wmat):
    """One gridded conv pass over pre-padded NHWC input (one image per step)."""
    n, hp, wp, c = xpad.shape
    h, w = hp - 2, wp - 2
    cout = wmat.shape[-1]
    kernel = functools.partial(_conv3x3_kernel, h=h, w=w, c=c, cout=cout)
    y, st = pl.pallas_call(
        kernel,
        grid=(n,),
        in_specs=[pl.BlockSpec((1, hp, wp, c), lambda b: (b, 0, 0, 0)),
                  pl.BlockSpec((9, c, cout), lambda b: (0, 0, 0))],
        out_specs=[pl.BlockSpec((1, h, w, cout), lambda b: (b, 0, 0, 0)),
                   pl.BlockSpec((1, 1, 2 * cout), lambda b: (b, 0, 0))],
        out_shape=[jax.ShapeDtypeStruct((n, h, w, cout), jnp.bfloat16),
                   jax.ShapeDtypeStruct((n, 1, 2 * cout), jnp.float32)],
        compiler_params=pltpu.CompilerParams(
            dimension_semantics=("parallel",)),
    )(xpad, wmat)
    return y, st


def _bn_affine(stats, gamma, beta, count):
    """Reduce per-image partials -> batch stats -> per-channel scale/shift."""
    c = gamma.shape[0]
    tot = jnp.sum(stats, axis=(0, 1))                 # (2*c,)
    mean = tot[:c] / count
    var = jnp.maximum(tot[c:] / count - mean * mean, 0.0)   # biased variance
    # TODO(synk): E[x^2]-E[x]^2 can cancel for badly-centered activations;
    # switch to a two-pass / Welford reduction if that regime matters.
    scale = gamma * jax.lax.rsqrt(var + EPS)
    shift = beta - mean * scale
    return scale.astype(jnp.float32), shift.astype(jnp.float32)


def _bn_add_relu_kernel(y_ref, r_ref, sc_ref, sh_ref, o_ref):
    """out = relu(bn2(y) + residual); all blocks lane-dense (last dim W*C)."""
    y = y_ref[0].astype(jnp.float32)
    r = r_ref[0].astype(jnp.float32)
    o_ref[0] = jnp.maximum(y * sc_ref[...] + sh_ref[...] + r, 0.0)


def _finalize_pass(y2, res, scale, shift):
    n, h, wc = y2.shape
    row = pl.BlockSpec((1, h, wc), lambda b: (b, 0, 0))
    vec = pl.BlockSpec((1, wc), lambda b: (0, 0))
    return pl.pallas_call(
        _bn_add_relu_kernel,
        grid=(n,),
        in_specs=[row, row, vec, vec],
        out_specs=row,
        out_shape=jax.ShapeDtypeStruct((n, h, wc), jnp.float32),
        compiler_params=pltpu.CompilerParams(
            dimension_semantics=("parallel",)),
    )(y2, res, scale, shift)


def basic_block_forward(x_nchw, w1, g1, b1, w2, g2, b2):
    """BasicBlock forward. x_nchw: (N, C, H, W) f32; w1/w2: (C, C, 3, 3)."""
    n, c, h, w = x_nchw.shape
    cout = w1.shape[0]
    assert cout == c, "residual path requires inplanes == planes (no downsample)"

    # NCHW -> NHWC bf16 (channels on the lane dim); intermediates stay bf16.
    x = jnp.transpose(x_nchw, (0, 2, 3, 1)).astype(jnp.bfloat16)
    # (Cout, Cin, 3, 3) -> (9, Cin, Cout): tap-major weight slices for the MXU.
    w1m = jnp.transpose(w1, (2, 3, 1, 0)).reshape(9, c, cout).astype(jnp.bfloat16)
    w2m = jnp.transpose(w2, (2, 3, 1, 0)).reshape(9, cout, cout).astype(jnp.bfloat16)
    count = float(n * h * w)
    pad = ((0, 0), (1, 1), (1, 1), (0, 0))

    # Pass 1: conv1 over pre-padded x -> raw y1 (bf16) + BN1 partial stats.
    y1, st1 = _conv_pass(jnp.pad(x, pad), w1m)
    scale1, shift1 = _bn_affine(st1, g1, b1, count)

    # bn1 + relu + zero-pad for conv2: one small fused XLA elementwise+pad
    # (zero padding is applied AFTER the activation, matching conv2's padding).
    a1 = jnp.maximum(
        y1.astype(jnp.float32) * scale1.reshape(1, 1, 1, c)
        + shift1.reshape(1, 1, 1, c), 0.0).astype(jnp.bfloat16)

    # Pass 2: conv2 -> raw y2 (bf16) + BN2 partial stats.
    y2, st2 = _conv_pass(jnp.pad(a1, pad), w2m)
    scale2, shift2 = _bn_affine(st2, g2, b2, count)

    # Pass 3: bn2 + residual add + relu on lane-dense (N, H, W*C) views.
    y2f = y2.reshape(n, h, w * c)
    resf = x.reshape(n, h, w * c)
    sc2 = jnp.tile(scale2, w).reshape(1, w * c)
    sh2 = jnp.tile(shift2, w).reshape(1, w * c)
    out = _finalize_pass(y2f, resf, sc2, sh2)

    # (N, H, W*C) -> NCHW f32
    return jnp.transpose(out.reshape(n, h, w, c), (0, 3, 1, 2))


def basic_block_reference(x, w1, g1, b1, w2, g2, b2):
    """Pure-JAX NCHW reference mirroring the PyTorch forward (training-mode BN)."""
    def conv(inp, wgt):
        return jax.lax.conv_general_dilated(
            inp, wgt, window_strides=(1, 1), padding=((1, 1), (1, 1)),
            dimension_numbers=("NCHW", "OIHW", "NCHW"),
            precision=jax.lax.Precision.HIGHEST)

    def bn(inp, g, b):
        mean = jnp.mean(inp, axis=(0, 2, 3), keepdims=True)
        var = jnp.mean(jnp.square(inp - mean), axis=(0, 2, 3), keepdims=True)
        return ((inp - mean) * jax.lax.rsqrt(var + EPS)
                * g.reshape(1, -1, 1, 1) + b.reshape(1, -1, 1, 1))

    out = jax.nn.relu(bn(conv(x, w1), g1, b1))
    out = bn(conv(out, w2), g2, b2) + x
    return jax.nn.relu(out)


if __name__ == "__main__":
    # inplanes = planes = 64: realistic ResNet stage width so the channel
    # (lane) dim is dense, but the tensors stay tiny (2 x 64 x 16 x 16).
    N, C, H, W = 2, 64, 16, 16

    key = jax.random.PRNGKey(0)
    kx, k1, k2 = jax.random.split(key, 3)
    x = jax.random.normal(kx, (N, C, H, W), jnp.float32)
    w1 = jax.random.normal(k1, (C, C, 3, 3), jnp.float32) * 0.1
    w2 = jax.random.normal(k2, (C, C, 3, 3), jnp.float32) * 0.1
    # BatchNorm affine params: PyTorch default init (weight=1, bias=0)
    g1 = jnp.ones((C,), jnp.float32)
    b1 = jnp.zeros((C,), jnp.float32)
    g2 = jnp.ones((C,), jnp.float32)
    b2 = jnp.zeros((C,), jnp.float32)

    out = basic_block_forward(x, w1, g1, b1, w2, g2, b2)
    out = jax.block_until_ready(out)

    ref = basic_block_reference(x, w1, g1, b1, w2, g2, b2)
    ref = jax.block_until_ready(ref)

    assert out.shape == (N, C, H, W), out.shape
    # bf16 MXU inputs AND bf16 intermediates (f32 accumulation / BN stats):
    # tolerance loosened accordingly vs the pure-f32 reference.
    assert jnp.allclose(out, ref, rtol=3e-2, atol=5e-2), float(
        jnp.max(jnp.abs(out - ref)))

    print("KERNEL_OK")
</pallas_src>

<mosaic_0001>
module attributes {stable_mosaic.version = 11 : i64} {
  func.func @_conv3x3_kernel(%arg0: i32, %arg1: memref<1x18x18x64xbf16, #tpu.memory_space<vmem>>, %arg2: memref<9x64x64xbf16, #tpu.memory_space<vmem>>, %arg3: memref<1x16x16x64xbf16, #tpu.memory_space<vmem>>, %arg4: memref<1x1x128xf32, #tpu.memory_space<vmem>>) attributes {dimension_semantics = [#tpu.dimension_semantics<parallel>], iteration_bounds = array<i64: 2>, scalar_prefetch = 0 : i64, scratch_operands = 0 : i64, tpu.core_type = #tpu.core_type<tc>, window_params = [{transform_indices = @transform_0, window_bounds = array<i64: 1, 18, 18, 64>}, {pipeline_mode = #tpu.pipeline_mode<synchronous>, transform_indices = @transform_1, window_bounds = array<i64: 9, 64, 64>}, {transform_indices = @transform_2, window_bounds = array<i64: 1, 16, 16, 64>}, {transform_indices = @transform_3, window_bounds = array<i64: 1, 1, 128>}]} {
    %c0 = arith.constant 0 : index
    %c0_0 = arith.constant 0 : index
    %c0_1 = arith.constant 0 : index
    %c0_2 = arith.constant 0 : index
    %0 = vector.load %arg1[%c0, %c0_0, %c0_1, %c0_2] : memref<1x18x18x64xbf16, #tpu.memory_space<vmem>>, vector<1x18x18x64xbf16>
    %1 = vector.shape_cast %0 : vector<1x18x18x64xbf16> to vector<18x18x64xbf16>
    %cst = arith.constant 0.000000e+00 : f32
    %2 = vector.broadcast %cst : f32 to vector<256x64xf32>
    %3 = vector.extract_strided_slice %1 {offsets = [0, 0, 0], sizes = [16, 16, 64], strides = [1, 1, 1]} : vector<18x18x64xbf16> to vector<16x16x64xbf16>
    %4 = vector.shape_cast %3 : vector<16x16x64xbf16> to vector<256x64xbf16>
    %c0_3 = arith.constant 0 : index
    %c0_4 = arith.constant 0 : index
    %c0_5 = arith.constant 0 : index
    %5 = vector.load %arg2[%c0_3, %c0_4, %c0_5] : memref<9x64x64xbf16, #tpu.memory_space<vmem>>, vector<1x64x64xbf16>
    %6 = vector.shape_cast %5 : vector<1x64x64xbf16> to vector<64x64xbf16>
    %cst_6 = arith.constant dense<0.000000e+00> : vector<256x64xf32>
    %7 = tpu.matmul %4, %6, %cst_6 {dimension_numbers = #tpu.dot_dimension_numbers<[1], [0], [0], [1], [0, 0, 1, 1], [], []>} : vector<256x64xbf16>, vector<64x64xbf16>, vector<256x64xf32> -> vector<256x64xf32>
    %8 = arith.addf %2, %7 : vector<256x64xf32>
    %9 = vector.extract_strided_slice %1 {offsets = [0, 1, 0], sizes = [16, 16, 64], strides = [1, 1, 1]} : vector<18x18x64xbf16> to vector<16x16x64xbf16>
    %10 = vector.shape_cast %9 : vector<16x16x64xbf16> to vector<256x64xbf16>
    %c1 = arith.constant 1 : index
    %c0_7 = arith.constant 0 : index
    %c0_8 = arith.constant 0 : index
    %11 = vector.load %arg2[%c1, %c0_7, %c0_8] : memref<9x64x64xbf16, #tpu.memory_space<vmem>>, vector<1x64x64xbf16>
    %12 = vector.shape_cast %11 : vector<1x64x64xbf16> to vector<64x64xbf16>
    %cst_9 = arith.constant dense<0.000000e+00> : vector<256x64xf32>
    %13 = tpu.matmul %10, %12, %cst_9 {dimension_numbers = #tpu.dot_dimension_numbers<[1], [0], [0], [1], [0, 0, 1, 1], [], []>} : vector<256x64xbf16>, vector<64x64xbf16>, vector<256x64xf32> -> vector<256x64xf32>
    %14 = arith.addf %8, %13 : vector<256x64xf32>
    %15 = vector.extract_strided_slice %1 {offsets = [0, 2, 0], sizes = [16, 16, 64], strides = [1, 1, 1]} : vector<18x18x64xbf16> to vector<16x16x64xbf16>
    %16 = vector.shape_cast %15 : vector<16x16x64xbf16> to vector<256x64xbf16>
    %c2 = arith.constant 2 : index
    %c0_10 = arith.constant 0 : index
    %c0_11 = arith.constant 0 : index
    %17 = vector.load %arg2[%c2, %c0_10, %c0_11] : memref<9x64x64xbf16, #tpu.memory_space<vmem>>, vector<1x64x64xbf16>
    %18 = vector.shape_cast %17 : vector<1x64x64xbf16> to vector<64x64xbf16>
    %cst_12 = arith.constant dense<0.000000e+00> : vector<256x64xf32>
    %19 = tpu.matmul %16, %18, %cst_12 {dimension_numbers = #tpu.dot_dimension_numbers<[1], [0], [0], [1], [0, 0, 1, 1], [], []>} : vector<256x64xbf16>, vector<64x64xbf16>, vector<256x64xf32> -> vector<256x64xf32>
    %20 = arith.addf %14, %19 : vector<256x64xf32>
    %21 = vector.extract_strided_slice %1 {offsets = [1, 0, 0], sizes = [16, 16, 64], strides = [1, 1, 1]} : vector<18x18x64xbf16> to vector<16x16x64xbf16>
    %22 = vector.shape_cast %21 : vector<16x16x64xbf16> to vector<256x64xbf16>
    %c3 = arith.constant 3 : index
    %c0_13 = arith.constant 0 : index
    %c0_14 = arith.constant 0 : index
    %23 = vector.load %arg2[%c3, %c0_13, %c0_14] : memref<9x64x64xbf16, #tpu.memory_space<vmem>>, vector<1x64x64xbf16>
    %24 = vector.shape_cast %23 : vector<1x64x64xbf16> to vector<64x64xbf16>
    %cst_15 = arith.constant dense<0.000000e+00> : vector<256x64xf32>
    %25 = tpu.matmul %22, %24, %cst_15 {dimension_numbers = #tpu.dot_dimension_numbers<[1], [0], [0], [1], [0, 0, 1, 1], [], []>} : vector<256x64xbf16>, vector<64x64xbf16>, vector<256x64xf32> -> vector<256x64xf32>
    %26 = arith.addf %20, %25 : vector<256x64xf32>
    %27 = vector.extract_strided_slice %1 {offsets = [1, 1, 0], sizes = [16, 16, 64], strides = [1, 1, 1]} : vector<18x18x64xbf16> to vector<16x16x64xbf16>
    %28 = vector.shape_cast %27 : vector<16x16x64xbf16> to vector<256x64xbf16>
    %c4 = arith.constant 4 : index
    %c0_16 = arith.constant 0 : index
    %c0_17 = arith.constant 0 : index
    %29 = vector.load %arg2[%c4, %c0_16, %c0_17] : memref<9x64x64xbf16, #tpu.memory_space<vmem>>, vector<1x64x64xbf16>
    %30 = vector.shape_cast %29 : vector<1x64x64xbf16> to vector<64x64xbf16>
    %cst_18 = arith.constant dense<0.000000e+00> : vector<256x64xf32>
    %31 = tpu.matmul %28, %30, %cst_18 {dimension_numbers = #tpu.dot_dimension_numbers<[1], [0], [0], [1], [0, 0, 1, 1], [], []>} : vector<256x64xbf16>, vector<64x64xbf16>, vector<256x64xf32> -> vector<256x64xf32>
    %32 = arith.addf %26, %31 : vector<256x64xf32>
    %33 = vector.extract_strided_slice %1 {offsets = [1, 2, 0], sizes = [16, 16, 64], strides = [1, 1, 1]} : vector<18x18x64xbf16> to vector<16x16x64xbf16>
    %34 = vector.shape_cast %33 : vector<16x16x64xbf16> to vector<256x64xbf16>
    %c5 = arith.constant 5 : index
    %c0_19 = arith.constant 0 : index
    %c0_20 = arith.constant 0 : index
    %35 = vector.load %arg2[%c5, %c0_19, %c0_20] : memref<9x64x64xbf16, #tpu.memory_space<vmem>>, vector<1x64x64xbf16>
    %36 = vector.shape_cast %35 : vector<1x64x64xbf16> to vector<64x64xbf16>
    %cst_21 = arith.constant dense<0.000000e+00> : vector<256x64xf32>
    %37 = tpu.matmul %34, %36, %cst_21 {dimension_numbers = #tpu.dot_dimension_numbers<[1], [0], [0], [1], [0, 0, 1, 1], [], []>} : vector<256x64xbf16>, vector<64x64xbf16>, vector<256x64xf32> -> vector<256x64xf32>
    %38 = arith.addf %32, %37 : vector<256x64xf32>
    %39 = vector.extract_strided_slice %1 {offsets = [2, 0, 0], sizes = [16, 16, 64], strides = [1, 1, 1]} : vector<18x18x64xbf16> to vector<16x16x64xbf16>
    %40 = vector.shape_cast %39 : vector<16x16x64xbf16> to vector<256x64xbf16>
    %c6 = arith.constant 6 : index
    %c0_22 = arith.constant 0 : index
    %c0_23 = arith.constant 0 : index
    %41 = vector.load %arg2[%c6, %c0_22, %c0_23] : memref<9x64x64xbf16, #tpu.memory_space<vmem>>, vector<1x64x64xbf16>
    %42 = vector.shape_cast %41 : vector<1x64x64xbf16> to vector<64x64xbf16>
    %cst_24 = arith.constant dense<0.000000e+00> : vector<256x64xf32>
    %43 = tpu.matmul %40, %42, %cst_24 {dimension_numbers = #tpu.dot_dimension_numbers<[1], [0], [0], [1], [0, 0, 1, 1], [], []>} : vector<256x64xbf16>, vector<64x64xbf16>, vector<256x64xf32> -> vector<256x64xf32>
    %44 = arith.addf %38, %43 : vector<256x64xf32>
    %45 = vector.extract_strided_slice %1 {offsets = [2, 1, 0], sizes = [16, 16, 64], strides = [1, 1, 1]} : vector<18x18x64xbf16> to vector<16x16x64xbf16>
    %46 = vector.shape_cast %45 : vector<16x16x64xbf16> to vector<256x64xbf16>
    %c7 = arith.constant 7 : index
    %c0_25 = arith.constant 0 : index
    %c0_26 = arith.constant 0 : index
    %47 = vector.load %arg2[%c7, %c0_25, %c0_26] : memref<9x64x64xbf16, #tpu.memory_space<vmem>>, vector<1x64x64xbf16>
    %48 = vector.shape_cast %47 : vector<1x64x64xbf16> to vector<64x64xbf16>
    %cst_27 = arith.constant dense<0.000000e+00> : vector<256x64xf32>
    %49 = tpu.matmul %46, %48, %cst_27 {dimension_numbers = #tpu.dot_dimension_numbers<[1], [0], [0], [1], [0, 0, 1, 1], [], []>} : vector<256x64xbf16>, vector<64x64xbf16>, vector<256x64xf32> -> vector<256x64xf32>
    %50 = arith.addf %44, %49 : vector<256x64xf32>
    %51 = vector.extract_strided_slice %1 {offsets = [2, 2, 0], sizes = [16, 16, 64], strides = [1, 1, 1]} : vector<18x18x64xbf16> to vector<16x16x64xbf16>
    %52 = vector.shape_cast %51 : vector<16x16x64xbf16> to vector<256x64xbf16>
    %c8 = arith.constant 8 : index
    %c0_28 = arith.constant 0 : index
    %c0_29 = arith.constant 0 : index
    %53 = vector.load %arg2[%c8, %c0_28, %c0_29] : memref<9x64x64xbf16, #tpu.memory_space<vmem>>, vector<1x64x64xbf16>
    %54 = vector.shape_cast %53 : vector<1x64x64xbf16> to vector<64x64xbf16>
    %cst_30 = arith.constant dense<0.000000e+00> : vector<256x64xf32>
    %55 = tpu.matmul %52, %54, %cst_30 {dimension_numbers = #tpu.dot_dimension_numbers<[1], [0], [0], [1], [0, 0, 1, 1], [], []>} : vector<256x64xbf16>, vector<64x64xbf16>, vector<256x64xf32> -> vector<256x64xf32>
    %56 = arith.addf %50, %55 : vector<256x64xf32>
    %57 = vector.shape_cast %56 : vector<256x64xf32> to vector<16x16x64xf32>
    %58 = arith.truncf %57 : vector<16x16x64xf32> to vector<16x16x64xbf16>
    %c0_31 = arith.constant 0 : index
    %c0_32 = arith.constant 0 : index
    %c0_33 = arith.constant 0 : index
    %c0_34 = arith.constant 0 : index
    %59 = vector.load %arg3[%c0_31, %c0_32, %c0_33, %c0_34] : memref<1x16x16x64xbf16, #tpu.memory_space<vmem>>, vector<1x16x16x64xbf16>
    %60 = vector.shape_cast %59 : vector<1x16x16x64xbf16> to vector<16x16x64xbf16>
    %61 = vector.shape_cast %58 : vector<16x16x64xbf16> to vector<1x16x16x64xbf16>
    tpu.vector_store %arg3[%c0_31, %c0_32, %c0_33, %c0_34], %61 {strides = array<i32>} : memref<1x16x16x64xbf16, #tpu.memory_space<vmem>>, vector<1x16x16x64xbf16>,
    %cst_35 = arith.constant dense<0.000000e+00> : vector<64xf32>
    %62 = vector.multi_reduction <add>, %56, %cst_35 [0] : vector<256x64xf32> to vector<64xf32>
    %63 = vector.shape_cast %62 : vector<64xf32> to vector<1x64xf32>
    %64 = arith.mulf %56, %56 : vector<256x64xf32>
    %cst_36 = arith.constant dense<0.000000e+00> : vector<64xf32>
    %65 = vector.multi_reduction <add>, %64, %cst_36 [0] : vector<256x64xf32> to vector<64xf32>
    %66 = vector.shape_cast %65 : vector<64xf32> to vector<1x64xf32>
    %67 = tpu.concatenate %63, %66 in 1 : vector<1x64xf32>, vector<1x64xf32> -> vector<1x128xf32>
    %c0_37 = arith.constant 0 : index
    %c0_38 = arith.constant 0 : index
    %c0_39 = arith.constant 0 : index
    %68 = vector.load %arg4[%c0_37, %c0_38, %c0_39] : memref<1x1x128xf32, #tpu.memory_space<vmem>>, vector<1x1x128xf32>
    %69 = vector.shape_cast %68 : vector<1x1x128xf32> to vector<1x128xf32>
    %70 = vector.shape_cast %67 : vector<1x128xf32> to vector<1x1x128xf32>
    tpu.vector_store %arg4[%c0_37, %c0_38, %c0_39], %70 {strides = array<i32>} : memref<1x1x128xf32, #tpu.memory_space<vmem>>, vector<1x1x128xf32>,
    return
  }
  func.func @transform_0(%arg0: i32) -> (i32, i32, i32, i32) {
    %c0_i32 = arith.constant 0 : i32
    %c0_i32_0 = arith.constant 0 : i32
    %c0_i32_1 = arith.constant 0 : i32
    %c0_i32_2 = arith.constant 0 : i32
    return %arg0, %c0_i32, %c0_i32_0, %c0_i32_1 : i32, i32, i32, i32
  }
  func.func @transform_1(%arg0: i32) -> (i32, i32, i32) {
    %c0_i32 = arith.constant 0 : i32
    %c0_i32_0 = arith.constant 0 : i32
    %c0_i32_1 = arith.constant 0 : i32
    %c0_i32_2 = arith.constant 0 : i32
    return %c0_i32, %c0_i32_0, %c0_i32_1 : i32, i32, i32
  }
  func.func @transform_2(%arg0: i32) -> (i32, i32, i32, i32) {
    %c0_i32 = arith.constant 0 : i32
    %c0_i32_0 = arith.constant 0 : i32
    %c0_i32_1 = arith.constant 0 : i32
    %c0_i32_2 = arith.constant 0 : i32
    return %arg0, %c0_i32, %c0_i32_0, %c0_i32_1 : i32, i32, i32, i32
  }
  func.func @transform_3(%arg0: i32) -> (i32, i32, i32) {
    %c0_i32 = arith.constant 0 : i32
    %c0_i32_0 = arith.constant 0 : i32
    %c0_i32_1 = arith.constant 0 : i32
    return %arg0, %c0_i32, %c0_i32_0 : i32, i32, i32
  }
}

</mosaic_0001>

<llo_original>
// kernel: tpu_custom_call.1
$region0: #{tpu_custom_call.1}
  #allocation0 [shape = 'u32[]', space=smem, size = 0x4, offset = 0x4, fixed_abs, tag = 'smem constant byte address 0x4 - core index']
  #allocation1 [shape = 'u32[144,128]{1,0:T(1,128)}', space=vmem, size = 0x12000, scoped, tag = 'internal scratch']
  %s0 = inlined_call_operand.vmem [shape: bf16[2,18,18,64], index: 0, kind: input, shape index: {}]
  %s1 = inlined_call_operand.vmem [shape: bf16[9,64,64], index: 1, kind: input, shape index: {}]
  %s2 = inlined_call_operand.hbm [shape: bf16[2,16,16,64], index: 2, kind: output, shape index: {0}]
  %s3 = inlined_call_operand.hbm [shape: f32[2,1,128], index: 3, kind: output, shape index: {1}]
  %4 = xla_tuple %s2, %s3
  %s5 = sld [smem:[#allocation0]]
  $region49: #{tpu_custom_call.1} parent=0
    _
  %s7 = ssub.s32 1, %s5
  %s8 = scalar_select 0, %s7, %s5
  $region1: #{tpu_custom_call.1} parent=0
    #allocation2 [shape = 'u8[131072]{0}', space=vmem, size = 0x20000, scoped, tag = 'output window, operand 0']
    #allocation3 [shape = 's32[2]{0}', space=sflag, size = 0x8, scoped, tag = 'scoped memory for tpu_custom_call.1']
    #allocation4 [shape = 'u8[1024]{0}', space=vmem, size = 0x400, scoped, tag = 'output window, operand 1']
    #allocation5 [shape = 's32[2]{0}', space=sflag, size = 0x8, scoped, tag = 'scoped memory for tpu_custom_call.1']
    %9 = vsyncpa [#allocation3], 0
    %s10 = scalar_lea.sflag [#allocation3], 1
    %11 = vsyncpa %s10, 0
    %12 = vsyncpa [#allocation5], 0
    %s13 = scalar_lea.sflag [#allocation5], 1
    %14 = vsyncpa %s13, 0
    loop: start=0, step=1, limit=4
    $region2: #{tpu_custom_call.1} parent=1 // loop_pre_header
      _
    $region3: #{tpu_custom_call.1} parent=1 // loop_header
      %s16 = sphi 0, %s20
      %p17 = scmp.ge.s32.totalorder %s16, 4
      %s26 = sphi 0, %s28
      %s29 = sphi 0, %s26
      %s30 = sphi 0, %s29
      %s46 = sphi 0, %s30
      %s50 = sphi 0, %s50
      %s52 = sphi 0, %s50
      %s53 = sphi 0, %s52
      %s67 = sphi 0, %s53
      %s73 = sphi 0, %s75
      %s76 = sphi 0, %s73
      %s77 = sphi 0, %s76
      %s93 = sphi 0, %s77
      %s99 = sphi 0, %s101
      %s102 = sphi 0, %s99
      %s103 = sphi 0, %s102
      %s119 = sphi 0, %s103
    $region4: #{tpu_custom_call.1} parent=1 // loop_header_branch
      %19 = sbr.rel (%p17) target = $region8
    $region5: #{tpu_custom_call.1} parent=1 // loop_body
      %s21 = ssub.s32 %s16, 1
      %s22 = ssub.s32 %s16, 2
      %s23 = sadd.s32 %s16, 1
      %s24 = ssub.s32 %s16, %s23
      %p25 = scmp.eq.s32.totalorder %s24, 0
      %s27 = sadd.s32 %s26, 1
      %s28 = scalar_select %p25, %s26, %s27
      %p31 = pneg %p25
      %p32 = scmp.eq.s32.totalorder %s16, 1
      %p33 = por %p31, %p32
      %p34 = scmp.ne.s32.totalorder %s26, %s29
      %p35 = scmp.eq.s32.totalorder %s16, 0
      %p36 = por %p34, %p35
      %p37 = scmp.ne.s32.totalorder %s26, %s29
      %p38 = scmp.eq.s32.totalorder %s21, 1
      %p39 = por %p37, %p38
      %p40 = scmp.ne.s32.totalorder %s29, %s30
      %p41 = scmp.eq.s32.totalorder %s21, 0
      %p42 = por %p40, %p41
      %p43 = scmp.ne.s32.totalorder %s29, %s30
      %p44 = scmp.eq.s32.totalorder %s22, 1
      %p45 = por %p43, %p44
      %p47 = scmp.ne.s32.totalorder %s30, %s46
      %p48 = scmp.eq.s32.totalorder %s22, 0
      %p49 = por %p47, %p48
      %s51 = sadd.s32 %s50, 1
      %p54 = scmp.eq.s32.totalorder %s16, 1
      %p55 = scmp.ne.s32.totalorder %s50, %s52
      %p56 = scmp.eq.s32.totalorder %s16, 0
      %p57 = por %p55, %p56
      %p58 = scmp.ne.s32.totalorder %s50, %s52
      %p59 = scmp.eq.s32.totalorder %s21, 1
      %p60 = por %p58, %p59
      %p61 = scmp.ne.s32.totalorder %s52, %s53
      %p62 = scmp.eq.s32.totalorder %s21, 0
      %p63 = por %p61, %p62
      %p64 = scmp.ne.s32.totalorder %s52, %s53
      %p65 = scmp.eq.s32.totalorder %s22, 1
      %p66 = por %p64, %p65
      %p68 = scmp.ne.s32.totalorder %s53, %s67
      %p69 = scmp.eq.s32.totalorder %s22, 0
      %p70 = por %p68, %p69
      %s71 = ssub.s32 %s16, %s23
      %p72 = scmp.eq.s32.totalorder %s71, 0
      %s74 = sadd.s32 %s73, 1
      %s75 = scalar_select %p72, %s73, %s74
      %p78 = pneg %p72
      %p79 = scmp.eq.s32.totalorder %s16, 1
      %p80 = por %p78, %p79
      %p81 = scmp.ne.s32.totalorder %s73, %s76
      %p82 = scmp.eq.s32.totalorder %s16, 0
      %p83 = por %p81, %p82
      %p84 = scmp.ne.s32.totalorder %s73, %s76
      %p85 = scmp.eq.s32.totalorder %s21, 1
      %p86 = por %p84, %p85
      %p87 = scmp.ne.s32.totalorder %s76, %s77
      %p88 = scmp.eq.s32.totalorder %s21, 0
      %p89 = por %p87, %p88
      %p90 = scmp.ne.s32.totalorder %s76, %s77
      %p91 = scmp.eq.s32.totalorder %s22, 1
      %p92 = por %p90, %p91
      %p94 = scmp.ne.s32.totalorder %s77, %s93
      %p95 = scmp.eq.s32.totalorder %s22, 0
      %p96 = por %p94, %p95
      %s97 = ssub.s32 %s16, %s23
      %p98 = scmp.eq.s32.totalorder %s97, 0
      %s100 = sadd.s32 %s99, 1
      %s101 = scalar_select %p98, %s99, %s100
      %p104 = pneg %p98
      %p105 = scmp.eq.s32.totalorder %s16, 1
      %p106 = por %p104, %p105
      %p107 = scmp.ne.s32.totalorder %s99, %s102
      %p108 = scmp.eq.s32.totalorder %s16, 0
      %p109 = por %p107, %p108
      %p110 = scmp.ne.s32.totalorder %s99, %s102
      %p111 = scmp.eq.s32.totalorder %s21, 1
      %p112 = por %p110, %p111
      %p113 = scmp.ne.s32.totalorder %s102, %s103
      %p114 = scmp.eq.s32.totalorder %s21, 0
      %p115 = por %p113, %p114
      %p116 = scmp.ne.s32.totalorder %s102, %s103
      %p117 = scmp.eq.s32.totalorder %s22, 1
      %p118 = por %p116, %p117
      %p120 = scmp.ne.s32.totalorder %s103, %s119
      %p121 = scmp.eq.s32.totalorder %s22, 0
      %p122 = por %p120, %p121
      %p123 = scmp.le.s32.totalorder 1, %s16
      %p124 = scmp.lt.s32.totalorder %s16, 3
      %p125 = pnand %p123, %p124
      %p126 = pneg %p125
      // Predicated region
      $region9: #{tpu_custom_call.1} parent=5 // pred_check
        _
      $region10: #{tpu_custom_call.1} parent=5 // pred_check_branch
        %128 = sbr.rel (%p125) target = $region12
      $region11: #{tpu_custom_call.1} parent=5 // pred_region
        %s129 = ssub.s32 %s16, 1
        // Predicated region
        $region13: #{tpu_custom_call.1} parent=11 // pred_check
          %p130 = pneg %p63
        $region14: #{tpu_custom_call.1} parent=11 // pred_check_branch
          %132 = sbr.rel (%p130) target = $region16
        $region15: #{tpu_custom_call.1} parent=11 // pred_region
          _
        $region16: #{tpu_custom_call.1} parent=11 // pred_fallthru
          _
      $region12: #{tpu_custom_call.1} parent=5 // pred_fallthru
        _
      %p133 = scmp.lt.s32.totalorder %s16, 2
      // Predicated region
      $region17: #{tpu_custom_call.1} parent=5 // pred_check
        %p134 = pneg %p133
      $region18: #{tpu_custom_call.1} parent=5 // pred_check_branch
        %136 = sbr.rel (%p134) target = $region20
      $region19: #{tpu_custom_call.1} parent=5 // pred_region
        // Predicated region
        $region21: #{tpu_custom_call.1} parent=19 // pred_check
          %p137 = pneg %p36
        $region22: #{tpu_custom_call.1} parent=19 // pred_check_branch
          %139 = sbr.rel (%p137) target = $region24
        $region23: #{tpu_custom_call.1} parent=19 // pred_region
          %p140 = scmp.lt.s32.totalorder %s16, 1
          %s141 = scalar_select %p140, %s16, 1
          %s142 = smul.addr %s141, 54
          %s143 = smul.addr %s142, 4
          %s144 = scalar_lea.vmem %s0, %s143
        $region24: #{tpu_custom_call.1} parent=19 // pred_fallthru
          _
      $region20: #{tpu_custom_call.1} parent=5 // pred_fallthru
        _
      %p145 = scmp.le.s32.totalorder 1, %s16
      %p146 = scmp.lt.s32.totalorder %s16, 3
      %p147 = pnand %p145, %p146
      %p148 = pneg %p147
      // Predicated region
      $region25: #{tpu_custom_call.1} parent=5 // pred_check
        _
      $region26: #{tpu_custom_call.1} parent=5 // pred_check_branch
        %150 = sbr.rel (%p147) target = $region28
      $region27: #{tpu_custom_call.1} parent=5 // pred_region
        %s151 = ssub.s32 %s16, 1
        %p152 = scmp.lt.s32.totalorder %s21, 1
        %s153 = scalar_select %p152, %s21, 1
        %s154 = smul.addr %s153, 54
        %s155 = smul.addr %s154, 4
        %s156 = scalar_lea.vmem %s0, %s155
        %p157 = pneg %p42
        %p158 = pneg %p39
        %p159 = pneg %p63
        %p160 = pneg %p60
        %p161 = pneg %p89
        %p162 = pneg %p86
        %s163 = sand.u32 %s76, 1
        %s164 = scalar_lea.sflag [#allocation3], %s163
        %s165 = sand.u32 %s76, 1
        %s166 = smul.addr %s165, 128
        %s167 = scalar_lea.vmem [#allocation2], %s166
        %p168 = pneg %p115
        %p169 = pneg %p112
        %s170 = sand.u32 %s102, 1
        %s171 = scalar_lea.sflag [#allocation5], %s170
        %s172 = sand.u32 %s102, 1
        %s173 = scalar_lea.vmem [#allocation4], %s172
        %p174 = scmp.lt.s32.totalorder %s21, 1
        %s175 = scalar_select %p174, %s21, 1
        %s176 = smul.addr %s175, 54
        %s177 = smul.addr %s176, 4
        %s178 = scalar_lea.vmem %s0, %s177
        %v180 = vld [vmem:[%s178] sm:$0xf]
        %v181 = vld [vmem:[%s178 + $0x4] sm:$0xf]
        %v182 = vld [vmem:[%s178 + $0x8] sm:$0x1]
        %v183 = vld [vmem:[%s178 + $0xc] sm:$0xf]
        %v184 = vld [vmem:[%s178 + $0x10] sm:$0xf]
        %v185 = vld [vmem:[%s178 + $0x14] sm:$0x1]
        %v186 = vld [vmem:[%s178 + $0x18] sm:$0xf]
        %v187 = vld [vmem:[%s178 + $0x1c] sm:$0xf]
        %v188 = vld [vmem:[%s178 + $0x20] sm:$0x1]
        %v189 = vld [vmem:[%s178 + $0x24] sm:$0xf]
        %v190 = vld [vmem:[%s178 + $0x28] sm:$0xf]
        %v191 = vld [vmem:[%s178 + $0x2c] sm:$0x1]
        %v192 = vld [vmem:[%s178 + $0x30] sm:$0xf]
        %v193 = vld [vmem:[%s178 + $0x34] sm:$0xf]
        %v194 = vld [vmem:[%s178 + $0x38] sm:$0x1]
        %v195 = vld [vmem:[%s178 + $0x3c] sm:$0xf]
        %v196 = vld [vmem:[%s178 + $0x40] sm:$0xf]
        %v197 = vld [vmem:[%s178 + $0x44] sm:$0x1]
        %v198 = vld [vmem:[%s178 + $0x48] sm:$0xf]
        %v199 = vld [vmem:[%s178 + $0x4c] sm:$0xf]
        %v200 = vld [vmem:[%s178 + $0x50] sm:$0x1]
        %v201 = vld [vmem:[%s178 + $0x54] sm:$0xf]
        %v202 = vld [vmem:[%s178 + $0x58] sm:$0xf]
        %v203 = vld [vmem:[%s178 + $0x5c] sm:$0x1]
        %v204 = vld [vmem:[%s178 + $0x60] sm:$0xf]
        %v205 = vld [vmem:[%s178 + $0x64] sm:$0xf]
        %v206 = vld [vmem:[%s178 + $0x68] sm:$0x1]
        %v207 = vld [vmem:[%s178 + $0x6c] sm:$0xf]
        %v208 = vld [vmem:[%s178 + $0x70] sm:$0xf]
        %v209 = vld [vmem:[%s178 + $0x74] sm:$0x1]
        %v210 = vld [vmem:[%s178 + $0x78] sm:$0xf]
        %v211 = vld [vmem:[%s178 + $0x7c] sm:$0xf]
        %v212 = vld [vmem:[%s178 + $0x80] sm:$0x1]
        %v213 = vld [vmem:[%s178 + $0x84] sm:$0xf]
        %v214 = vld [vmem:[%s178 + $0x88] sm:$0xf]
        %v215 = vld [vmem:[%s178 + $0x8c] sm:$0x1]
        %v216 = vld [vmem:[%s178 + $0x90] sm:$0xf]
        %v217 = vld [vmem:[%s178 + $0x94] sm:$0xf]
        %v218 = vld [vmem:[%s178 + $0x98] sm:$0x1]
        %v219 = vld [vmem:[%s178 + $0x9c] sm:$0xf]
        %v220 = vld [vmem:[%s178 + $0xa0] sm:$0xf]
        %v221 = vld [vmem:[%s178 + $0xa4] sm:$0x1]
        %v222 = vld [vmem:[%s178 + $0xa8] sm:$0xf]
        %v223 = vld [vmem:[%s178 + $0xac] sm:$0xf]
        %v224 = vld [vmem:[%s178 + $0xb0] sm:$0x1]
        %v225 = vld [vmem:[%s178 + $0xb4] sm:$0xf]
        %v226 = vld [vmem:[%s178 + $0xb8] sm:$0xf]
        %v227 = vld [vmem:[%s178 + $0xbc] sm:$0x1]
        %v228 = vld [vmem:[%s178 + $0xc0] sm:$0xf]
        %v229 = vld [vmem:[%s178 + $0xc4] sm:$0xf]
        %v230 = vld [vmem:[%s178 + $0xc8] sm:$0x1]
        %v231 = vld [vmem:[%s178 + $0xcc] sm:$0xf]
        %v232 = vld [vmem:[%s178 + $0xd0] sm:$0xf]
        %v233 = vld [vmem:[%s178 + $0xd4] sm:$0x1]
        %v234 = vld [vmem:[%s1] sm:$0xf]
        %v235 = vld [vmem:[%s1 + $0x4] sm:$0xf]
        %v236 = vld [vmem:[%s1 + $0x8] sm:$0xf]
        %v237 = vld [vmem:[%s1 + $0xc] sm:$0xf]
        %v238 = vld [vmem:[%s1 + $0x10] sm:$0xf]
        %v239 = vld [vmem:[%s1 + $0x14] sm:$0xf]
        %v240 = vld [vmem:[%s1 + $0x18] sm:$0xf]
        %v241 = vld [vmem:[%s1 + $0x1c] sm:$0xf]
        %vm242 = vsmask.f32 3328
        %vm243 = vsmask.f32 7440
        %vm244 = vmor %vm242, %vm243
        %v246 = vshrl.u32 %v180, 16
        %v248 = vrot.slane %v246, 4
        %v249 = vshll.u32 %v180, 16
        %v251 = vrot.slane %v249, 5
        %v252 = vor.u32 %v248, %v251
        %v253 = vrot.slane %v252, 4
        %v255 = vshll.u32 %v181, 16
        %v257 = vrot.slane %v255, 5
        %v258 = vsel %vm244, %v253, %v257
        %v259 = vshrl.u32 %v181, 16
        %v261 = vrot.slane %v259, 4
        %v262 = vor.u32 %v261, %v257
        %v263 = vrot.slane %v262, 4
        %v265 = vshll.u32 %v182, 16
        %v267 = vrot.slane %v265, 5
        %v268 = vsel %vm244, %v263, %v267
        %v270 = vshrl.u32 %v183, 16
        %v272 = vrot.slane %v270, 4
        %v273 = vshll.u32 %v183, 16
        %v275 = vrot.slane %v273, 5
        %v276 = vor.u32 %v272, %v275
        %v277 = vrot.slane %v276, 4
        %v279 = vshll.u32 %v184, 16
        %v281 = vrot.slane %v279, 5
        %v282 = vsel %vm244, %v277, %v281
        %v283 = vshrl.u32 %v184, 16
        %v285 = vrot.slane %v283, 4
        %v286 = vor.u32 %v285, %v281
        %v287 = vrot.slane %v286, 4
        %v289 = vshll.u32 %v185, 16
        %v291 = vrot.slane %v289, 5
        %v292 = vsel %vm244, %v287, %v291
        %v294 = vshrl.u32 %v186, 16
        %v296 = vrot.slane %v294, 4
        %v297 = vshll.u32 %v186, 16
        %v299 = vrot.slane %v297, 5
        %v300 = vor.u32 %v296, %v299
        %v301 = vrot.slane %v300, 4
        %v303 = vshll.u32 %v187, 16
        %v305 = vrot.slane %v303, 5
        %v306 = vsel %vm244, %v301, %v305
        %v307 = vshrl.u32 %v187, 16
        %v309 = vrot.slane %v307, 4
        %v310 = vor.u32 %v309, %v305
        %v311 = vrot.slane %v310, 4
        %v313 = vshll.u32 %v188, 16
        %v315 = vrot.slane %v313, 5
        %v316 = vsel %vm244, %v311, %v315
        %v318 = vshrl.u32 %v189, 16
        %v320 = vrot.slane %v318, 4
        %v321 = vshll.u32 %v189, 16
        %v323 = vrot.slane %v321, 5
        %v324 = vor.u32 %v320, %v323
        %v325 = vrot.slane %v324, 4
        %v327 = vshll.u32 %v190, 16
        %v329 = vrot.slane %v327, 5
        %v330 = vsel %vm244, %v325, %v329
        %v331 = vshrl.u32 %v190, 16
        %v333 = vrot.slane %v331, 4
        %v334 = vor.u32 %v333, %v329
        %v335 = vrot.slane %v334, 4
        %v337 = vshll.u32 %v191, 16
        %v339 = vrot.slane %v337, 5
        %v340 = vsel %vm244, %v335, %v339
        %v342 = vshrl.u32 %v192, 16
        %v344 = vrot.slane %v342, 4
        %v345 = vshll.u32 %v192, 16
        %v347 = vrot.slane %v345, 5
        %v348 = vor.u32 %v344, %v347
        %v349 = vrot.slane %v348, 4
        %v351 = vshll.u32 %v193, 16
        %v353 = vrot.slane %v351, 5
        %v354 = vsel %vm244, %v349, %v353
        %v355 = vshrl.u32 %v193, 16
        %v357 = vrot.slane %v355, 4
        %v358 = vor.u32 %v357, %v353
        %v359 = vrot.slane %v358, 4
        %v361 = vshll.u32 %v194, 16
        %v363 = vrot.slane %v361, 5
        %v364 = vsel %vm244, %v359, %v363
        %v366 = vshrl.u32 %v195, 16
        %v368 = vrot.slane %v366, 4
        %v369 = vshll.u32 %v195, 16
        %v371 = vrot.slane %v369, 5
        %v372 = vor.u32 %v368, %v371
        %v373 = vrot.slane %v372, 4
        %v375 = vshll.u32 %v196, 16
        %v377 = vrot.slane %v375, 5
        %v378 = vsel %vm244, %v373, %v377
        %v379 = vshrl.u32 %v196, 16
        %v381 = vrot.slane %v379, 4
        %v382 = vor.u32 %v381, %v377
        %v383 = vrot.slane %v382, 4
        %v385 = vshll.u32 %v197, 16
        %v387 = vrot.slane %v385, 5
        %v388 = vsel %vm244, %v383, %v387
        %v390 = vshrl.u32 %v198, 16
        %v392 = vrot.slane %v390, 4
        %v393 = vshll.u32 %v198, 16
        %v395 = vrot.slane %v393, 5
        %v396 = vor.u32 %v392, %v395
        %v397 = vrot.slane %v396, 4
        %v399 = vshll.u32 %v199, 16
        %v401 = vrot.slane %v399, 5
        %v402 = vsel %vm244, %v397, %v401
        %v403 = vshrl.u32 %v199, 16
        %v405 = vrot.slane %v403, 4
        %v406 = vor.u32 %v405, %v401
        %v407 = vrot.slane %v406, 4
        %v409 = vshll.u32 %v200, 16
        %v411 = vrot.slane %v409, 5
        %v412 = vsel %vm244, %v407, %v411
        %v414 = vshrl.u32 %v201, 16
        %v416 = vrot.slane %v414, 4
        %v417 = vshll.u32 %v201, 16
        %v419 = vrot.slane %v417, 5
        %v420 = vor.u32 %v416, %v419
        %v421 = vrot.slane %v420, 4
        %v423 = vshll.u32 %v202, 16
        %v425 = vrot.slane %v423, 5
        %v426 = vsel %vm244, %v421, %v425
        %v427 = vshrl.u32 %v202, 16
        %v429 = vrot.slane %v427, 4
        %v430 = vor.u32 %v429, %v425
        %v431 = vrot.slane %v430, 4
        %v433 = vshll.u32 %v203, 16
        %v435 = vrot.slane %v433, 5
        %v436 = vsel %vm244, %v431, %v435
        %v438 = vshrl.u32 %v204, 16
        %v440 = vrot.slane %v438, 4
        %v441 = vshll.u32 %v204, 16
        %v443 = vrot.slane %v441, 5
        %v444 = vor.u32 %v440, %v443
        %v445 = vrot.slane %v444, 4
        %v447 = vshll.u32 %v205, 16
        %v449 = vrot.slane %v447, 5
        %v450 = vsel %vm244, %v445, %v449
        %v451 = vshrl.u32 %v205, 16
        %v453 = vrot.slane %v451, 4
        %v454 = vor.u32 %v453, %v449
        %v455 = vrot.slane %v454, 4
        %v457 = vshll.u32 %v206, 16
        %v459 = vrot.slane %v457, 5
        %v460 = vsel %vm244, %v455, %v459
        %v462 = vshrl.u32 %v207, 16
        %v464 = vrot.slane %v462, 4
        %v465 = vshll.u32 %v207, 16
        %v467 = vrot.slane %v465, 5
        %v468 = vor.u32 %v464, %v467
        %v469 = vrot.slane %v468, 4
        %v471 = vshll.u32 %v208, 16
        %v473 = vrot.slane %v471, 5
        %v474 = vsel %vm244, %v469, %v473
        %v475 = vshrl.u32 %v208, 16
        %v477 = vrot.slane %v475, 4
        %v478 = vor.u32 %v477, %v473
        %v479 = vrot.slane %v478, 4
        %v481 = vshll.u32 %v209, 16
        %v483 = vrot.slane %v481, 5
        %v484 = vsel %vm244, %v479, %v483
        %v486 = vshrl.u32 %v210, 16
        %v488 = vrot.slane %v486, 4
        %v489 = vshll.u32 %v210, 16
        %v491 = vrot.slane %v489, 5
        %v492 = vor.u32 %v488, %v491
        %v493 = vrot.slane %v492, 4
        %v495 = vshll.u32 %v211, 16
        %v497 = vrot.slane %v495, 5
        %v498 = vsel %vm244, %v493, %v497
        %v499 = vshrl.u32 %v211, 16
        %v501 = vrot.slane %v499, 4
        %v502 = vor.u32 %v501, %v497
        %v503 = vrot.slane %v502, 4
        %v505 = vshll.u32 %v212, 16
        %v507 = vrot.slane %v505, 5
        %v508 = vsel %vm244, %v503, %v507
        %v510 = vshrl.u32 %v213, 16
        %v512 = vrot.slane %v510, 4
        %v513 = vshll.u32 %v213, 16
        %v515 = vrot.slane %v513, 5
        %v516 = vor.u32 %v512, %v515
        %v517 = vrot.slane %v516, 4
        %v519 = vshll.u32 %v214, 16
        %v521 = vrot.slane %v519, 5
        %v522 = vsel %vm244, %v517, %v521
        %v523 = vshrl.u32 %v214, 16
        %v525 = vrot.slane %v523, 4
        %v526 = vor.u32 %v525, %v521
        %v527 = vrot.slane %v526, 4
        %v529 = vshll.u32 %v215, 16
        %v531 = vrot.slane %v529, 5
        %v532 = vsel %vm244, %v527, %v531
        %v534 = vshrl.u32 %v216, 16
        %v536 = vrot.slane %v534, 4
        %v537 = vshll.u32 %v216, 16
        %v539 = vrot.slane %v537, 5
        %v540 = vor.u32 %v536, %v539
        %v541 = vrot.slane %v540, 4
        %v543 = vshll.u32 %v217, 16
        %v545 = vrot.slane %v543, 5
        %v546 = vsel %vm244, %v541, %v545
        %v547 = vshrl.u32 %v217, 16
        %v549 = vrot.slane %v547, 4
        %v550 = vor.u32 %v549, %v545
        %v551 = vrot.slane %v550, 4
        %v553 = vshll.u32 %v218, 16
        %v555 = vrot.slane %v553, 5
        %v556 = vsel %vm244, %v551, %v555
        %v558 = vshrl.u32 %v219, 16
        %v560 = vrot.slane %v558, 4
        %v561 = vshll.u32 %v219, 16
        %v563 = vrot.slane %v561, 5
        %v564 = vor.u32 %v560, %v563
        %v565 = vrot.slane %v564, 4
        %v567 = vshll.u32 %v220, 16
        %v569 = vrot.slane %v567, 5
        %v570 = vsel %vm244, %v565, %v569
        %v571 = vshrl.u32 %v220, 16
        %v573 = vrot.slane %v571, 4
        %v574 = vor.u32 %v573, %v569
        %v575 = vrot.slane %v574, 4
        %v577 = vshll.u32 %v221, 16
        %v579 = vrot.slane %v577, 5
        %v580 = vsel %vm244, %v575, %v579
        %v582 = vshrl.u32 %v222, 16
        %v584 = vrot.slane %v582, 4
        %v585 = vshll.u32 %v222, 16
        %v587 = vrot.slane %v585, 5
        %v588 = vor.u32 %v584, %v587
        %v589 = vrot.slane %v588, 4
        %v591 = vshll.u32 %v223, 16
        %v593 = vrot.slane %v591, 5
        %v594 = vsel %vm244, %v589, %v593
        %v595 = vshrl.u32 %v223, 16
        %v597 = vrot.slane %v595, 4
        %v598 = vor.u32 %v597, %v593
        %v599 = vrot.slane %v598, 4
        %v601 = vshll.u32 %v224, 16
        %v603 = vrot.slane %v601, 5
        %v604 = vsel %vm244, %v599, %v603
        %v606 = vshrl.u32 %v225, 16
        %v608 = vrot.slane %v606, 4
        %v609 = vshll.u32 %v225, 16
        %v611 = vrot.slane %v609, 5
        %v612 = vor.u32 %v608, %v611
        %v613 = vrot.slane %v612, 4
        %v615 = vshll.u32 %v226, 16
        %v617 = vrot.slane %v615, 5
        %v618 = vsel %vm244, %v613, %v617
        %v619 = vshrl.u32 %v226, 16
        %v621 = vrot.slane %v619, 4
        %v622 = vor.u32 %v621, %v617
        %v623 = vrot.slane %v622, 4
        %v625 = vshll.u32 %v227, 16
        %v627 = vrot.slane %v625, 5
        %v628 = vsel %vm244, %v623, %v627
        %s629 = scalar_lea.vmem %s1, 32
        %v630 = vld [vmem:[%s629] sm:$0xf]
        %v631 = vld [vmem:[%s629 + $0x4] sm:$0xf]
        %v632 = vld [vmem:[%s629 + $0x8] sm:$0xf]
        %v633 = vld [vmem:[%s629 + $0xc] sm:$0xf]
        %v634 = vld [vmem:[%s629 + $0x10] sm:$0xf]
        %v635 = vld [vmem:[%s629 + $0x14] sm:$0xf]
        %v636 = vld [vmem:[%s629 + $0x18] sm:$0xf]
        %v637 = vld [vmem:[%s629 + $0x1c] sm:$0xf]
        %v638 = vunpack.c.l.b16 %v258
        %v639 = vunpack.c.l.b16 %v268
        %v640 = vunpack.c.l.b16 %v282
        %v641 = vunpack.c.l.b16 %v292
        %v642 = vunpack.c.l.b16 %v306
        %v643 = vunpack.c.l.b16 %v316
        %v644 = vunpack.c.l.b16 %v330
        %v645 = vunpack.c.l.b16 %v340
        %v646 = vunpack.c.l.b16 %v354
        %v647 = vunpack.c.l.b16 %v364
        %v648 = vunpack.c.l.b16 %v378
        %v649 = vunpack.c.l.b16 %v388
        %v650 = vunpack.c.l.b16 %v402
        %v651 = vunpack.c.l.b16 %v412
        %v652 = vunpack.c.l.b16 %v426
        %v653 = vunpack.c.l.b16 %v436
        %v654 = vunpack.c.l.b16 %v450
        %v655 = vunpack.c.l.b16 %v460
        %v656 = vunpack.c.l.b16 %v474
        %v657 = vunpack.c.l.b16 %v484
        %v658 = vunpack.c.l.b16 %v498
        %v659 = vunpack.c.l.b16 %v508
        %v660 = vunpack.c.l.b16 %v522
        %v661 = vunpack.c.l.b16 %v532
        %v662 = vunpack.c.l.b16 %v546
        %v663 = vunpack.c.l.b16 %v556
        %v664 = vunpack.c.l.b16 %v570
        %v665 = vunpack.c.l.b16 %v580
        %v666 = vunpack.c.l.b16 %v594
        %v667 = vunpack.c.l.b16 %v604
        %v668 = vunpack.c.l.b16 %v618
        %v669 = vunpack.c.l.b16 %v628
        %v670 = vpack.c.b16 %v639, %v638
        %v671 = vpack.c.b16 %v641, %v640
        %v672 = vpack.c.b16 %v643, %v642
        %v673 = vpack.c.b16 %v645, %v644
        %v674 = vpack.c.b16 %v647, %v646
        %v675 = vpack.c.b16 %v649, %v648
        %v676 = vpack.c.b16 %v651, %v650
        %v677 = vpack.c.b16 %v653, %v652
        %v678 = vpack.c.b16 %v655, %v654
        %v679 = vpack.c.b16 %v657, %v656
        %v680 = vpack.c.b16 %v659, %v658
        %v681 = vpack.c.b16 %v661, %v660
        %v682 = vpack.c.b16 %v663, %v662
        %v683 = vpack.c.b16 %v665, %v664
        %v684 = vpack.c.b16 %v667, %v666
        %v685 = vpack.c.b16 %v669, %v668
        %v694 = vunpack.c.l.b16 %v630
        %v695 = vunpack.c.l.b16 %v631
        %v696 = vunpack.c.l.b16 %v632
        %v697 = vunpack.c.l.b16 %v633
        %v698 = vunpack.c.l.b16 %v634
        %v699 = vunpack.c.l.b16 %v635
        %v700 = vunpack.c.l.b16 %v636
        %v701 = vunpack.c.l.b16 %v637
        %v702 = vpack.c.b16 %v695, %v694
        %v703 = vpack.c.b16 %v697, %v696
        %v704 = vpack.c.b16 %v699, %v698
        %v705 = vpack.c.b16 %v701, %v700
        %vm710 = vcmask 523264
        %v712 = vsel %vm710, %v670, 0
        %v715 = vsel %vm710, %v671, 0
        %v718 = vsel %vm710, %v672, 0
        %v721 = vsel %vm710, %v673, 0
        %v724 = vsel %vm710, %v674, 0
        %v727 = vsel %vm710, %v675, 0
        %v730 = vsel %vm710, %v676, 0
        %v733 = vsel %vm710, %v677, 0
        %v736 = vsel %vm710, %v678, 0
        %v739 = vsel %vm710, %v679, 0
        %v742 = vsel %vm710, %v680, 0
        %v745 = vsel %vm710, %v681, 0
        %v748 = vsel %vm710, %v682, 0
        %v751 = vsel %vm710, %v683, 0
        %v754 = vsel %vm710, %v684, 0
        %v757 = vsel %vm710, %v685, 0
        %759 = vmatprep.subr.bf16.mxu0 0
        %760 = vmatpush1.bf16.msra.mxu0 %v702
        %761 = vmatprep.subr.bf16.mxu0 0
        %762 = vmatpush1.bf16.msra.mxu0 %v703
        %763 = vmatprep.subr.bf16.mxu0 0
        %764 = vmatpush1.bf16.msra.mxu0 %v704
        %765 = vmatprep.subr.bf16.mxu0 0
        %766 = vmatpush1.bf16.msra.mxu0 %v705
        %767 = vmatprep.subr.bf16.mxu0 0
        %768 = vmatpush1.bf16.msra.mxu0 0
        %769 = vmatprep.subr.bf16.mxu0 0
        %770 = vmatpush1.bf16.msra.mxu0 0
        %771 = vmatprep.subr.bf16.mxu0 0
        %772 = vmatpush1.bf16.msra.mxu0 0
        %773 = vmatprep.subr.bf16.mxu0 0
        %774 = vmatpush1.bf16.msra.mxu0 0
        %775 = vmatprep.subr.bf16.mxu0 0
        %776 = vmatpush1.bf16.msra.mxu0 0
        %777 = vmatprep.subr.bf16.mxu0 0
        %778 = vmatpush1.bf16.msra.mxu0 0
        %779 = vmatprep.subr.bf16.mxu0 0
        %780 = vmatpush1.bf16.msra.mxu0 0
        %781 = vmatprep.subr.bf16.mxu0 0
        %782 = vmatpush1.bf16.msra.mxu0 0
        %783 = vmatprep.subr.bf16.mxu0 0
        %784 = vmatpush1.bf16.msra.mxu0 0
        %785 = vmatprep.subr.bf16.mxu0 0
        %786 = vmatpush1.bf16.msra.mxu0 0
        %787 = vmatprep.subr.bf16.mxu0 0
        %788 = vmatpush1.bf16.msra.mxu0 0
        %789 = vmatprep.subr.bf16.mxu0 0
        %790 = vmatpush1.bf16.msra.mxu0 0
        %791 = vmatprep.mubr.bf16.mxu0 0
        %792 = vmatmul.mubr.bf16.gmra.mrb[0].mxu0 %v712
        %v793 = vpop.f32.mrb[0].mxu0
        %v794 = vadd.f32 0.0, %v793
        %v795 = vpop.f32.mrb[0].mxu0
        %v796 = vpop.f32.mrb[0].mxu0
        %v797 = vadd.f32 0.0, %v796
        %v798 = vpop.f32.mrb[0].mxu0
        %799 = vmatprep.mubr.bf16.mxu0 0
        %800 = vmatmul.mubr.bf16.gmra.mrb[0].mxu0 %v715
        %v801 = vpop.f32.mrb[0].mxu0
        %v802 = vadd.f32 0.0, %v801
        %v803 = vpop.f32.mrb[0].mxu0
        %v804 = vpop.f32.mrb[0].mxu0
        %v805 = vadd.f32 0.0, %v804
        %v806 = vpop.f32.mrb[0].mxu0
        %807 = vmatprep.mubr.bf16.mxu0 0
        %808 = vmatmul.mubr.bf16.gmra.mrb[0].mxu0 %v718
        %v809 = vpop.f32.mrb[0].mxu0
        %v810 = vadd.f32 0.0, %v809
        %v811 = vpop.f32.mrb[0].mxu0
        %v812 = vpop.f32.mrb[0].mxu0
        %v813 = vadd.f32 0.0, %v812
        %v814 = vpop.f32.mrb[0].mxu0
        %815 = vmatprep.mubr.bf16.mxu0 0
        %816 = vmatmul.mubr.bf16.gmra.mrb[0].mxu0 %v721
        %v817 = vpop.f32.mrb[0].mxu0
        %v818 = vadd.f32 0.0, %v817
        %v819 = vpop.f32.mrb[0].mxu0
        %v820 = vpop.f32.mrb[0].mxu0
        %v821 = vadd.f32 0.0, %v820
        %v822 = vpop.f32.mrb[0].mxu0
        %823 = vmatprep.mubr.bf16.mxu0 0
        %824 = vmatmul.mubr.bf16.gmra.mrb[0].mxu0 %v724
        %v825 = vpop.f32.mrb[0].mxu0
        %v826 = vadd.f32 0.0, %v825
        %v827 = vpop.f32.mrb[0].mxu0
        %v828 = vpop.f32.mrb[0].mxu0
        %v829 = vadd.f32 0.0, %v828
        %v830 = vpop.f32.mrb[0].mxu0
        %831 = vmatprep.mubr.bf16.mxu0 0
        %832 = vmatmul.mubr.bf16.gmra.mrb[0].mxu0 %v727
        %v833 = vpop.f32.mrb[0].mxu0
        %v834 = vadd.f32 0.0, %v833
        %v835 = vpop.f32.mrb[0].mxu0
        %v836 = vpop.f32.mrb[0].mxu0
        %v837 = vadd.f32 0.0, %v836
        %v838 = vpop.f32.mrb[0].mxu0
        %839 = vmatprep.mubr.bf16.mxu0 0
        %840 = vmatmul.mubr.bf16.gmra.mrb[0].mxu0 %v730
        %v841 = vpop.f32.mrb[0].mxu0
        %v842 = vadd.f32 0.0, %v841
        %v843 = vpop.f32.mrb[0].mxu0
        %v844 = vpop.f32.mrb[0].mxu0
        %v845 = vadd.f32 0.0, %v844
        %v846 = vpop.f32.mrb[0].mxu0
        %847 = vmatprep.mubr.bf16.mxu0 0
        %848 = vmatmul.mubr.bf16.gmra.mrb[0].mxu0 %v733
        %v849 = vpop.f32.mrb[0].mxu0
        %v850 = vadd.f32 0.0, %v849
        %v851 = vpop.f32.mrb[0].mxu0
        %v852 = vpop.f32.mrb[0].mxu0
        %v853 = vadd.f32 0.0, %v852
        %v854 = vpop.f32.mrb[0].mxu0
        %855 = vmatprep.mubr.bf16.mxu0 0
        %856 = vmatmul.mubr.bf16.gmra.mrb[0].mxu0 %v736
        %v857 = vpop.f32.mrb[0].mxu0
        %v858 = vadd.f32 0.0, %v857
        %v859 = vpop.f32.mrb[0].mxu0
        %v860 = vpop.f32.mrb[0].mxu0
        %v861 = vadd.f32 0.0, %v860
        %v862 = vpop.f32.mrb[0].mxu0
        %863 = vmatprep.mubr.bf16.mxu0 0
        %864 = vmatmul.mubr.bf16.gmra.mrb[0].mxu0 %v739
        %v865 = vpop.f32.mrb[0].mxu0
        %v866 = vadd.f32 0.0, %v865
        %v867 = vpop.f32.mrb[0].mxu0
        %v868 = vpop.f32.mrb[0].mxu0
        %v869 = vadd.f32 0.0, %v868
        %v870 = vpop.f32.mrb[0].mxu0
        %871 = vmatprep.mubr.bf16.mxu0 0
        %872 = vmatmul.mubr.bf16.gmra.mrb[0].mxu0 %v742
        %v873 = vpop.f32.mrb[0].mxu0
        %v874 = vadd.f32 0.0, %v873
        %v875 = vpop.f32.mrb[0].mxu0
        %v876 = vpop.f32.mrb[0].mxu0
        %v877 = vadd.f32 0.0, %v876
        %v878 = vpop.f32.mrb[0].mxu0
        %879 = vmatprep.mubr.bf16.mxu0 0
        %880 = vmatmul.mubr.bf16.gmra.mrb[0].mxu0 %v745
        %v881 = vpop.f32.mrb[0].mxu0
        %v882 = vadd.f32 0.0, %v881
        %v883 = vpop.f32.mrb[0].mxu0
        %v884 = vpop.f32.mrb[0].mxu0
        %v885 = vadd.f32 0.0, %v884
        %v886 = vpop.f32.mrb[0].mxu0
        %887 = vmatprep.mubr.bf16.mxu0 0
        %888 = vmatmul.mubr.bf16.gmra.mrb[0].mxu0 %v748
        %v889 = vpop.f32.mrb[0].mxu0
        %v890 = vadd.f32 0.0, %v889
        %v891 = vpop.f32.mrb[0].mxu0
        %v892 = vpop.f32.mrb[0].mxu0
        %v893 = vadd.f32 0.0, %v892
        %v894 = vpop.f32.mrb[0].mxu0
        %895 = vmatprep.mubr.bf16.mxu0 0
        %896 = vmatmul.mubr.bf16.gmra.mrb[0].mxu0 %v751
        %v897 = vpop.f32.mrb[0].mxu0
        %v898 = vadd.f32 0.0, %v897
        %v899 = vpop.f32.mrb[0].mxu0
        %v900 = vpop.f32.mrb[0].mxu0
        %v901 = vadd.f32 0.0, %v900
        %v902 = vpop.f32.mrb[0].mxu0
        %903 = vmatprep.mubr.bf16.mxu0 0
        %904 = vmatmul.mubr.bf16.gmra.mrb[0].mxu0 %v754
        %v905 = vpop.f32.mrb[0].mxu0
        %v906 = vadd.f32 0.0, %v905
        %v907 = vpop.f32.mrb[0].mxu0
        %v908 = vpop.f32.mrb[0].mxu0
        %v909 = vadd.f32 0.0, %v908
        %v910 = vpop.f32.mrb[0].mxu0
        %911 = vmatprep.mubr.bf16.mxu0 0
        %912 = vmatmul.mubr.bf16.gmra.mrb[0].mxu0 %v757
        %v913 = vpop.f32.mrb[0].mxu0
        %v914 = vadd.f32 0.0, %v913
        %v915 = vpop.f32.mrb[0].mxu0
        %v916 = vpop.f32.mrb[0].mxu0
        %v917 = vadd.f32 0.0, %v916
        %v918 = vpop.f32.mrb[0].mxu0
        %919 = vdwg.mxu0
        %v952 = vunpack.c.l.b16 %v180
        %v953 = vunpack.c.l.b16 %v181
        %v954 = vunpack.c.l.b16 %v183
        %v955 = vunpack.c.l.b16 %v184
        %v956 = vunpack.c.l.b16 %v186
        %v957 = vunpack.c.l.b16 %v187
        %v958 = vunpack.c.l.b16 %v189
        %v959 = vunpack.c.l.b16 %v190
        %v960 = vunpack.c.l.b16 %v192
        %v961 = vunpack.c.l.b16 %v193
        %v962 = vunpack.c.l.b16 %v195
        %v963 = vunpack.c.l.b16 %v196
        %v964 = vunpack.c.l.b16 %v198
        %v965 = vunpack.c.l.b16 %v199
        %v966 = vunpack.c.l.b16 %v201
        %v967 = vunpack.c.l.b16 %v202
        %v968 = vunpack.c.l.b16 %v204
        %v969 = vunpack.c.l.b16 %v205
        %v970 = vunpack.c.l.b16 %v207
        %v971 = vunpack.c.l.b16 %v208
        %v972 = vunpack.c.l.b16 %v210
        %v973 = vunpack.c.l.b16 %v211
        %v974 = vunpack.c.l.b16 %v213
        %v975 = vunpack.c.l.b16 %v214
        %v976 = vunpack.c.l.b16 %v216
        %v977 = vunpack.c.l.b16 %v217
        %v978 = vunpack.c.l.b16 %v219
        %v979 = vunpack.c.l.b16 %v220
        %v980 = vunpack.c.l.b16 %v222
        %v981 = vunpack.c.l.b16 %v223
        %v982 = vunpack.c.l.b16 %v225
        %v983 = vunpack.c.l.b16 %v226
        %v984 = vpack.c.b16 %v953, %v952
        %v985 = vpack.c.b16 %v955, %v954
        %v986 = vpack.c.b16 %v957, %v956
        %v987 = vpack.c.b16 %v959, %v958
        %v988 = vpack.c.b16 %v961, %v960
        %v989 = vpack.c.b16 %v963, %v962
        %v990 = vpack.c.b16 %v965, %v964
        %v991 = vpack.c.b16 %v967, %v966
        %v992 = vpack.c.b16 %v969, %v968
        %v993 = vpack.c.b16 %v971, %v970
        %v994 = vpack.c.b16 %v973, %v972
        %v995 = vpack.c.b16 %v975, %v974
        %v996 = vpack.c.b16 %v977, %v976
        %v997 = vpack.c.b16 %v979, %v978
        %v998 = vpack.c.b16 %v981, %v980
        %v999 = vpack.c.b16 %v983, %v982
        %v1008 = vunpack.c.l.b16 %v234
        %v1009 = vunpack.c.l.b16 %v235
        %v1010 = vunpack.c.l.b16 %v236
        %v1011 = vunpack.c.l.b16 %v237
        %v1012 = vunpack.c.l.b16 %v238
        %v1013 = vunpack.c.l.b16 %v239
        %v1014 = vunpack.c.l.b16 %v240
        %v1015 = vunpack.c.l.b16 %v241
        %v1016 = vpack.c.b16 %v1009, %v1008
        %v1017 = vpack.c.b16 %v1011, %v1010
        %v1018 = vpack.c.b16 %v1013, %v1012
        %v1019 = vpack.c.b16 %v1015, %v1014
        %v1025 = vsel %vm710, %v984, 0
        %v1028 = vsel %vm710, %v985, 0
        %v1031 = vsel %vm710, %v986, 0
        %v1034 = vsel %vm710, %v987, 0
        %v1037 = vsel %vm710, %v988, 0
        %v1040 = vsel %vm710, %v989, 0
        %v1043 = vsel %vm710, %v990, 0
        %v1046 = vsel %vm710, %v991, 0
        %v1049 = vsel %vm710, %v992, 0
        %v1052 = vsel %vm710, %v993, 0
        %v1055 = vsel %vm710, %v994, 0
        %v1058 = vsel %vm710, %v995, 0
        %v1061 = vsel %vm710, %v996, 0
        %v1064 = vsel %vm710, %v997, 0
        %v1067 = vsel %vm710, %v998, 0
        %v1070 = vsel %vm710, %v999, 0
        %1072 = vmatprep.subr.bf16.mxu0 0
        %1073 = vmatpush1.bf16.msra.mxu0 %v1016
        %1074 = vmatprep.subr.bf16.mxu0 0
        %1075 = vmatpush1.bf16.msra.mxu0 %v1017
        %1076 = vmatprep.subr.bf16.mxu0 0
        %1077 = vmatpush1.bf16.msra.mxu0 %v1018
        %1078 = vmatprep.subr.bf16.mxu0 0
        %1079 = vmatpush1.bf16.msra.mxu0 %v1019
        %1080 = vmatprep.subr.bf16.mxu0 0
        %1081 = vmatpush1.bf16.msra.mxu0 0
        %1082 = vmatprep.subr.bf16.mxu0 0
        %1083 = vmatpush1.bf16.msra.mxu0 0
        %1084 = vmatprep.subr.bf16.mxu0 0
        %1085 = vmatpush1.bf16.msra.mxu0 0
        %1086 = vmatprep.subr.bf16.mxu0 0
        %1087 = vmatpush1.bf16.msra.mxu0 0
        %1088 = vmatprep.subr.bf16.mxu0 0
        %1089 = vmatpush1.bf16.msra.mxu0 0
        %1090 = vmatprep.subr.bf16.mxu0 0
        %1091 = vmatpush1.bf16.msra.mxu0 0
        %1092 = vmatprep.subr.bf16.mxu0 0
        %1093 = vmatpush1.bf16.msra.mxu0 0
        %1094 = vmatprep.subr.bf16.mxu0 0
        %1095 = vmatpush1.bf16.msra.mxu0 0
        %1096 = vmatprep.subr.bf16.mxu0 0
        %1097 = vmatpush1.bf16.msra.mxu0 0
        %1098 = vmatprep.subr.bf16.mxu0 0
        %1099 = vmatpush1.bf16.msra.mxu0 0
        %1100 = vmatprep.subr.bf16.mxu0 0
        %1101 = vmatpush1.bf16.msra.mxu0 0
        %1102 = vmatprep.subr.bf16.mxu0 0
        %1103 = vmatpush1.bf16.msra.mxu0 0
        %1104 = vmatprep.mubr.bf16.mxu0 0
        %1105 = vmatmul.mubr.bf16.gmra.mrb[0].mxu0 %v1025
        %v1106 = vpop.f32.mrb[0].mxu0
        %v1107 = vadd.f32 %v794, %v1106
        %v1108 = vpop.f32.mrb[0].mxu0
        %v1109 = vpop.f32.mrb[0].mxu0
        %v1110 = vadd.f32 %v797, %v1109
        %v1111 = vpop.f32.mrb[0].mxu0
        %1112 = vmatprep.mubr.bf16.mxu0 0
        %1113 = vmatmul.mubr.bf16.gmra.mrb[0].mxu0 %v1028
        %v1114 = vpop.f32.mrb[0].mxu0
        %v1115 = vadd.f32 %v802, %v1114
        %v1116 = vpop.f32.mrb[0].mxu0
        %v1117 = vpop.f32.mrb[0].mxu0
        %v1118 = vadd.f32 %v805, %v1117
        %v1119 = vpop.f32.mrb[0].mxu0
        %1120 = vmatprep.mubr.bf16.mxu0 0
        %1121 = vmatmul.mubr.bf16.gmra.mrb[0].mxu0 %v1031
        %v1122 = vpop.f32.mrb[0].mxu0
        %v1123 = vadd.f32 %v810, %v1122
        %v1124 = vpop.f32.mrb[0].mxu0
        %v1125 = vpop.f32.mrb[0].mxu0
        %v1126 = vadd.f32 %v813, %v1125
        %v1127 = vpop.f32.mrb[0].mxu0
        %1128 = vmatprep.mubr.bf16.mxu0 0
        %1129 = vmatmul.mubr.bf16.gmra.mrb[0].mxu0 %v1034
        %v1130 = vpop.f32.mrb[0].mxu0
        %v1131 = vadd.f32 %v818, %v1130
        %v1132 = vpop.f32.mrb[0].mxu0
        %v1133 = vpop.f32.mrb[0].mxu0
        %v1134 = vadd.f32 %v821, %v1133
        %v1135 = vpop.f32.mrb[0].mxu0
        %1136 = vmatprep.mubr.bf16.mxu0 0
        %1137 = vmatmul.mubr.bf16.gmra.mrb[0].mxu0 %v1037
        %v1138 = vpop.f32.mrb[0].mxu0
        %v1139 = vadd.f32 %v826, %v1138
        %v1140 = vpop.f32.mrb[0].mxu0
        %v1141 = vpop.f32.mrb[0].mxu0
        %v1142 = vadd.f32 %v829, %v1141
        %v1143 = vpop.f32.mrb[0].mxu0
        %1144 = vmatprep.mubr.bf16.mxu0 0
        %1145 = vmatmul.mubr.bf16.gmra.mrb[0].mxu0 %v1040
        %v1146 = vpop.f32.mrb[0].mxu0
        %v1147 = vadd.f32 %v834, %v1146
        %v1148 = vpop.f32.mrb[0].mxu0
        %v1149 = vpop.f32.mrb[0].mxu0
        %v1150 = vadd.f32 %v837, %v1149
        %v1151 = vpop.f32.mrb[0].mxu0
        %1152 = vmatprep.mubr.bf16.mxu0 0
        %1153 = vmatmul.mubr.bf16.gmra.mrb[0].mxu0 %v1043
        %v1154 = vpop.f32.mrb[0].mxu0
        %v1155 = vadd.f32 %v842, %v1154
        %v1156 = vpop.f32.mrb[0].mxu0
        %v1157 = vpop.f32.mrb[0].mxu0
        %v1158 = vadd.f32 %v845, %v1157
        %v1159 = vpop.f32.mrb[0].mxu0
        %1160 = vmatprep.mubr.bf16.mxu0 0
        %1161 = vmatmul.mubr.bf16.gmra.mrb[0].mxu0 %v1046
        %v1162 = vpop.f32.mrb[0].mxu0
        %v1163 = vadd.f32 %v850, %v1162
        %v1164 = vpop.f32.mrb[0].mxu0
        %v1165 = vpop.f32.mrb[0].mxu0
        %v1166 = vadd.f32 %v853, %v1165
        %v1167 = vpop.f32.mrb[0].mxu0
        %1168 = vmatprep.mubr.bf16.mxu0 0
        %1169 = vmatmul.mubr.bf16.gmra.mrb[0].mxu0 %v1049
        %v1170 = vpop.f32.mrb[0].mxu0
        %v1171 = vadd.f32 %v858, %v1170
        %v1172 = vpop.f32.mrb[0].mxu0
        %v1173 = vpop.f32.mrb[0].mxu0
        %v1174 = vadd.f32 %v861, %v1173
        %v1175 = vpop.f32.mrb[0].mxu0
        %1176 = vmatprep.mubr.bf16.mxu0 0
        %1177 = vmatmul.mubr.bf16.gmra.mrb[0].mxu0 %v1052
        %v1178 = vpop.f32.mrb[0].mxu0
        %v1179 = vadd.f32 %v866, %v1178
        %v1180 = vpop.f32.mrb[0].mxu0
        %v1181 = vpop.f32.mrb[0].mxu0
        %v1182 = vadd.f32 %v869, %v1181
        %v1183 = vpop.f32.mrb[0].mxu0
        %1184 = vmatprep.mubr.bf16.mxu0 0
        %1185 = vmatmul.mubr.bf16.gmra.mrb[0].mxu0 %v1055
        %v1186 = vpop.f32.mrb[0].mxu0
        %v1187 = vadd.f32 %v874, %v1186
        %v1188 = vpop.f32.mrb[0].mxu0
        %v1189 = vpop.f32.mrb[0].mxu0
        %v1190 = vadd.f32 %v877, %v1189
        %v1191 = vpop.f32.mrb[0].mxu0
        %1192 = vmatprep.mubr.bf16.mxu0 0
        %1193 = vmatmul.mubr.bf16.gmra.mrb[0].mxu0 %v1058
        %v1194 = vpop.f32.mrb[0].mxu0
        %v1195 = vadd.f32 %v882, %v1194
        %v1196 = vpop.f32.mrb[0].mxu0
        %v1197 = vpop.f32.mrb[0].mxu0
        %v1198 = vadd.f32 %v885, %v1197
        %v1199 = vpop.f32.mrb[0].mxu0
        %1200 = vmatprep.mubr.bf16.mxu0 0
        %1201 = vmatmul.mubr.bf16.gmra.mrb[0].mxu0 %v1061
        %v1202 = vpop.f32.mrb[0].mxu0
        %v1203 = vadd.f32 %v890, %v1202
        %v1204 = vpop.f32.mrb[0].mxu0
        %v1205 = vpop.f32.mrb[0].mxu0
        %v1206 = vadd.f32 %v893, %v1205
        %v1207 = vpop.f32.mrb[0].mxu0
        %1208 = vmatprep.mubr.bf16.mxu0 0
        %1209 = vmatmul.mubr.bf16.gmra.mrb[0].mxu0 %v1064
        %v1210 = vpop.f32.mrb[0].mxu0
        %v1211 = vadd.f32 %v898, %v1210
        %v1212 = vpop.f32.mrb[0].mxu0
        %v1213 = vpop.f32.mrb[0].mxu0
        %v1214 = vadd.f32 %v901, %v1213
        %v1215 = vpop.f32.mrb[0].mxu0
        %1216 = vmatprep.mubr.bf16.mxu0 0
        %1217 = vmatmul.mubr.bf16.gmra.mrb[0].mxu0 %v1067
        %v1218 = vpop.f32.mrb[0].mxu0
        %v1219 = vadd.f32 %v906, %v1218
        %v1220 = vpop.f32.mrb[0].mxu0
        %v1221 = vpop.f32.mrb[0].mxu0
        %v1222 = vadd.f32 %v909, %v1221
        %v1223 = vpop.f32.mrb[0].mxu0
        %1224 = vmatprep.mubr.bf16.mxu0 0
        %1225 = vmatmul.mubr.bf16.gmra.mrb[0].mxu0 %v1070
        %v1226 = vpop.f32.mrb[0].mxu0
        %v1227 = vadd.f32 %v914, %v1226
        %v1228 = vpop.f32.mrb[0].mxu0
        %v1229 = vpop.f32.mrb[0].mxu0
        %v1230 = vadd.f32 %v917, %v1229
        %v1231 = vpop.f32.mrb[0].mxu0
        %1232 = vdwg.mxu0
        %vm1249 = vcmask 1042432
        %vm1250 = vcmask 1046532
        %vm1251 = vmor %vm1249, %vm1250
        %v1252 = vrot.slane %v180, 5
        %v1253 = vrot.slane %v1252, 4
        %v1254 = vrot.slane %v181, 5
        %v1255 = vsel %vm1251, %v1253, %v1254
        %v1256 = vrot.slane %v1254, 4
        %v1257 = vrot.slane %v182, 5
        %v1258 = vsel %vm1251, %v1256, %v1257
        %v1259 = vrot.slane %v183, 5
        %v1260 = vrot.slane %v1259, 4
        %v1261 = vrot.slane %v184, 5
        %v1262 = vsel %vm1251, %v1260, %v1261
        %v1263 = vrot.slane %v1261, 4
        %v1264 = vrot.slane %v185, 5
        %v1265 = vsel %vm1251, %v1263, %v1264
        %v1266 = vrot.slane %v186, 5
        %v1267 = vrot.slane %v1266, 4
        %v1268 = vrot.slane %v187, 5
        %v1269 = vsel %vm1251, %v1267, %v1268
        %v1270 = vrot.slane %v1268, 4
        %v1271 = vrot.slane %v188, 5
        %v1272 = vsel %vm1251, %v1270, %v1271
        %v1273 = vrot.slane %v189, 5
        %v1274 = vrot.slane %v1273, 4
        %v1275 = vrot.slane %v190, 5
        %v1276 = vsel %vm1251, %v1274, %v1275
        %v1277 = vrot.slane %v1275, 4
        %v1278 = vrot.slane %v191, 5
        %v1279 = vsel %vm1251, %v1277, %v1278
        %v1280 = vrot.slane %v192, 5
        %v1281 = vrot.slane %v1280, 4
        %v1282 = vrot.slane %v193, 5
        %v1283 = vsel %vm1251, %v1281, %v1282
        %v1284 = vrot.slane %v1282, 4
        %v1285 = vrot.slane %v194, 5
        %v1286 = vsel %vm1251, %v1284, %v1285
        %v1287 = vrot.slane %v195, 5
        %v1288 = vrot.slane %v1287, 4
        %v1289 = vrot.slane %v196, 5
        %v1290 = vsel %vm1251, %v1288, %v1289
        %v1291 = vrot.slane %v1289, 4
        %v1292 = vrot.slane %v197, 5
        %v1293 = vsel %vm1251, %v1291, %v1292
        %v1294 = vrot.slane %v198, 5
        %v1295 = vrot.slane %v1294, 4
        %v1296 = vrot.slane %v199, 5
        %v1297 = vsel %vm1251, %v1295, %v1296
        %v1298 = vrot.slane %v1296, 4
        %v1299 = vrot.slane %v200, 5
        %v1300 = vsel %vm1251, %v1298, %v1299
        %v1301 = vrot.slane %v201, 5
        %v1302 = vrot.slane %v1301, 4
        %v1303 = vrot.slane %v202, 5
        %v1304 = vsel %vm1251, %v1302, %v1303
        %v1305 = vrot.slane %v1303, 4
        %v1306 = vrot.slane %v203, 5
        %v1307 = vsel %vm1251, %v1305, %v1306
        %v1308 = vrot.slane %v204, 5
        %v1309 = vrot.slane %v1308, 4
        %v1310 = vrot.slane %v205, 5
        %v1311 = vsel %vm1251, %v1309, %v1310
        %v1312 = vrot.slane %v1310, 4
        %v1313 = vrot.slane %v206, 5
        %v1314 = vsel %vm1251, %v1312, %v1313
        %v1315 = vrot.slane %v207, 5
        %v1316 = vrot.slane %v1315, 4
        %v1317 = vrot.slane %v208, 5
        %v1318 = vsel %vm1251, %v1316, %v1317
        %v1319 = vrot.slane %v1317, 4
        %v1320 = vrot.slane %v209, 5
        %v1321 = vsel %vm1251, %v1319, %v1320
        %v1322 = vrot.slane %v210, 5
        %v1323 = vrot.slane %v1322, 4
        %v1324 = vrot.slane %v211, 5
        %v1325 = vsel %vm1251, %v1323, %v1324
        %v1326 = vrot.slane %v1324, 4
        %v1327 = vrot.slane %v212, 5
        %v1328 = vsel %vm1251, %v1326, %v1327
        %v1329 = vrot.slane %v213, 5
        %v1330 = vrot.slane %v1329, 4
        %v1331 = vrot.slane %v214, 5
        %v1332 = vsel %vm1251, %v1330, %v1331
        %v1333 = vrot.slane %v1331, 4
        %v1334 = vrot.slane %v215, 5
        %v1335 = vsel %vm1251, %v1333, %v1334
        %v1336 = vrot.slane %v216, 5
        %v1337 = vrot.slane %v1336, 4
        %v1338 = vrot.slane %v217, 5
        %v1339 = vsel %vm1251, %v1337, %v1338
        %v1340 = vrot.slane %v1338, 4
        %v1341 = vrot.slane %v218, 5
        %v1342 = vsel %vm1251, %v1340, %v1341
        %v1343 = vrot.slane %v219, 5
        %v1344 = vrot.slane %v1343, 4
        %v1345 = vrot.slane %v220, 5
        %v1346 = vsel %vm1251, %v1344, %v1345
        %v1347 = vrot.slane %v1345, 4
        %v1348 = vrot.slane %v221, 5
        %v1349 = vsel %vm1251, %v1347, %v1348
        %v1350 = vrot.slane %v222, 5
        %v1351 = vrot.slane %v1350, 4
        %v1352 = vrot.slane %v223, 5
        %v1353 = vsel %vm1251, %v1351, %v1352
        %v1354 = vrot.slane %v1352, 4
        %v1355 = vrot.slane %v224, 5
        %v1356 = vsel %vm1251, %v1354, %v1355
        %v1357 = vrot.slane %v225, 5
        %v1358 = vrot.slane %v1357, 4
        %v1359 = vrot.slane %v226, 5
        %v1360 = vsel %vm1251, %v1358, %v1359
        %v1361 = vrot.slane %v1359, 4
        %v1362 = vrot.slane %v227, 5
        %v1363 = vsel %vm1251, %v1361, %v1362
        %s1364 = scalar_lea.vmem %s1, 64
        %v1365 = vld [vmem:[%s1364] sm:$0xf]
        %v1366 = vld [vmem:[%s1364 + $0x4] sm:$0xf]
        %v1367 = vld [vmem:[%s1364 + $0x8] sm:$0xf]
        %v1368 = vld [vmem:[%s1364 + $0xc] sm:$0xf]
        %v1369 = vld [vmem:[%s1364 + $0x10] sm:$0xf]
        %v1370 = vld [vmem:[%s1364 + $0x14] sm:$0xf]
        %v1371 = vld [vmem:[%s1364 + $0x18] sm:$0xf]
        %v1372 = vld [vmem:[%s1364 + $0x1c] sm:$0xf]
        %v1373 = vunpack.c.l.b16 %v1255
        %v1374 = vunpack.c.l.b16 %v1258
        %v1375 = vunpack.c.l.b16 %v1262
        %v1376 = vunpack.c.l.b16 %v1265
        %v1377 = vunpack.c.l.b16 %v1269
        %v1378 = vunpack.c.l.b16 %v1272
        %v1379 = vunpack.c.l.b16 %v1276
        %v1380 = vunpack.c.l.b16 %v1279
        %v1381 = vunpack.c.l.b16 %v1283
        %v1382 = vunpack.c.l.b16 %v1286
        %v1383 = vunpack.c.l.b16 %v1290
        %v1384 = vunpack.c.l.b16 %v1293
        %v1385 = vunpack.c.l.b16 %v1297
        %v1386 = vunpack.c.l.b16 %v1300
        %v1387 = vunpack.c.l.b16 %v1304
        %v1388 = vunpack.c.l.b16 %v1307
        %v1389 = vunpack.c.l.b16 %v1311
        %v1390 = vunpack.c.l.b16 %v1314
        %v1391 = vunpack.c.l.b16 %v1318
        %v1392 = vunpack.c.l.b16 %v1321
        %v1393 = vunpack.c.l.b16 %v1325
        %v1394 = vunpack.c.l.b16 %v1328
        %v1395 = vunpack.c.l.b16 %v1332
        %v1396 = vunpack.c.l.b16 %v1335
        %v1397 = vunpack.c.l.b16 %v1339
        %v1398 = vunpack.c.l.b16 %v1342
        %v1399 = vunpack.c.l.b16 %v1346
        %v1400 = vunpack.c.l.b16 %v1349
        %v1401 = vunpack.c.l.b16 %v1353
        %v1402 = vunpack.c.l.b16 %v1356
        %v1403 = vunpack.c.l.b16 %v1360
        %v1404 = vunpack.c.l.b16 %v1363
        %v1405 = vpack.c.b16 %v1374, %v1373
        %v1406 = vpack.c.b16 %v1376, %v1375
        %v1407 = vpack.c.b16 %v1378, %v1377
        %v1408 = vpack.c.b16 %v1380, %v1379
        %v1409 = vpack.c.b16 %v1382, %v1381
        %v1410 = vpack.c.b16 %v1384, %v1383
        %v1411 = vpack.c.b16 %v1386, %v1385
        %v1412 = vpack.c.b16 %v1388, %v1387
        %v1413 = vpack.c.b16 %v1390, %v1389
        %v1414 = vpack.c.b16 %v1392, %v1391
        %v1415 = vpack.c.b16 %v1394, %v1393
        %v1416 = vpack.c.b16 %v1396, %v1395
        %v1417 = vpack.c.b16 %v1398, %v1397
        %v1418 = vpack.c.b16 %v1400, %v1399
        %v1419 = vpack.c.b16 %v1402, %v1401
        %v1420 = vpack.c.b16 %v1404, %v1403
        %v1429 = vunpack.c.l.b16 %v1365
        %v1430 = vunpack.c.l.b16 %v1366
        %v1431 = vunpack.c.l.b16 %v1367
        %v1432 = vunpack.c.l.b16 %v1368
        %v1433 = vunpack.c.l.b16 %v1369
        %v1434 = vunpack.c.l.b16 %v1370
        %v1435 = vunpack.c.l.b16 %v1371
        %v1436 = vunpack.c.l.b16 %v1372
        %v1437 = vpack.c.b16 %v1430, %v1429
        %v1438 = vpack.c.b16 %v1432, %v1431
        %v1439 = vpack.c.b16 %v1434, %v1433
        %v1440 = vpack.c.b16 %v1436, %v1435
        %v1446 = vsel %vm710, %v1405, 0
        %v1449 = vsel %vm710, %v1406, 0
        %v1452 = vsel %vm710, %v1407, 0
        %v1455 = vsel %vm710, %v1408, 0
        %v1458 = vsel %vm710, %v1409, 0
        %v1461 = vsel %vm710, %v1410, 0
        %v1464 = vsel %vm710, %v1411, 0
        %v1467 = vsel %vm710, %v1412, 0
        %v1470 = vsel %vm710, %v1413, 0
        %v1473 = vsel %vm710, %v1414, 0
        %v1476 = vsel %vm710, %v1415, 0
        %v1479 = vsel %vm710, %v1416, 0
        %v1482 = vsel %vm710, %v1417, 0
        %v1485 = vsel %vm710, %v1418, 0
        %v1488 = vsel %vm710, %v1419, 0
        %v1491 = vsel %vm710, %v1420, 0
        %1493 = vmatprep.subr.bf16.mxu0 0
        %1494 = vmatpush1.bf16.msra.mxu0 %v1437
        %1495 = vmatprep.subr.bf16.mxu0 0
        %1496 = vmatpush1.bf16.msra.mxu0 %v1438
        %1497 = vmatprep.subr.bf16.mxu0 0
        %1498 = vmatpush1.bf16.msra.mxu0 %v1439
        %1499 = vmatprep.subr.bf16.mxu0 0
        %1500 = vmatpush1.bf16.msra.mxu0 %v1440
        %1501 = vmatprep.subr.bf16.mxu0 0
        %1502 = vmatpush1.bf16.msra.mxu0 0
        %1503 = vmatprep.subr.bf16.mxu0 0
        %1504 = vmatpush1.bf16.msra.mxu0 0
        %1505 = vmatprep.subr.bf16.mxu0 0
        %1506 = vmatpush1.bf16.msra.mxu0 0
        %1507 = vmatprep.subr.bf16.mxu0 0
        %1508 = vmatpush1.bf16.msra.mxu0 0
        %1509 = vmatprep.subr.bf16.mxu0 0
        %1510 = vmatpush1.bf16.msra.mxu0 0
        %1511 = vmatprep.subr.bf16.mxu0 0
        %1512 = vmatpush1.bf16.msra.mxu0 0
        %1513 = vmatprep.subr.bf16.mxu0 0
        %1514 = vmatpush1.bf16.msra.mxu0 0
        %1515 = vmatprep.subr.bf16.mxu0 0
        %1516 = vmatpush1.bf16.msra.mxu0 0
        %1517 = vmatprep.subr.bf16.mxu0 0
        %1518 = vmatpush1.bf16.msra.mxu0 0
        %1519 = vmatprep.subr.bf16.mxu0 0
        %1520 = vmatpush1.bf16.msra.mxu0 0
        %1521 = vmatprep.subr.bf16.mxu0 0
        %1522 = vmatpush1.bf16.msra.mxu0 0
        %1523 = vmatprep.subr.bf16.mxu0 0
        %1524 = vmatpush1.bf16.msra.mxu0 0
        %1525 = vmatprep.mubr.bf16.mxu0 0
        %1526 = vmatmul.mubr.bf16.gmra.mrb[0].mxu0 %v1446
        %v1527 = vpop.f32.mrb[0].mxu0
        %v1528 = vadd.f32 0.0, %v1527
        %v1529 = vpop.f32.mrb[0].mxu0
        %v1530 = vpop.f32.mrb[0].mxu0
        %v1531 = vadd.f32 0.0, %v1530
        %v1532 = vpop.f32.mrb[0].mxu0
        %1533 = vmatprep.mubr.bf16.mxu0 0
        %1534 = vmatmul.mubr.bf16.gmra.mrb[0].mxu0 %v1449
        %v1535 = vpop.f32.mrb[0].mxu0
        %v1536 = vadd.f32 0.0, %v1535
        %v1537 = vpop.f32.mrb[0].mxu0
        %v1538 = vpop.f32.mrb[0].mxu0
        %v1539 = vadd.f32 0.0, %v1538
        %v1540 = vpop.f32.mrb[0].mxu0
        %1541 = vmatprep.mubr.bf16.mxu0 0
        %1542 = vmatmul.mubr.bf16.gmra.mrb[0].mxu0 %v1452
        %v1543 = vpop.f32.mrb[0].mxu0
        %v1544 = vadd.f32 0.0, %v1543
        %v1545 = vpop.f32.mrb[0].mxu0
        %v1546 = vpop.f32.mrb[0].mxu0
        %v1547 = vadd.f32 0.0, %v1546
        %v1548 = vpop.f32.mrb[0].mxu0
        %1549 = vmatprep.mubr.bf16.mxu0 0
        %1550 = vmatmul.mubr.bf16.gmra.mrb[0].mxu0 %v1455
        %v1551 = vpop.f32.mrb[0].mxu0
        %v1552 = vadd.f32 0.0, %v1551
        %v1553 = vpop.f32.mrb[0].mxu0
        %v1554 = vpop.f32.mrb[0].mxu0
        %v1555 = vadd.f32 0.0, %v1554
        %v1556 = vpop.f32.mrb[0].mxu0
        %1557 = vmatprep.mubr.bf16.mxu0 0
        %1558 = vmatmul.mubr.bf16.gmra.mrb[0].mxu0 %v1458
        %v1559 = vpop.f32.mrb[0].mxu0
        %v1560 = vadd.f32 0.0, %v1559
        %v1561 = vpop.f32.mrb[0].mxu0
        %v1562 = vpop.f32.mrb[0].mxu0
        %v1563 = vadd.f32 0.0, %v1562
        %v1564 = vpop.f32.mrb[0].mxu0
        %1565 = vmatprep.mubr.bf16.mxu0 0
        %1566 = vmatmul.mubr.bf16.gmra.mrb[0].mxu0 %v1461
        %v1567 = vpop.f32.mrb[0].mxu0
        %v1568 = vadd.f32 0.0, %v1567
        %v1569 = vpop.f32.mrb[0].mxu0
        %v1570 = vpop.f32.mrb[0].mxu0
        %v1571 = vadd.f32 0.0, %v1570
        %v1572 = vpop.f32.mrb[0].mxu0
        %1573 = vmatprep.mubr.bf16.mxu0 0
        %1574 = vmatmul.mubr.bf16.gmra.mrb[0].mxu0 %v1464
        %v1575 = vpop.f32.mrb[0].mxu0
        %v1576 = vadd.f32 0.0, %v1575
        %v1577 = vpop.f32.mrb[0].mxu0
        %v1578 = vpop.f32.mrb[0].mxu0
        %v1579 = vadd.f32 0.0, %v1578
        %v1580 = vpop.f32.mrb[0].mxu0
        %1581 = vmatprep.mubr.bf16.mxu0 0
        %1582 = vmatmul.mubr.bf16.gmra.mrb[0].mxu0 %v1467
        %v1583 = vpop.f32.mrb[0].mxu0
        %v1584 = vadd.f32 0.0, %v1583
        %v1585 = vpop.f32.mrb[0].mxu0
        %v1586 = vpop.f32.mrb[0].mxu0
        %v1587 = vadd.f32 0.0, %v1586
        %v1588 = vpop.f32.mrb[0].mxu0
        %1589 = vmatprep.mubr.bf16.mxu0 0
        %1590 = vmatmul.mubr.bf16.gmra.mrb[0].mxu0 %v1470
        %v1591 = vpop.f32.mrb[0].mxu0
        %v1592 = vadd.f32 0.0, %v1591
        %v1593 = vpop.f32.mrb[0].mxu0
        %v1594 = vpop.f32.mrb[0].mxu0
        %v1595 = vadd.f32 0.0, %v1594
        %v1596 = vpop.f32.mrb[0].mxu0
        %1597 = vmatprep.mubr.bf16.mxu0 0
        %1598 = vmatmul.mubr.bf16.gmra.mrb[0].mxu0 %v1473
        %v1599 = vpop.f32.mrb[0].mxu0
        %v1600 = vadd.f32 0.0, %v1599
        %v1601 = vpop.f32.mrb[0].mxu0
        %v1602 = vpop.f32.mrb[0].mxu0
        %v1603 = vadd.f32 0.0, %v1602
        %v1604 = vpop.f32.mrb[0].mxu0
        %1605 = vmatprep.mubr.bf16.mxu0 0
        %1606 = vmatmul.mubr.bf16.gmra.mrb[0].mxu0 %v1476
        %v1607 = vpop.f32.mrb[0].mxu0
        %v1608 = vadd.f32 0.0, %v1607
        %v1609 = vpop.f32.mrb[0].mxu0
        %v1610 = vpop.f32.mrb[0].mxu0
        %v1611 = vadd.f32 0.0, %v1610
        %v1612 = vpop.f32.mrb[0].mxu0
        %1613 = vmatprep.mubr.bf16.mxu0 0
        %1614 = vmatmul.mubr.bf16.gmra.mrb[0].mxu0 %v1479
        %v1615 = vpop.f32.mrb[0].mxu0
        %v1616 = vadd.f32 0.0, %v1615
        %v1617 = vpop.f32.mrb[0].mxu0
        %v1618 = vpop.f32.mrb[0].mxu0
        %v1619 = vadd.f32 0.0, %v1618
        %v1620 = vpop.f32.mrb[0].mxu0
        %1621 = vmatprep.mubr.bf16.mxu0 0
        %1622 = vmatmul.mubr.bf16.gmra.mrb[0].mxu0 %v1482
        %v1623 = vpop.f32.mrb[0].mxu0
        %v1624 = vadd.f32 0.0, %v1623
        %v1625 = vpop.f32.mrb[0].mxu0
        %v1626 = vpop.f32.mrb[0].mxu0
        %v1627 = vadd.f32 0.0, %v1626
        %v1628 = vpop.f32.mrb[0].mxu0
        %1629 = vmatprep.mubr.bf16.mxu0 0
        %1630 = vmatmul.mubr.bf16.gmra.mrb[0].mxu0 %v1485
        %v1631 = vpop.f32.mrb[0].mxu0
        %v1632 = vadd.f32 0.0, %v1631
        %v1633 = vpop.f32.mrb[0].mxu0
        %v1634 = vpop.f32.mrb[0].mxu0
        %v1635 = vadd.f32 0.0, %v1634
        %v1636 = vpop.f32.mrb[0].mxu0
        %1637 = vmatprep.mubr.bf16.mxu0 0
        %1638 = vmatmul.mubr.bf16.gmra.mrb[0].mxu0 %v1488
        %v1639 = vpop.f32.mrb[0].mxu0
        %v1640 = vadd.f32 0.0, %v1639
        %v1641 = vpop.f32.mrb[0].mxu0
        %v1642 = vpop.f32.mrb[0].mxu0
        %v1643 = vadd.f32 0.0, %v1642
        %v1644 = vpop.f32.mrb[0].mxu0
        %1645 = vmatprep.mubr.bf16.mxu0 0
        %1646 = vmatmul.mubr.bf16.gmra.mrb[0].mxu0 %v1491
        %v1647 = vpop.f32.mrb[0].mxu0
        %v1648 = vadd.f32 0.0, %v1647
        %v1649 = vpop.f32.mrb[0].mxu0
        %v1650 = vpop.f32.mrb[0].mxu0
        %v1651 = vadd.f32 0.0, %v1650
        %v1652 = vpop.f32.mrb[0].mxu0
        %1653 = vdwg.mxu0
        %v1654 = vadd.f32 %v1107, %v1528
        %v1655 = vadd.f32 %v1110, %v1531
        %v1656 = vadd.f32 %v1115, %v1536
        %v1657 = vadd.f32 %v1118, %v1539
        %v1658 = vadd.f32 %v1123, %v1544
        %v1659 = vadd.f32 %v1126, %v1547
        %v1660 = vadd.f32 %v1131, %v1552
        %v1661 = vadd.f32 %v1134, %v1555
        %v1662 = vadd.f32 %v1139, %v1560
        %v1663 = vadd.f32 %v1142, %v1563
        %v1664 = vadd.f32 %v1147, %v1568
        %v1665 = vadd.f32 %v1150, %v1571
        %v1666 = vadd.f32 %v1155, %v1576
        %v1667 = vadd.f32 %v1158, %v1579
        %v1668 = vadd.f32 %v1163, %v1584
        %v1669 = vadd.f32 %v1166, %v1587
        %v1670 = vadd.f32 %v1171, %v1592
        %v1671 = vadd.f32 %v1174, %v1595
        %v1672 = vadd.f32 %v1179, %v1600
        %v1673 = vadd.f32 %v1182, %v1603
        %v1674 = vadd.f32 %v1187, %v1608
        %v1675 = vadd.f32 %v1190, %v1611
        %v1676 = vadd.f32 %v1195, %v1616
        %v1677 = vadd.f32 %v1198, %v1619
        %v1678 = vadd.f32 %v1203, %v1624
        %v1679 = vadd.f32 %v1206, %v1627
        %v1680 = vadd.f32 %v1211, %v1632
        %v1681 = vadd.f32 %v1214, %v1635
        %v1682 = vadd.f32 %v1219, %v1640
        %v1683 = vadd.f32 %v1222, %v1643
        %v1684 = vadd.f32 %v1227, %v1648
        %v1685 = vadd.f32 %v1230, %v1651
        %s1686 = scalar_lea.vmem %s1, 96
        %v1687 = vld [vmem:[%s1686] sm:$0xf]
        %v1688 = vld [vmem:[%s1686 + $0x4] sm:$0xf]
        %v1689 = vld [vmem:[%s1686 + $0x8] sm:$0xf]
        %v1690 = vld [vmem:[%s1686 + $0xc] sm:$0xf]
        %v1691 = vld [vmem:[%s1686 + $0x10] sm:$0xf]
        %v1692 = vld [vmem:[%s1686 + $0x14] sm:$0xf]
        %v1693 = vld [vmem:[%s1686 + $0x18] sm:$0xf]
        %v1694 = vld [vmem:[%s1686 + $0x1c] sm:$0xf]
        %v1697 = vunpack.c.l.b16 %v228
        %v1698 = vunpack.c.l.b16 %v229
        %v1699 = vpack.c.b16 %v1698, %v1697
        %v1708 = vunpack.c.l.b16 %v1687
        %v1709 = vunpack.c.l.b16 %v1688
        %v1710 = vunpack.c.l.b16 %v1689
        %v1711 = vunpack.c.l.b16 %v1690
        %v1712 = vunpack.c.l.b16 %v1691
        %v1713 = vunpack.c.l.b16 %v1692
        %v1714 = vunpack.c.l.b16 %v1693
        %v1715 = vunpack.c.l.b16 %v1694
        %v1716 = vpack.c.b16 %v1709, %v1708
        %v1717 = vpack.c.b16 %v1711, %v1710
        %v1718 = vpack.c.b16 %v1713, %v1712
        %v1719 = vpack.c.b16 %v1715, %v1714
        %v1725 = vsel %vm710, %v1699, 0
        %1727 = vmatprep.subr.bf16.mxu0 0
        %1728 = vmatpush1.bf16.msra.mxu0 %v1716
        %1729 = vmatprep.subr.bf16.mxu0 0
        %1730 = vmatpush1.bf16.msra.mxu0 %v1717
        %1731 = vmatprep.subr.bf16.mxu0 0
        %1732 = vmatpush1.bf16.msra.mxu0 %v1718
        %1733 = vmatprep.subr.bf16.mxu0 0
        %1734 = vmatpush1.bf16.msra.mxu0 %v1719
        %1735 = vmatprep.subr.bf16.mxu0 0
        %1736 = vmatpush1.bf16.msra.mxu0 0
        %1737 = vmatprep.subr.bf16.mxu0 0
        %1738 = vmatpush1.bf16.msra.mxu0 0
        %1739 = vmatprep.subr.bf16.mxu0 0
        %1740 = vmatpush1.bf16.msra.mxu0 0
        %1741 = vmatprep.subr.bf16.mxu0 0
        %1742 = vmatpush1.bf16.msra.mxu0 0
        %1743 = vmatprep.subr.bf16.mxu0 0
        %1744 = vmatpush1.bf16.msra.mxu0 0
        %1745 = vmatprep.subr.bf16.mxu0 0
        %1746 = vmatpush1.bf16.msra.mxu0 0
        %1747 = vmatprep.subr.bf16.mxu0 0
        %1748 = vmatpush1.bf16.msra.mxu0 0
        %1749 = vmatprep.subr.bf16.mxu0 0
        %1750 = vmatpush1.bf16.msra.mxu0 0
        %1751 = vmatprep.subr.bf16.mxu0 0
        %1752 = vmatpush1.bf16.msra.mxu0 0
        %1753 = vmatprep.subr.bf16.mxu0 0
        %1754 = vmatpush1.bf16.msra.mxu0 0
        %1755 = vmatprep.subr.bf16.mxu0 0
        %1756 = vmatpush1.bf16.msra.mxu0 0
        %1757 = vmatprep.subr.bf16.mxu0 0
        %1758 = vmatpush1.bf16.msra.mxu0 0
        %1759 = vmatprep.mubr.bf16.mxu0 0
        %1760 = vmatmul.mubr.bf16.gmra.mrb[0].mxu0 %v1028
        %v1761 = vpop.f32.mrb[0].mxu0
        %v1762 = vadd.f32 0.0, %v1761
        %v1763 = vpop.f32.mrb[0].mxu0
        %v1764 = vpop.f32.mrb[0].mxu0
        %v1765 = vadd.f32 0.0, %v1764
        %v1766 = vpop.f32.mrb[0].mxu0
        %1767 = vmatprep.mubr.bf16.mxu0 0
        %1768 = vmatmul.mubr.bf16.gmra.mrb[0].mxu0 %v1031
        %v1769 = vpop.f32.mrb[0].mxu0
        %v1770 = vadd.f32 0.0, %v1769
        %v1771 = vpop.f32.mrb[0].mxu0
        %v1772 = vpop.f32.mrb[0].mxu0
        %v1773 = vadd.f32 0.0, %v1772
        %v1774 = vpop.f32.mrb[0].mxu0
        %1775 = vmatprep.mubr.bf16.mxu0 0
        %1776 = vmatmul.mubr.bf16.gmra.mrb[0].mxu0 %v1034
        %v1777 = vpop.f32.mrb[0].mxu0
        %v1778 = vadd.f32 0.0, %v1777
        %v1779 = vpop.f32.mrb[0].mxu0
        %v1780 = vpop.f32.mrb[0].mxu0
        %v1781 = vadd.f32 0.0, %v1780
        %v1782 = vpop.f32.mrb[0].mxu0
        %1783 = vmatprep.mubr.bf16.mxu0 0
        %1784 = vmatmul.mubr.bf16.gmra.mrb[0].mxu0 %v1037
        %v1785 = vpop.f32.mrb[0].mxu0
        %v1786 = vadd.f32 0.0, %v1785
        %v1787 = vpop.f32.mrb[0].mxu0
        %v1788 = vpop.f32.mrb[0].mxu0
        %v1789 = vadd.f32 0.0, %v1788
        %v1790 = vpop.f32.mrb[0].mxu0
        %1791 = vmatprep.mubr.bf16.mxu0 0
        %1792 = vmatmul.mubr.bf16.gmra.mrb[0].mxu0 %v1040
        %v1793 = vpop.f32.mrb[0].mxu0
        %v1794 = vadd.f32 0.0, %v1793
        %v1795 = vpop.f32.mrb[0].mxu0
        %v1796 = vpop.f32.mrb[0].mxu0
        %v1797 = vadd.f32 0.0, %v1796
        %v1798 = vpop.f32.mrb[0].mxu0
        %1799 = vmatprep.mubr.bf16.mxu0 0
        %1800 = vmatmul.mubr.bf16.gmra.mrb[0].mxu0 %v1043
        %v1801 = vpop.f32.mrb[0].mxu0
        %v1802 = vadd.f32 0.0, %v1801
        %v1803 = vpop.f32.mrb[0].mxu0
        %v1804 = vpop.f32.mrb[0].mxu0
        %v1805 = vadd.f32 0.0, %v1804
        %v1806 = vpop.f32.mrb[0].mxu0
        %1807 = vmatprep.mubr.bf16.mxu0 0
        %1808 = vmatmul.mubr.bf16.gmra.mrb[0].mxu0 %v1046
        %v1809 = vpop.f32.mrb[0].mxu0
        %v1810 = vadd.f32 0.0, %v1809
        %v1811 = vpop.f32.mrb[0].mxu0
        %v1812 = vpop.f32.mrb[0].mxu0
        %v1813 = vadd.f32 0.0, %v1812
        %v1814 = vpop.f32.mrb[0].mxu0
        %1815 = vmatprep.mubr.bf16.mxu0 0
        %1816 = vmatmul.mubr.bf16.gmra.mrb[0].mxu0 %v1049
        %v1817 = vpop.f32.mrb[0].mxu0
        %v1818 = vadd.f32 0.0, %v1817
        %v1819 = vpop.f32.mrb[0].mxu0
        %v1820 = vpop.f32.mrb[0].mxu0
        %v1821 = vadd.f32 0.0, %v1820
        %v1822 = vpop.f32.mrb[0].mxu0
        %1823 = vmatprep.mubr.bf16.mxu0 0
        %1824 = vmatmul.mubr.bf16.gmra.mrb[0].mxu0 %v1052
        %v1825 = vpop.f32.mrb[0].mxu0
        %v1826 = vadd.f32 0.0, %v1825
        %v1827 = vpop.f32.mrb[0].mxu0
        %v1828 = vpop.f32.mrb[0].mxu0
        %v1829 = vadd.f32 0.0, %v1828
        %v1830 = vpop.f32.mrb[0].mxu0
        %1831 = vmatprep.mubr.bf16.mxu0 0
        %1832 = vmatmul.mubr.bf16.gmra.mrb[0].mxu0 %v1055
        %v1833 = vpop.f32.mrb[0].mxu0
        %v1834 = vadd.f32 0.0, %v1833
        %v1835 = vpop.f32.mrb[0].mxu0
        %v1836 = vpop.f32.mrb[0].mxu0
        %v1837 = vadd.f32 0.0, %v1836
        %v1838 = vpop.f32.mrb[0].mxu0
        %1839 = vmatprep.mubr.bf16.mxu0 0
        %1840 = vmatmul.mubr.bf16.gmra.mrb[0].mxu0 %v1058
        %v1841 = vpop.f32.mrb[0].mxu0
        %v1842 = vadd.f32 0.0, %v1841
        %v1843 = vpop.f32.mrb[0].mxu0
        %v1844 = vpop.f32.mrb[0].mxu0
        %v1845 = vadd.f32 0.0, %v1844
        %v1846 = vpop.f32.mrb[0].mxu0
        %1847 = vmatprep.mubr.bf16.mxu0 0
        %1848 = vmatmul.mubr.bf16.gmra.mrb[0].mxu0 %v1061
        %v1849 = vpop.f32.mrb[0].mxu0
        %v1850 = vadd.f32 0.0, %v1849
        %v1851 = vpop.f32.mrb[0].mxu0
        %v1852 = vpop.f32.mrb[0].mxu0
        %v1853 = vadd.f32 0.0, %v1852
        %v1854 = vpop.f32.mrb[0].mxu0
        %1855 = vmatprep.mubr.bf16.mxu0 0
        %1856 = vmatmul.mubr.bf16.gmra.mrb[0].mxu0 %v1064
        %v1857 = vpop.f32.mrb[0].mxu0
        %v1858 = vadd.f32 0.0, %v1857
        %v1859 = vpop.f32.mrb[0].mxu0
        %v1860 = vpop.f32.mrb[0].mxu0
        %v1861 = vadd.f32 0.0, %v1860
        %v1862 = vpop.f32.mrb[0].mxu0
        %1863 = vmatprep.mubr.bf16.mxu0 0
        %1864 = vmatmul.mubr.bf16.gmra.mrb[0].mxu0 %v1067
        %v1865 = vpop.f32.mrb[0].mxu0
        %v1866 = vadd.f32 0.0, %v1865
        %v1867 = vpop.f32.mrb[0].mxu0
        %v1868 = vpop.f32.mrb[0].mxu0
        %v1869 = vadd.f32 0.0, %v1868
        %v1870 = vpop.f32.mrb[0].mxu0
        %1871 = vmatprep.mubr.bf16.mxu0 0
        %1872 = vmatmul.mubr.bf16.gmra.mrb[0].mxu0 %v1070
        %v1873 = vpop.f32.mrb[0].mxu0
        %v1874 = vadd.f32 0.0, %v1873
        %v1875 = vpop.f32.mrb[0].mxu0
        %v1876 = vpop.f32.mrb[0].mxu0
        %v1877 = vadd.f32 0.0, %v1876
        %v1878 = vpop.f32.mrb[0].mxu0
        %1879 = vmatprep.mubr.bf16.mxu0 0
        %1880 = vmatmul.mubr.bf16.gmra.mrb[0].mxu0 %v1725
        %v1881 = vpop.f32.mrb[0].mxu0
        %v1882 = vadd.f32 0.0, %v1881
        %v1883 = vpop.f32.mrb[0].mxu0
        %v1884 = vpop.f32.mrb[0].mxu0
        %v1885 = vadd.f32 0.0, %v1884
        %v1886 = vpop.f32.mrb[0].mxu0
        %1887 = vdwg.mxu0
        %v1888 = vadd.f32 %v1654, %v1762
        %v1889 = vadd.f32 %v1655, %v1765
        %v1890 = vadd.f32 %v1656, %v1770
        %v1891 = vadd.f32 %v1657, %v1773
        %v1892 = vadd.f32 %v1658, %v1778
        %v1893 = vadd.f32 %v1659, %v1781
        %v1894 = vadd.f32 %v1660, %v1786
        %v1895 = vadd.f32 %v1661, %v1789
        %v1896 = vadd.f32 %v1662, %v1794
        %v1897 = vadd.f32 %v1663, %v1797
        %v1898 = vadd.f32 %v1664, %v1802
        %v1899 = vadd.f32 %v1665, %v1805
        %v1900 = vadd.f32 %v1666, %v1810
        %v1901 = vadd.f32 %v1667, %v1813
        %v1902 = vadd.f32 %v1668, %v1818
        %v1903 = vadd.f32 %v1669, %v1821
        %v1904 = vadd.f32 %v1670, %v1826
        %v1905 = vadd.f32 %v1671, %v1829
        %v1906 = vadd.f32 %v1672, %v1834
        %v1907 = vadd.f32 %v1673, %v1837
        %v1908 = vadd.f32 %v1674, %v1842
        %v1909 = vadd.f32 %v1675, %v1845
        %v1910 = vadd.f32 %v1676, %v1850
        %v1911 = vadd.f32 %v1677, %v1853
        %v1912 = vadd.f32 %v1678, %v1858
        %v1913 = vadd.f32 %v1679, %v1861
        %v1914 = vadd.f32 %v1680, %v1866
        %v1915 = vadd.f32 %v1681, %v1869
        %v1916 = vadd.f32 %v1682, %v1874
        %v1917 = vadd.f32 %v1683, %v1877
        %v1918 = vadd.f32 %v1684, %v1882
        %v1919 = vadd.f32 %v1685, %v1885
        %v1921 = vshrl.u32 %v228, 16
        %v1923 = vrot.slane %v1921, 4
        %v1924 = vshll.u32 %v228, 16
        %v1926 = vrot.slane %v1924, 5
        %v1927 = vor.u32 %v1923, %v1926
        %v1928 = vrot.slane %v1927, 4
        %v1930 = vshll.u32 %v229, 16
        %v1932 = vrot.slane %v1930, 5
        %v1933 = vsel %vm244, %v1928, %v1932
        %v1934 = vshrl.u32 %v229, 16
        %v1936 = vrot.slane %v1934, 4
        %v1937 = vor.u32 %v1936, %v1932
        %v1938 = vrot.slane %v1937, 4
        %v1940 = vshll.u32 %v230, 16
        %v1942 = vrot.slane %v1940, 5
        %v1943 = vsel %vm244, %v1938, %v1942
        %s1944 = scalar_lea.vmem %s1, 128
        %v1945 = vld [vmem:[%s1944] sm:$0xf]
        %v1946 = vld [vmem:[%s1944 + $0x4] sm:$0xf]
        %v1947 = vld [vmem:[%s1944 + $0x8] sm:$0xf]
        %v1948 = vld [vmem:[%s1944 + $0xc] sm:$0xf]
        %v1949 = vld [vmem:[%s1944 + $0x10] sm:$0xf]
        %v1950 = vld [vmem:[%s1944 + $0x14] sm:$0xf]
        %v1951 = vld [vmem:[%s1944 + $0x18] sm:$0xf]
        %v1952 = vld [vmem:[%s1944 + $0x1c] sm:$0xf]
        %v1953 = vunpack.c.l.b16 %v1933
        %v1954 = vunpack.c.l.b16 %v1943
        %v1955 = vpack.c.b16 %v1954, %v1953
        %v1964 = vunpack.c.l.b16 %v1945
        %v1965 = vunpack.c.l.b16 %v1946
        %v1966 = vunpack.c.l.b16 %v1947
        %v1967 = vunpack.c.l.b16 %v1948
        %v1968 = vunpack.c.l.b16 %v1949
        %v1969 = vunpack.c.l.b16 %v1950
        %v1970 = vunpack.c.l.b16 %v1951
        %v1971 = vunpack.c.l.b16 %v1952
        %v1972 = vpack.c.b16 %v1965, %v1964
        %v1973 = vpack.c.b16 %v1967, %v1966
        %v1974 = vpack.c.b16 %v1969, %v1968
        %v1975 = vpack.c.b16 %v1971, %v1970
        %v1981 = vsel %vm710, %v1955, 0
        %1983 = vmatprep.subr.bf16.mxu0 0
        %1984 = vmatpush1.bf16.msra.mxu0 %v1972
        %1985 = vmatprep.subr.bf16.mxu0 0
        %1986 = vmatpush1.bf16.msra.mxu0 %v1973
        %1987 = vmatprep.subr.bf16.mxu0 0
        %1988 = vmatpush1.bf16.msra.mxu0 %v1974
        %1989 = vmatprep.subr.bf16.mxu0 0
        %1990 = vmatpush1.bf16.msra.mxu0 %v1975
        %1991 = vmatprep.subr.bf16.mxu0 0
        %1992 = vmatpush1.bf16.msra.mxu0 0
        %1993 = vmatprep.subr.bf16.mxu0 0
        %1994 = vmatpush1.bf16.msra.mxu0 0
        %1995 = vmatprep.subr.bf16.mxu0 0
        %1996 = vmatpush1.bf16.msra.mxu0 0
        %1997 = vmatprep.subr.bf16.mxu0 0
        %1998 = vmatpush1.bf16.msra.mxu0 0
        %1999 = vmatprep.subr.bf16.mxu0 0
        %2000 = vmatpush1.bf16.msra.mxu0 0
        %2001 = vmatprep.subr.bf16.mxu0 0
        %2002 = vmatpush1.bf16.msra.mxu0 0
        %2003 = vmatprep.subr.bf16.mxu0 0
        %2004 = vmatpush1.bf16.msra.mxu0 0
        %2005 = vmatprep.subr.bf16.mxu0 0
        %2006 = vmatpush1.bf16.msra.mxu0 0
        %2007 = vmatprep.subr.bf16.mxu0 0
        %2008 = vmatpush1.bf16.msra.mxu0 0
        %2009 = vmatprep.subr.bf16.mxu0 0
        %2010 = vmatpush1.bf16.msra.mxu0 0
        %2011 = vmatprep.subr.bf16.mxu0 0
        %2012 = vmatpush1.bf16.msra.mxu0 0
        %2013 = vmatprep.subr.bf16.mxu0 0
        %2014 = vmatpush1.bf16.msra.mxu0 0
        %2015 = vmatprep.mubr.bf16.mxu0 0
        %2016 = vmatmul.mubr.bf16.gmra.mrb[0].mxu0 %v715
        %v2017 = vpop.f32.mrb[0].mxu0
        %v2018 = vadd.f32 0.0, %v2017
        %v2019 = vpop.f32.mrb[0].mxu0
        %v2020 = vpop.f32.mrb[0].mxu0
        %v2021 = vadd.f32 0.0, %v2020
        %v2022 = vpop.f32.mrb[0].mxu0
        %2023 = vmatprep.mubr.bf16.mxu0 0
        %2024 = vmatmul.mubr.bf16.gmra.mrb[0].mxu0 %v718
        %v2025 = vpop.f32.mrb[0].mxu0
        %v2026 = vadd.f32 0.0, %v2025
        %v2027 = vpop.f32.mrb[0].mxu0
        %v2028 = vpop.f32.mrb[0].mxu0
        %v2029 = vadd.f32 0.0, %v2028
        %v2030 = vpop.f32.mrb[0].mxu0
        %2031 = vmatprep.mubr.bf16.mxu0 0
        %2032 = vmatmul.mubr.bf16.gmra.mrb[0].mxu0 %v721
        %v2033 = vpop.f32.mrb[0].mxu0
        %v2034 = vadd.f32 0.0, %v2033
        %v2035 = vpop.f32.mrb[0].mxu0
        %v2036 = vpop.f32.mrb[0].mxu0
        %v2037 = vadd.f32 0.0, %v2036
        %v2038 = vpop.f32.mrb[0].mxu0
        %2039 = vmatprep.mubr.bf16.mxu0 0
        %2040 = vmatmul.mubr.bf16.gmra.mrb[0].mxu0 %v724
        %v2041 = vpop.f32.mrb[0].mxu0
        %v2042 = vadd.f32 0.0, %v2041
        %v2043 = vpop.f32.mrb[0].mxu0
        %v2044 = vpop.f32.mrb[0].mxu0
        %v2045 = vadd.f32 0.0, %v2044
        %v2046 = vpop.f32.mrb[0].mxu0
        %2047 = vmatprep.mubr.bf16.mxu0 0
        %2048 = vmatmul.mubr.bf16.gmra.mrb[0].mxu0 %v727
        %v2049 = vpop.f32.mrb[0].mxu0
        %v2050 = vadd.f32 0.0, %v2049
        %v2051 = vpop.f32.mrb[0].mxu0
        %v2052 = vpop.f32.mrb[0].mxu0
        %v2053 = vadd.f32 0.0, %v2052
        %v2054 = vpop.f32.mrb[0].mxu0
        %2055 = vmatprep.mubr.bf16.mxu0 0
        %2056 = vmatmul.mubr.bf16.gmra.mrb[0].mxu0 %v730
        %v2057 = vpop.f32.mrb[0].mxu0
        %v2058 = vadd.f32 0.0, %v2057
        %v2059 = vpop.f32.mrb[0].mxu0
        %v2060 = vpop.f32.mrb[0].mxu0
        %v2061 = vadd.f32 0.0, %v2060
        %v2062 = vpop.f32.mrb[0].mxu0
        %2063 = vmatprep.mubr.bf16.mxu0 0
        %2064 = vmatmul.mubr.bf16.gmra.mrb[0].mxu0 %v733
        %v2065 = vpop.f32.mrb[0].mxu0
        %v2066 = vadd.f32 0.0, %v2065
        %v2067 = vpop.f32.mrb[0].mxu0
        %v2068 = vpop.f32.mrb[0].mxu0
        %v2069 = vadd.f32 0.0, %v2068
        %v2070 = vpop.f32.mrb[0].mxu0
        %2071 = vmatprep.mubr.bf16.mxu0 0
        %2072 = vmatmul.mubr.bf16.gmra.mrb[0].mxu0 %v736
        %v2073 = vpop.f32.mrb[0].mxu0
        %v2074 = vadd.f32 0.0, %v2073
        %v2075 = vpop.f32.mrb[0].mxu0
        %v2076 = vpop.f32.mrb[0].mxu0
        %v2077 = vadd.f32 0.0, %v2076
        %v2078 = vpop.f32.mrb[0].mxu0
        %2079 = vmatprep.mubr.bf16.mxu0 0
        %2080 = vmatmul.mubr.bf16.gmra.mrb[0].mxu0 %v739
        %v2081 = vpop.f32.mrb[0].mxu0
        %v2082 = vadd.f32 0.0, %v2081
        %v2083 = vpop.f32.mrb[0].mxu0
        %v2084 = vpop.f32.mrb[0].mxu0
        %v2085 = vadd.f32 0.0, %v2084
        %v2086 = vpop.f32.mrb[0].mxu0
        %2087 = vmatprep.mubr.bf16.mxu0 0
        %2088 = vmatmul.mubr.bf16.gmra.mrb[0].mxu0 %v742
        %v2089 = vpop.f32.mrb[0].mxu0
        %v2090 = vadd.f32 0.0, %v2089
        %v2091 = vpop.f32.mrb[0].mxu0
        %v2092 = vpop.f32.mrb[0].mxu0
        %v2093 = vadd.f32 0.0, %v2092
        %v2094 = vpop.f32.mrb[0].mxu0
        %2095 = vmatprep.mubr.bf16.mxu0 0
        %2096 = vmatmul.mubr.bf16.gmra.mrb[0].mxu0 %v745
        %v2097 = vpop.f32.mrb[0].mxu0
        %v2098 = vadd.f32 0.0, %v2097
        %v2099 = vpop.f32.mrb[0].mxu0
        %v2100 = vpop.f32.mrb[0].mxu0
        %v2101 = vadd.f32 0.0, %v2100
        %v2102 = vpop.f32.mrb[0].mxu0
        %2103 = vmatprep.mubr.bf16.mxu0 0
        %2104 = vmatmul.mubr.bf16.gmra.mrb[0].mxu0 %v748
        %v2105 = vpop.f32.mrb[0].mxu0
        %v2106 = vadd.f32 0.0, %v2105
        %v2107 = vpop.f32.mrb[0].mxu0
        %v2108 = vpop.f32.mrb[0].mxu0
        %v2109 = vadd.f32 0.0, %v2108
        %v2110 = vpop.f32.mrb[0].mxu0
        %2111 = vmatprep.mubr.bf16.mxu0 0
        %2112 = vmatmul.mubr.bf16.gmra.mrb[0].mxu0 %v751
        %v2113 = vpop.f32.mrb[0].mxu0
        %v2114 = vadd.f32 0.0, %v2113
        %v2115 = vpop.f32.mrb[0].mxu0
        %v2116 = vpop.f32.mrb[0].mxu0
        %v2117 = vadd.f32 0.0, %v2116
        %v2118 = vpop.f32.mrb[0].mxu0
        %2119 = vmatprep.mubr.bf16.mxu0 0
        %2120 = vmatmul.mubr.bf16.gmra.mrb[0].mxu0 %v754
        %v2121 = vpop.f32.mrb[0].mxu0
        %v2122 = vadd.f32 0.0, %v2121
        %v2123 = vpop.f32.mrb[0].mxu0
        %v2124 = vpop.f32.mrb[0].mxu0
        %v2125 = vadd.f32 0.0, %v2124
        %v2126 = vpop.f32.mrb[0].mxu0
        %2127 = vmatprep.mubr.bf16.mxu0 0
        %2128 = vmatmul.mubr.bf16.gmra.mrb[0].mxu0 %v757
        %v2129 = vpop.f32.mrb[0].mxu0
        %v2130 = vadd.f32 0.0, %v2129
        %v2131 = vpop.f32.mrb[0].mxu0
        %v2132 = vpop.f32.mrb[0].mxu0
        %v2133 = vadd.f32 0.0, %v2132
        %v2134 = vpop.f32.mrb[0].mxu0
        %2135 = vmatprep.mubr.bf16.mxu0 0
        %2136 = vmatmul.mubr.bf16.gmra.mrb[0].mxu0 %v1981
        %v2137 = vpop.f32.mrb[0].mxu0
        %v2138 = vadd.f32 0.0, %v2137
        %v2139 = vpop.f32.mrb[0].mxu0
        %v2140 = vpop.f32.mrb[0].mxu0
        %v2141 = vadd.f32 0.0, %v2140
        %v2142 = vpop.f32.mrb[0].mxu0
        %2143 = vdwg.mxu0
        %v2144 = vadd.f32 %v1888, %v2018
        %v2145 = vadd.f32 %v1889, %v2021
        %v2146 = vadd.f32 %v1890, %v2026
        %v2147 = vadd.f32 %v1891, %v2029
        %v2148 = vadd.f32 %v1892, %v2034
        %v2149 = vadd.f32 %v1893, %v2037
        %v2150 = vadd.f32 %v1894, %v2042
        %v2151 = vadd.f32 %v1895, %v2045
        %v2152 = vadd.f32 %v1896, %v2050
        %v2153 = vadd.f32 %v1897, %v2053
        %v2154 = vadd.f32 %v1898, %v2058
        %v2155 = vadd.f32 %v1899, %v2061
        %v2156 = vadd.f32 %v1900, %v2066
        %v2157 = vadd.f32 %v1901, %v2069
        %v2158 = vadd.f32 %v1902, %v2074
        %v2159 = vadd.f32 %v1903, %v2077
        %v2160 = vadd.f32 %v1904, %v2082
        %v2161 = vadd.f32 %v1905, %v2085
        %v2162 = vadd.f32 %v1906, %v2090
        %v2163 = vadd.f32 %v1907, %v2093
        %v2164 = vadd.f32 %v1908, %v2098
        %v2165 = vadd.f32 %v1909, %v2101
        %v2166 = vadd.f32 %v1910, %v2106
        %v2167 = vadd.f32 %v1911, %v2109
        %v2168 = vadd.f32 %v1912, %v2114
        %v2169 = vadd.f32 %v1913, %v2117
        %v2170 = vadd.f32 %v1914, %v2122
        %v2171 = vadd.f32 %v1915, %v2125
        %v2172 = vadd.f32 %v1916, %v2130
        %v2173 = vadd.f32 %v1917, %v2133
        %v2174 = vadd.f32 %v1918, %v2138
        %v2175 = vadd.f32 %v1919, %v2141
        %v2177 = vrot.slane %v228, 5
        %v2178 = vrot.slane %v2177, 4
        %v2179 = vrot.slane %v229, 5
        %v2180 = vsel %vm1251, %v2178, %v2179
        %v2181 = vrot.slane %v2179, 4
        %v2182 = vrot.slane %v230, 5
        %v2183 = vsel %vm1251, %v2181, %v2182
        %s2184 = scalar_lea.vmem %s1, 160
        %v2185 = vld [vmem:[%s2184] sm:$0xf]
        %v2186 = vld [vmem:[%s2184 + $0x4] sm:$0xf]
        %v2187 = vld [vmem:[%s2184 + $0x8] sm:$0xf]
        %v2188 = vld [vmem:[%s2184 + $0xc] sm:$0xf]
        %v2189 = vld [vmem:[%s2184 + $0x10] sm:$0xf]
        %v2190 = vld [vmem:[%s2184 + $0x14] sm:$0xf]
        %v2191 = vld [vmem:[%s2184 + $0x18] sm:$0xf]
        %v2192 = vld [vmem:[%s2184 + $0x1c] sm:$0xf]
        %v2193 = vunpack.c.l.b16 %v2180
        %v2194 = vunpack.c.l.b16 %v2183
        %v2195 = vpack.c.b16 %v2194, %v2193
        %v2204 = vunpack.c.l.b16 %v2185
        %v2205 = vunpack.c.l.b16 %v2186
        %v2206 = vunpack.c.l.b16 %v2187
        %v2207 = vunpack.c.l.b16 %v2188
        %v2208 = vunpack.c.l.b16 %v2189
        %v2209 = vunpack.c.l.b16 %v2190
        %v2210 = vunpack.c.l.b16 %v2191
        %v2211 = vunpack.c.l.b16 %v2192
        %v2212 = vpack.c.b16 %v2205, %v2204
        %v2213 = vpack.c.b16 %v2207, %v2206
        %v2214 = vpack.c.b16 %v2209, %v2208
        %v2215 = vpack.c.b16 %v2211, %v2210
        %v2221 = vsel %vm710, %v2195, 0
        %2223 = vmatprep.subr.bf16.mxu0 0
        %2224 = vmatpush1.bf16.msra.mxu0 %v2212
        %2225 = vmatprep.subr.bf16.mxu0 0
        %2226 = vmatpush1.bf16.msra.mxu0 %v2213
        %2227 = vmatprep.subr.bf16.mxu0 0
        %2228 = vmatpush1.bf16.msra.mxu0 %v2214
        %2229 = vmatprep.subr.bf16.mxu0 0
        %2230 = vmatpush1.bf16.msra.mxu0 %v2215
        %2231 = vmatprep.subr.bf16.mxu0 0
        %2232 = vmatpush1.bf16.msra.mxu0 0
        %2233 = vmatprep.subr.bf16.mxu0 0
        %2234 = vmatpush1.bf16.msra.mxu0 0
        %2235 = vmatprep.subr.bf16.mxu0 0
        %2236 = vmatpush1.bf16.msra.mxu0 0
        %2237 = vmatprep.subr.bf16.mxu0 0
        %2238 = vmatpush1.bf16.msra.mxu0 0
        %2239 = vmatprep.subr.bf16.mxu0 0
        %2240 = vmatpush1.bf16.msra.mxu0 0
        %2241 = vmatprep.subr.bf16.mxu0 0
        %2242 = vmatpush1.bf16.msra.mxu0 0
        %2243 = vmatprep.subr.bf16.mxu0 0
        %2244 = vmatpush1.bf16.msra.mxu0 0
        %2245 = vmatprep.subr.bf16.mxu0 0
        %2246 = vmatpush1.bf16.msra.mxu0 0
        %2247 = vmatprep.subr.bf16.mxu0 0
        %2248 = vmatpush1.bf16.msra.mxu0 0
        %2249 = vmatprep.subr.bf16.mxu0 0
        %2250 = vmatpush1.bf16.msra.mxu0 0
        %2251 = vmatprep.subr.bf16.mxu0 0
        %2252 = vmatpush1.bf16.msra.mxu0 0
        %2253 = vmatprep.subr.bf16.mxu0 0
        %2254 = vmatpush1.bf16.msra.mxu0 0
        %2255 = vmatprep.mubr.bf16.mxu0 0
        %2256 = vmatmul.mubr.bf16.gmra.mrb[0].mxu0 %v1449
        %v2257 = vpop.f32.mrb[0].mxu0
        %v2258 = vadd.f32 0.0, %v2257
        %v2259 = vpop.f32.mrb[0].mxu0
        %v2260 = vpop.f32.mrb[0].mxu0
        %v2261 = vadd.f32 0.0, %v2260
        %v2262 = vpop.f32.mrb[0].mxu0
        %2263 = vmatprep.mubr.bf16.mxu0 0
        %2264 = vmatmul.mubr.bf16.gmra.mrb[0].mxu0 %v1452
        %v2265 = vpop.f32.mrb[0].mxu0
        %v2266 = vadd.f32 0.0, %v2265
        %v2267 = vpop.f32.mrb[0].mxu0
        %v2268 = vpop.f32.mrb[0].mxu0
        %v2269 = vadd.f32 0.0, %v2268
        %v2270 = vpop.f32.mrb[0].mxu0
        %2271 = vmatprep.mubr.bf16.mxu0 0
        %2272 = vmatmul.mubr.bf16.gmra.mrb[0].mxu0 %v1455
        %v2273 = vpop.f32.mrb[0].mxu0
        %v2274 = vadd.f32 0.0, %v2273
        %v2275 = vpop.f32.mrb[0].mxu0
        %v2276 = vpop.f32.mrb[0].mxu0
        %v2277 = vadd.f32 0.0, %v2276
        %v2278 = vpop.f32.mrb[0].mxu0
        %2279 = vmatprep.mubr.bf16.mxu0 0
        %2280 = vmatmul.mubr.bf16.gmra.mrb[0].mxu0 %v1458
        %v2281 = vpop.f32.mrb[0].mxu0
        %v2282 = vadd.f32 0.0, %v2281
        %v2283 = vpop.f32.mrb[0].mxu0
        %v2284 = vpop.f32.mrb[0].mxu0
        %v2285 = vadd.f32 0.0, %v2284
        %v2286 = vpop.f32.mrb[0].mxu0
        %2287 = vmatprep.mubr.bf16.mxu0 0
        %2288 = vmatmul.mubr.bf16.gmra.mrb[0].mxu0 %v1461
        %v2289 = vpop.f32.mrb[0].mxu0
        %v2290 = vadd.f32 0.0, %v2289
        %v2291 = vpop.f32.mrb[0].mxu0
        %v2292 = vpop.f32.mrb[0].mxu0
        %v2293 = vadd.f32 0.0, %v2292
        %v2294 = vpop.f32.mrb[0].mxu0
        %2295 = vmatprep.mubr.bf16.mxu0 0
        %2296 = vmatmul.mubr.bf16.gmra.mrb[0].mxu0 %v1464
        %v2297 = vpop.f32.mrb[0].mxu0
        %v2298 = vadd.f32 0.0, %v2297
        %v2299 = vpop.f32.mrb[0].mxu0
        %v2300 = vpop.f32.mrb[0].mxu0
        %v2301 = vadd.f32 0.0, %v2300
        %v2302 = vpop.f32.mrb[0].mxu0
        %2303 = vmatprep.mubr.bf16.mxu0 0
        %2304 = vmatmul.mubr.bf16.gmra.mrb[0].mxu0 %v1467
        %v2305 = vpop.f32.mrb[0].mxu0
        %v2306 = vadd.f32 0.0, %v2305
        %v2307 = vpop.f32.mrb[0].mxu0
        %v2308 = vpop.f32.mrb[0].mxu0
        %v2309 = vadd.f32 0.0, %v2308
        %v2310 = vpop.f32.mrb[0].mxu0
        %2311 = vmatprep.mubr.bf16.mxu0 0
        %2312 = vmatmul.mubr.bf16.gmra.mrb[0].mxu0 %v1470
        %v2313 = vpop.f32.mrb[0].mxu0
        %v2314 = vadd.f32 0.0, %v2313
        %v2315 = vpop.f32.mrb[0].mxu0
        %v2316 = vpop.f32.mrb[0].mxu0
        %v2317 = vadd.f32 0.0, %v2316
        %v2318 = vpop.f32.mrb[0].mxu0
        %2319 = vmatprep.mubr.bf16.mxu0 0
        %2320 = vmatmul.mubr.bf16.gmra.mrb[0].mxu0 %v1473
        %v2321 = vpop.f32.mrb[0].mxu0
        %v2322 = vadd.f32 0.0, %v2321
        %v2323 = vpop.f32.mrb[0].mxu0
        %v2324 = vpop.f32.mrb[0].mxu0
        %v2325 = vadd.f32 0.0, %v2324
        %v2326 = vpop.f32.mrb[0].mxu0
        %2327 = vmatprep.mubr.bf16.mxu0 0
        %2328 = vmatmul.mubr.bf16.gmra.mrb[0].mxu0 %v1476
        %v2329 = vpop.f32.mrb[0].mxu0
        %v2330 = vadd.f32 0.0, %v2329
        %v2331 = vpop.f32.mrb[0].mxu0
        %v2332 = vpop.f32.mrb[0].mxu0
        %v2333 = vadd.f32 0.0, %v2332
        %v2334 = vpop.f32.mrb[0].mxu0
        %2335 = vmatprep.mubr.bf16.mxu0 0
        %2336 = vmatmul.mubr.bf16.gmra.mrb[0].mxu0 %v1479
        %v2337 = vpop.f32.mrb[0].mxu0
        %v2338 = vadd.f32 0.0, %v2337
        %v2339 = vpop.f32.mrb[0].mxu0
        %v2340 = vpop.f32.mrb[0].mxu0
        %v2341 = vadd.f32 0.0, %v2340
        %v2342 = vpop.f32.mrb[0].mxu0
        %2343 = vmatprep.mubr.bf16.mxu0 0
        %2344 = vmatmul.mubr.bf16.gmra.mrb[0].mxu0 %v1482
        %v2345 = vpop.f32.mrb[0].mxu0
        %v2346 = vadd.f32 0.0, %v2345
        %v2347 = vpop.f32.mrb[0].mxu0
        %v2348 = vpop.f32.mrb[0].mxu0
        %v2349 = vadd.f32 0.0, %v2348
        %v2350 = vpop.f32.mrb[0].mxu0
        %2351 = vmatprep.mubr.bf16.mxu0 0
        %2352 = vmatmul.mubr.bf16.gmra.mrb[0].mxu0 %v1485
        %v2353 = vpop.f32.mrb[0].mxu0
        %v2354 = vadd.f32 0.0, %v2353
        %v2355 = vpop.f32.mrb[0].mxu0
        %v2356 = vpop.f32.mrb[0].mxu0
        %v2357 = vadd.f32 0.0, %v2356
        %v2358 = vpop.f32.mrb[0].mxu0
        %2359 = vmatprep.mubr.bf16.mxu0 0
        %2360 = vmatmul.mubr.bf16.gmra.mrb[0].mxu0 %v1488
        %v2361 = vpop.f32.mrb[0].mxu0
        %v2362 = vadd.f32 0.0, %v2361
        %v2363 = vpop.f32.mrb[0].mxu0
        %v2364 = vpop.f32.mrb[0].mxu0
        %v2365 = vadd.f32 0.0, %v2364
        %v2366 = vpop.f32.mrb[0].mxu0
        %2367 = vmatprep.mubr.bf16.mxu0 0
        %2368 = vmatmul.mubr.bf16.gmra.mrb[0].mxu0 %v1491
        %v2369 = vpop.f32.mrb[0].mxu0
        %v2370 = vadd.f32 0.0, %v2369
        %v2371 = vpop.f32.mrb[0].mxu0
        %v2372 = vpop.f32.mrb[0].mxu0
        %v2373 = vadd.f32 0.0, %v2372
        %v2374 = vpop.f32.mrb[0].mxu0
        %2375 = vmatprep.mubr.bf16.mxu0 0
        %2376 = vmatmul.mubr.bf16.gmra.mrb[0].mxu0 %v2221
        %v2377 = vpop.f32.mrb[0].mxu0
        %v2378 = vadd.f32 0.0, %v2377
        %v2379 = vpop.f32.mrb[0].mxu0
        %v2380 = vpop.f32.mrb[0].mxu0
        %v2381 = vadd.f32 0.0, %v2380
        %v2382 = vpop.f32.mrb[0].mxu0
        %2383 = vdwg.mxu0
        %v2384 = vadd.f32 %v2144, %v2258
        %v2385 = vadd.f32 %v2145, %v2261
        %v2386 = vadd.f32 %v2146, %v2266
        %v2387 = vadd.f32 %v2147, %v2269
        %v2388 = vadd.f32 %v2148, %v2274
        %v2389 = vadd.f32 %v2149, %v2277
        %v2390 = vadd.f32 %v2150, %v2282
        %v2391 = vadd.f32 %v2151, %v2285
        %v2392 = vadd.f32 %v2152, %v2290
        %v2393 = vadd.f32 %v2153, %v2293
        %v2394 = vadd.f32 %v2154, %v2298
        %v2395 = vadd.f32 %v2155, %v2301
        %v2396 = vadd.f32 %v2156, %v2306
        %v2397 = vadd.f32 %v2157, %v2309
        %v2398 = vadd.f32 %v2158, %v2314
        %v2399 = vadd.f32 %v2159, %v2317
        %v2400 = vadd.f32 %v2160, %v2322
        %v2401 = vadd.f32 %v2161, %v2325
        %v2402 = vadd.f32 %v2162, %v2330
        %v2403 = vadd.f32 %v2163, %v2333
        %v2404 = vadd.f32 %v2164, %v2338
        %v2405 = vadd.f32 %v2165, %v2341
        %v2406 = vadd.f32 %v2166, %v2346
        %v2407 = vadd.f32 %v2167, %v2349
        %v2408 = vadd.f32 %v2168, %v2354
        %v2409 = vadd.f32 %v2169, %v2357
        %v2410 = vadd.f32 %v2170, %v2362
        %v2411 = vadd.f32 %v2171, %v2365
        %v2412 = vadd.f32 %v2172, %v2370
        %v2413 = vadd.f32 %v2173, %v2373
        %v2414 = vadd.f32 %v2174, %v2378
        %v2415 = vadd.f32 %v2175, %v2381
        %s2416 = scalar_lea.vmem %s1, 192
        %v2417 = vld [vmem:[%s2416] sm:$0xf]
        %v2418 = vld [vmem:[%s2416 + $0x4] sm:$0xf]
        %v2419 = vld [vmem:[%s2416 + $0x8] sm:$0xf]
        %v2420 = vld [vmem:[%s2416 + $0xc] sm:$0xf]
        %v2421 = vld [vmem:[%s2416 + $0x10] sm:$0xf]
        %v2422 = vld [vmem:[%s2416 + $0x14] sm:$0xf]
        %v2423 = vld [vmem:[%s2416 + $0x18] sm:$0xf]
        %v2424 = vld [vmem:[%s2416 + $0x1c] sm:$0xf]
        %v2427 = vunpack.c.l.b16 %v231
        %v2428 = vunpack.c.l.b16 %v232
        %v2429 = vpack.c.b16 %v2428, %v2427
        %v2438 = vunpack.c.l.b16 %v2417
        %v2439 = vunpack.c.l.b16 %v2418
        %v2440 = vunpack.c.l.b16 %v2419
        %v2441 = vunpack.c.l.b16 %v2420
        %v2442 = vunpack.c.l.b16 %v2421
        %v2443 = vunpack.c.l.b16 %v2422
        %v2444 = vunpack.c.l.b16 %v2423
        %v2445 = vunpack.c.l.b16 %v2424
        %v2446 = vpack.c.b16 %v2439, %v2438
        %v2447 = vpack.c.b16 %v2441, %v2440
        %v2448 = vpack.c.b16 %v2443, %v2442
        %v2449 = vpack.c.b16 %v2445, %v2444
        %v2455 = vsel %vm710, %v2429, 0
        %2457 = vmatprep.subr.bf16.mxu0 0
        %2458 = vmatpush1.bf16.msra.mxu0 %v2446
        %2459 = vmatprep.subr.bf16.mxu0 0
        %2460 = vmatpush1.bf16.msra.mxu0 %v2447
        %2461 = vmatprep.subr.bf16.mxu0 0
        %2462 = vmatpush1.bf16.msra.mxu0 %v2448
        %2463 = vmatprep.subr.bf16.mxu0 0
        %2464 = vmatpush1.bf16.msra.mxu0 %v2449
        %2465 = vmatprep.subr.bf16.mxu0 0
        %2466 = vmatpush1.bf16.msra.mxu0 0
        %2467 = vmatprep.subr.bf16.mxu0 0
        %2468 = vmatpush1.bf16.msra.mxu0 0
        %2469 = vmatprep.subr.bf16.mxu0 0
        %2470 = vmatpush1.bf16.msra.mxu0 0
        %2471 = vmatprep.subr.bf16.mxu0 0
        %2472 = vmatpush1.bf16.msra.mxu0 0
        %2473 = vmatprep.subr.bf16.mxu0 0
        %2474 = vmatpush1.bf16.msra.mxu0 0
        %2475 = vmatprep.subr.bf16.mxu0 0
        %2476 = vmatpush1.bf16.msra.mxu0 0
        %2477 = vmatprep.subr.bf16.mxu0 0
        %2478 = vmatpush1.bf16.msra.mxu0 0
        %2479 = vmatprep.subr.bf16.mxu0 0
        %2480 = vmatpush1.bf16.msra.mxu0 0
        %2481 = vmatprep.subr.bf16.mxu0 0
        %2482 = vmatpush1.bf16.msra.mxu0 0
        %2483 = vmatprep.subr.bf16.mxu0 0
        %2484 = vmatpush1.bf16.msra.mxu0 0
        %2485 = vmatprep.subr.bf16.mxu0 0
        %2486 = vmatpush1.bf16.msra.mxu0 0
        %2487 = vmatprep.subr.bf16.mxu0 0
        %2488 = vmatpush1.bf16.msra.mxu0 0
        %2489 = vmatprep.mubr.bf16.mxu0 0
        %2490 = vmatmul.mubr.bf16.gmra.mrb[0].mxu0 %v1031
        %v2491 = vpop.f32.mrb[0].mxu0
        %v2492 = vadd.f32 0.0, %v2491
        %v2493 = vpop.f32.mrb[0].mxu0
        %v2494 = vpop.f32.mrb[0].mxu0
        %v2495 = vadd.f32 0.0, %v2494
        %v2496 = vpop.f32.mrb[0].mxu0
        %2497 = vmatprep.mubr.bf16.mxu0 0
        %2498 = vmatmul.mubr.bf16.gmra.mrb[0].mxu0 %v1034
        %v2499 = vpop.f32.mrb[0].mxu0
        %v2500 = vadd.f32 0.0, %v2499
        %v2501 = vpop.f32.mrb[0].mxu0
        %v2502 = vpop.f32.mrb[0].mxu0
        %v2503 = vadd.f32 0.0, %v2502
        %v2504 = vpop.f32.mrb[0].mxu0
        %2505 = vmatprep.mubr.bf16.mxu0 0
        %2506 = vmatmul.mubr.bf16.gmra.mrb[0].mxu0 %v1037
        %v2507 = vpop.f32.mrb[0].mxu0
        %v2508 = vadd.f32 0.0, %v2507
        %v2509 = vpop.f32.mrb[0].mxu0
        %v2510 = vpop.f32.mrb[0].mxu0
        %v2511 = vadd.f32 0.0, %v2510
        %v2512 = vpop.f32.mrb[0].mxu0
        %2513 = vmatprep.mubr.bf16.mxu0 0
        %2514 = vmatmul.mubr.bf16.gmra.mrb[0].mxu0 %v1040
        %v2515 = vpop.f32.mrb[0].mxu0
        %v2516 = vadd.f32 0.0, %v2515
        %v2517 = vpop.f32.mrb[0].mxu0
        %v2518 = vpop.f32.mrb[0].mxu0
        %v2519 = vadd.f32 0.0, %v2518
        %v2520 = vpop.f32.mrb[0].mxu0
        %2521 = vmatprep.mubr.bf16.mxu0 0
        %2522 = vmatmul.mubr.bf16.gmra.mrb[0].mxu0 %v1043
        %v2523 = vpop.f32.mrb[0].mxu0
        %v2524 = vadd.f32 0.0, %v2523
        %v2525 = vpop.f32.mrb[0].mxu0
        %v2526 = vpop.f32.mrb[0].mxu0
        %v2527 = vadd.f32 0.0, %v2526
        %v2528 = vpop.f32.mrb[0].mxu0
        %2529 = vmatprep.mubr.bf16.mxu0 0
        %2530 = vmatmul.mubr.bf16.gmra.mrb[0].mxu0 %v1046
        %v2531 = vpop.f32.mrb[0].mxu0
        %v2532 = vadd.f32 0.0, %v2531
        %v2533 = vpop.f32.mrb[0].mxu0
        %v2534 = vpop.f32.mrb[0].mxu0
        %v2535 = vadd.f32 0.0, %v2534
        %v2536 = vpop.f32.mrb[0].mxu0
        %2537 = vmatprep.mubr.bf16.mxu0 0
        %2538 = vmatmul.mubr.bf16.gmra.mrb[0].mxu0 %v1049
        %v2539 = vpop.f32.mrb[0].mxu0
        %v2540 = vadd.f32 0.0, %v2539
        %v2541 = vpop.f32.mrb[0].mxu0
        %v2542 = vpop.f32.mrb[0].mxu0
        %v2543 = vadd.f32 0.0, %v2542
        %v2544 = vpop.f32.mrb[0].mxu0
        %2545 = vmatprep.mubr.bf16.mxu0 0
        %2546 = vmatmul.mubr.bf16.gmra.mrb[0].mxu0 %v1052
        %v2547 = vpop.f32.mrb[0].mxu0
        %v2548 = vadd.f32 0.0, %v2547
        %v2549 = vpop.f32.mrb[0].mxu0
        %v2550 = vpop.f32.mrb[0].mxu0
        %v2551 = vadd.f32 0.0, %v2550
        %v2552 = vpop.f32.mrb[0].mxu0
        %2553 = vmatprep.mubr.bf16.mxu0 0
        %2554 = vmatmul.mubr.bf16.gmra.mrb[0].mxu0 %v1055
        %v2555 = vpop.f32.mrb[0].mxu0
        %v2556 = vadd.f32 0.0, %v2555
        %v2557 = vpop.f32.mrb[0].mxu0
        %v2558 = vpop.f32.mrb[0].mxu0
        %v2559 = vadd.f32 0.0, %v2558
        %v2560 = vpop.f32.mrb[0].mxu0
        %2561 = vmatprep.mubr.bf16.mxu0 0
        %2562 = vmatmul.mubr.bf16.gmra.mrb[0].mxu0 %v1058
        %v2563 = vpop.f32.mrb[0].mxu0
        %v2564 = vadd.f32 0.0, %v2563
        %v2565 = vpop.f32.mrb[0].mxu0
        %v2566 = vpop.f32.mrb[0].mxu0
        %v2567 = vadd.f32 0.0, %v2566
        %v2568 = vpop.f32.mrb[0].mxu0
        %2569 = vmatprep.mubr.bf16.mxu0 0
        %2570 = vmatmul.mubr.bf16.gmra.mrb[0].mxu0 %v1061
        %v2571 = vpop.f32.mrb[0].mxu0
        %v2572 = vadd.f32 0.0, %v2571
        %v2573 = vpop.f32.mrb[0].mxu0
        %v2574 = vpop.f32.mrb[0].mxu0
        %v2575 = vadd.f32 0.0, %v2574
        %v2576 = vpop.f32.mrb[0].mxu0
        %2577 = vmatprep.mubr.bf16.mxu0 0
        %2578 = vmatmul.mubr.bf16.gmra.mrb[0].mxu0 %v1064
        %v2579 = vpop.f32.mrb[0].mxu0
        %v2580 = vadd.f32 0.0, %v2579
        %v2581 = vpop.f32.mrb[0].mxu0
        %v2582 = vpop.f32.mrb[0].mxu0
        %v2583 = vadd.f32 0.0, %v2582
        %v2584 = vpop.f32.mrb[0].mxu0
        %2585 = vmatprep.mubr.bf16.mxu0 0
        %2586 = vmatmul.mubr.bf16.gmra.mrb[0].mxu0 %v1067
        %v2587 = vpop.f32.mrb[0].mxu0
        %v2588 = vadd.f32 0.0, %v2587
        %v2589 = vpop.f32.mrb[0].mxu0
        %v2590 = vpop.f32.mrb[0].mxu0
        %v2591 = vadd.f32 0.0, %v2590
        %v2592 = vpop.f32.mrb[0].mxu0
        %2593 = vmatprep.mubr.bf16.mxu0 0
        %2594 = vmatmul.mubr.bf16.gmra.mrb[0].mxu0 %v1070
        %v2595 = vpop.f32.mrb[0].mxu0
        %v2596 = vadd.f32 0.0, %v2595
        %v2597 = vpop.f32.mrb[0].mxu0
        %v2598 = vpop.f32.mrb[0].mxu0
        %v2599 = vadd.f32 0.0, %v2598
        %v2600 = vpop.f32.mrb[0].mxu0
        %2601 = vmatprep.mubr.bf16.mxu0 0
        %2602 = vmatmul.mubr.bf16.gmra.mrb[0].mxu0 %v1725
        %v2603 = vpop.f32.mrb[0].mxu0
        %v2604 = vadd.f32 0.0, %v2603
        %v2605 = vpop.f32.mrb[0].mxu0
        %v2606 = vpop.f32.mrb[0].mxu0
        %v2607 = vadd.f32 0.0, %v2606
        %v2608 = vpop.f32.mrb[0].mxu0
        %2609 = vmatprep.mubr.bf16.mxu0 0
        %2610 = vmatmul.mubr.bf16.gmra.mrb[0].mxu0 %v2455
        %v2611 = vpop.f32.mrb[0].mxu0
        %v2612 = vadd.f32 0.0, %v2611
        %v2613 = vpop.f32.mrb[0].mxu0
        %v2614 = vpop.f32.mrb[0].mxu0
        %v2615 = vadd.f32 0.0, %v2614
        %v2616 = vpop.f32.mrb[0].mxu0
        %2617 = vdwg.mxu0
        %v2618 = vadd.f32 %v2384, %v2492
        %v2619 = vadd.f32 %v2385, %v2495
        %v2620 = vadd.f32 %v2386, %v2500
        %v2621 = vadd.f32 %v2387, %v2503
        %v2622 = vadd.f32 %v2388, %v2508
        %v2623 = vadd.f32 %v2389, %v2511
        %v2624 = vadd.f32 %v2390, %v2516
        %v2625 = vadd.f32 %v2391, %v2519
        %v2626 = vadd.f32 %v2392, %v2524
        %v2627 = vadd.f32 %v2393, %v2527
        %v2628 = vadd.f32 %v2394, %v2532
        %v2629 = vadd.f32 %v2395, %v2535
        %v2630 = vadd.f32 %v2396, %v2540
        %v2631 = vadd.f32 %v2397, %v2543
        %v2632 = vadd.f32 %v2398, %v2548
        %v2633 = vadd.f32 %v2399, %v2551
        %v2634 = vadd.f32 %v2400, %v2556
        %v2635 = vadd.f32 %v2401, %v2559
        %v2636 = vadd.f32 %v2402, %v2564
        %v2637 = vadd.f32 %v2403, %v2567
        %v2638 = vadd.f32 %v2404, %v2572
        %v2639 = vadd.f32 %v2405, %v2575
        %v2640 = vadd.f32 %v2406, %v2580
        %v2641 = vadd.f32 %v2407, %v2583
        %v2642 = vadd.f32 %v2408, %v2588
        %v2643 = vadd.f32 %v2409, %v2591
        %v2644 = vadd.f32 %v2410, %v2596
        %v2645 = vadd.f32 %v2411, %v2599
        %v2646 = vadd.f32 %v2412, %v2604
        %v2647 = vadd.f32 %v2413, %v2607
        %v2648 = vadd.f32 %v2414, %v2612
        %v2649 = vadd.f32 %v2415, %v2615
        %v2651 = vshrl.u32 %v231, 16
        %v2653 = vrot.slane %v2651, 4
        %v2654 = vshll.u32 %v231, 16
        %v2656 = vrot.slane %v2654, 5
        %v2657 = vor.u32 %v2653, %v2656
        %v2658 = vrot.slane %v2657, 4
        %v2660 = vshll.u32 %v232, 16
        %v2662 = vrot.slane %v2660, 5
        %v2663 = vsel %vm244, %v2658, %v2662
        %v2664 = vshrl.u32 %v232, 16
        %v2666 = vrot.slane %v2664, 4
        %v2667 = vor.u32 %v2666, %v2662
        %v2668 = vrot.slane %v2667, 4
        %v2670 = vshll.u32 %v233, 16
        %v2672 = vrot.slane %v2670, 5
        %v2673 = vsel %vm244, %v2668, %v2672
        %s2674 = scalar_lea.vmem %s1, 224
        %v2675 = vld [vmem:[%s2674] sm:$0xf]
        %v2676 = vld [vmem:[%s2674 + $0x4] sm:$0xf]
        %v2677 = vld [vmem:[%s2674 + $0x8] sm:$0xf]
        %v2678 = vld [vmem:[%s2674 + $0xc] sm:$0xf]
        %v2679 = vld [vmem:[%s2674 + $0x10] sm:$0xf]
        %v2680 = vld [vmem:[%s2674 + $0x14] sm:$0xf]
        %v2681 = vld [vmem:[%s2674 + $0x18] sm:$0xf]
        %v2682 = vld [vmem:[%s2674 + $0x1c] sm:$0xf]
        %v2683 = vunpack.c.l.b16 %v2663
        %v2684 = vunpack.c.l.b16 %v2673
        %v2685 = vpack.c.b16 %v2684, %v2683
        %v2694 = vunpack.c.l.b16 %v2675
        %v2695 = vunpack.c.l.b16 %v2676
        %v2696 = vunpack.c.l.b16 %v2677
        %v2697 = vunpack.c.l.b16 %v2678
        %v2698 = vunpack.c.l.b16 %v2679
        %v2699 = vunpack.c.l.b16 %v2680
        %v2700 = vunpack.c.l.b16 %v2681
        %v2701 = vunpack.c.l.b16 %v2682
        %v2702 = vpack.c.b16 %v2695, %v2694
        %v2703 = vpack.c.b16 %v2697, %v2696
        %v2704 = vpack.c.b16 %v2699, %v2698
        %v2705 = vpack.c.b16 %v2701, %v2700
        %v2711 = vsel %vm710, %v2685, 0
        %2713 = vmatprep.subr.bf16.mxu0 0
        %2714 = vmatpush1.bf16.msra.mxu0 %v2702
        %2715 = vmatprep.subr.bf16.mxu0 0
        %2716 = vmatpush1.bf16.msra.mxu0 %v2703
        %2717 = vmatprep.subr.bf16.mxu0 0
        %2718 = vmatpush1.bf16.msra.mxu0 %v2704
        %2719 = vmatprep.subr.bf16.mxu0 0
        %2720 = vmatpush1.bf16.msra.mxu0 %v2705
        %2721 = vmatprep.subr.bf16.mxu0 0
        %2722 = vmatpush1.bf16.msra.mxu0 0
        %2723 = vmatprep.subr.bf16.mxu0 0
        %2724 = vmatpush1.bf16.msra.mxu0 0
        %2725 = vmatprep.subr.bf16.mxu0 0
        %2726 = vmatpush1.bf16.msra.mxu0 0
        %2727 = vmatprep.subr.bf16.mxu0 0
        %2728 = vmatpush1.bf16.msra.mxu0 0
        %2729 = vmatprep.subr.bf16.mxu0 0
        %2730 = vmatpush1.bf16.msra.mxu0 0
        %2731 = vmatprep.subr.bf16.mxu0 0
        %2732 = vmatpush1.bf16.msra.mxu0 0
        %2733 = vmatprep.subr.bf16.mxu0 0
        %2734 = vmatpush1.bf16.msra.mxu0 0
        %2735 = vmatprep.subr.bf16.mxu0 0
        %2736 = vmatpush1.bf16.msra.mxu0 0
        %2737 = vmatprep.subr.bf16.mxu0 0
        %2738 = vmatpush1.bf16.msra.mxu0 0
        %2739 = vmatprep.subr.bf16.mxu0 0
        %2740 = vmatpush1.bf16.msra.mxu0 0
        %2741 = vmatprep.subr.bf16.mxu0 0
        %2742 = vmatpush1.bf16.msra.mxu0 0
        %2743 = vmatprep.subr.bf16.mxu0 0
        %2744 = vmatpush1.bf16.msra.mxu0 0
        %2745 = vmatprep.mubr.bf16.mxu0 0
        %2746 = vmatmul.mubr.bf16.gmra.mrb[0].mxu0 %v718
        %v2747 = vpop.f32.mrb[0].mxu0
        %v2748 = vadd.f32 0.0, %v2747
        %v2749 = vpop.f32.mrb[0].mxu0
        %v2750 = vpop.f32.mrb[0].mxu0
        %v2751 = vadd.f32 0.0, %v2750
        %v2752 = vpop.f32.mrb[0].mxu0
        %2753 = vmatprep.mubr.bf16.mxu0 0
        %2754 = vmatmul.mubr.bf16.gmra.mrb[0].mxu0 %v721
        %v2755 = vpop.f32.mrb[0].mxu0
        %v2756 = vadd.f32 0.0, %v2755
        %v2757 = vpop.f32.mrb[0].mxu0
        %v2758 = vpop.f32.mrb[0].mxu0
        %v2759 = vadd.f32 0.0, %v2758
        %v2760 = vpop.f32.mrb[0].mxu0
        %2761 = vmatprep.mubr.bf16.mxu0 0
        %2762 = vmatmul.mubr.bf16.gmra.mrb[0].mxu0 %v724
        %v2763 = vpop.f32.mrb[0].mxu0
        %v2764 = vadd.f32 0.0, %v2763
        %v2765 = vpop.f32.mrb[0].mxu0
        %v2766 = vpop.f32.mrb[0].mxu0
        %v2767 = vadd.f32 0.0, %v2766
        %v2768 = vpop.f32.mrb[0].mxu0
        %2769 = vmatprep.mubr.bf16.mxu0 0
        %2770 = vmatmul.mubr.bf16.gmra.mrb[0].mxu0 %v727
        %v2771 = vpop.f32.mrb[0].mxu0
        %v2772 = vadd.f32 0.0, %v2771
        %v2773 = vpop.f32.mrb[0].mxu0
        %v2774 = vpop.f32.mrb[0].mxu0
        %v2775 = vadd.f32 0.0, %v2774
        %v2776 = vpop.f32.mrb[0].mxu0
        %2777 = vmatprep.mubr.bf16.mxu0 0
        %2778 = vmatmul.mubr.bf16.gmra.mrb[0].mxu0 %v730
        %v2779 = vpop.f32.mrb[0].mxu0
        %v2780 = vadd.f32 0.0, %v2779
        %v2781 = vpop.f32.mrb[0].mxu0
        %v2782 = vpop.f32.mrb[0].mxu0
        %v2783 = vadd.f32 0.0, %v2782
        %v2784 = vpop.f32.mrb[0].mxu0
        %2785 = vmatprep.mubr.bf16.mxu0 0
        %2786 = vmatmul.mubr.bf16.gmra.mrb[0].mxu0 %v733
        %v2787 = vpop.f32.mrb[0].mxu0
        %v2788 = vadd.f32 0.0, %v2787
        %v2789 = vpop.f32.mrb[0].mxu0
        %v2790 = vpop.f32.mrb[0].mxu0
        %v2791 = vadd.f32 0.0, %v2790
        %v2792 = vpop.f32.mrb[0].mxu0
        %2793 = vmatprep.mubr.bf16.mxu0 0
        %2794 = vmatmul.mubr.bf16.gmra.mrb[0].mxu0 %v736
        %v2795 = vpop.f32.mrb[0].mxu0
        %v2796 = vadd.f32 0.0, %v2795
        %v2797 = vpop.f32.mrb[0].mxu0
        %v2798 = vpop.f32.mrb[0].mxu0
        %v2799 = vadd.f32 0.0, %v2798
        %v2800 = vpop.f32.mrb[0].mxu0
        %2801 = vmatprep.mubr.bf16.mxu0 0
        %2802 = vmatmul.mubr.bf16.gmra.mrb[0].mxu0 %v739
        %v2803 = vpop.f32.mrb[0].mxu0
        %v2804 = vadd.f32 0.0, %v2803
        %v2805 = vpop.f32.mrb[0].mxu0
        %v2806 = vpop.f32.mrb[0].mxu0
        %v2807 = vadd.f32 0.0, %v2806
        %v2808 = vpop.f32.mrb[0].mxu0
        %2809 = vmatprep.mubr.bf16.mxu0 0
        %2810 = vmatmul.mubr.bf16.gmra.mrb[0].mxu0 %v742
        %v2811 = vpop.f32.mrb[0].mxu0
        %v2812 = vadd.f32 0.0, %v2811
        %v2813 = vpop.f32.mrb[0].mxu0
        %v2814 = vpop.f32.mrb[0].mxu0
        %v2815 = vadd.f32 0.0, %v2814
        %v2816 = vpop.f32.mrb[0].mxu0
        %2817 = vmatprep.mubr.bf16.mxu0 0
        %2818 = vmatmul.mubr.bf16.gmra.mrb[0].mxu0 %v745
        %v2819 = vpop.f32.mrb[0].mxu0
        %v2820 = vadd.f32 0.0, %v2819
        %v2821 = vpop.f32.mrb[0].mxu0
        %v2822 = vpop.f32.mrb[0].mxu0
        %v2823 = vadd.f32 0.0, %v2822
        %v2824 = vpop.f32.mrb[0].mxu0
        %2825 = vmatprep.mubr.bf16.mxu0 0
        %2826 = vmatmul.mubr.bf16.gmra.mrb[0].mxu0 %v748
        %v2827 = vpop.f32.mrb[0].mxu0
        %v2828 = vadd.f32 0.0, %v2827
        %v2829 = vpop.f32.mrb[0].mxu0
        %v2830 = vpop.f32.mrb[0].mxu0
        %v2831 = vadd.f32 0.0, %v2830
        %v2832 = vpop.f32.mrb[0].mxu0
        %2833 = vmatprep.mubr.bf16.mxu0 0
        %2834 = vmatmul.mubr.bf16.gmra.mrb[0].mxu0 %v751
        %v2835 = vpop.f32.mrb[0].mxu0
        %v2836 = vadd.f32 0.0, %v2835
        %v2837 = vpop.f32.mrb[0].mxu0
        %v2838 = vpop.f32.mrb[0].mxu0
        %v2839 = vadd.f32 0.0, %v2838
        %v2840 = vpop.f32.mrb[0].mxu0
        %2841 = vmatprep.mubr.bf16.mxu0 0
        %2842 = vmatmul.mubr.bf16.gmra.mrb[0].mxu0 %v754
        %v2843 = vpop.f32.mrb[0].mxu0
        %v2844 = vadd.f32 0.0, %v2843
        %v2845 = vpop.f32.mrb[0].mxu0
        %v2846 = vpop.f32.mrb[0].mxu0
        %v2847 = vadd.f32 0.0, %v2846
        %v2848 = vpop.f32.mrb[0].mxu0
        %2849 = vmatprep.mubr.bf16.mxu0 0
        %2850 = vmatmul.mubr.bf16.gmra.mrb[0].mxu0 %v757
        %v2851 = vpop.f32.mrb[0].mxu0
        %v2852 = vadd.f32 0.0, %v2851
        %v2853 = vpop.f32.mrb[0].mxu0
        %v2854 = vpop.f32.mrb[0].mxu0
        %v2855 = vadd.f32 0.0, %v2854
        %v2856 = vpop.f32.mrb[0].mxu0
        %2857 = vmatprep.mubr.bf16.mxu0 0
        %2858 = vmatmul.mubr.bf16.gmra.mrb[0].mxu0 %v1981
        %v2859 = vpop.f32.mrb[0].mxu0
        %v2860 = vadd.f32 0.0, %v2859
        %v2861 = vpop.f32.mrb[0].mxu0
        %v2862 = vpop.f32.mrb[0].mxu0
        %v2863 = vadd.f32 0.0, %v2862
        %v2864 = vpop.f32.mrb[0].mxu0
        %2865 = vmatprep.mubr.bf16.mxu0 0
        %2866 = vmatmul.mubr.bf16.gmra.mrb[0].mxu0 %v2711
        %v2867 = vpop.f32.mrb[0].mxu0
        %v2868 = vadd.f32 0.0, %v2867
        %v2869 = vpop.f32.mrb[0].mxu0
        %v2870 = vpop.f32.mrb[0].mxu0
        %v2871 = vadd.f32 0.0, %v2870
        %v2872 = vpop.f32.mrb[0].mxu0
        %2873 = vdwg.mxu0
        %v2874 = vadd.f32 %v2618, %v2748
        %v2875 = vadd.f32 %v2619, %v2751
        %v2876 = vadd.f32 %v2620, %v2756
        %v2877 = vadd.f32 %v2621, %v2759
        %v2878 = vadd.f32 %v2622, %v2764
        %v2879 = vadd.f32 %v2623, %v2767
        %v2880 = vadd.f32 %v2624, %v2772
        %v2881 = vadd.f32 %v2625, %v2775
        %v2882 = vadd.f32 %v2626, %v2780
        %v2883 = vadd.f32 %v2627, %v2783
        %v2884 = vadd.f32 %v2628, %v2788
        %v2885 = vadd.f32 %v2629, %v2791
        %v2886 = vadd.f32 %v2630, %v2796
        %v2887 = vadd.f32 %v2631, %v2799
        %v2888 = vadd.f32 %v2632, %v2804
        %v2889 = vadd.f32 %v2633, %v2807
        %v2890 = vadd.f32 %v2634, %v2812
        %v2891 = vadd.f32 %v2635, %v2815
        %v2892 = vadd.f32 %v2636, %v2820
        %v2893 = vadd.f32 %v2637, %v2823
        %v2894 = vadd.f32 %v2638, %v2828
        %v2895 = vadd.f32 %v2639, %v2831
        %v2896 = vadd.f32 %v2640, %v2836
        %v2897 = vadd.f32 %v2641, %v2839
        %v2898 = vadd.f32 %v2642, %v2844
        %v2899 = vadd.f32 %v2643, %v2847
        %v2900 = vadd.f32 %v2644, %v2852
        %v2901 = vadd.f32 %v2645, %v2855
        %v2902 = vadd.f32 %v2646, %v2860
        %v2903 = vadd.f32 %v2647, %v2863
        %v2904 = vadd.f32 %v2648, %v2868
        %v2905 = vadd.f32 %v2649, %v2871
        %v2907 = vrot.slane %v231, 5
        %v2908 = vrot.slane %v2907, 4
        %v2909 = vrot.slane %v232, 5
        %v2910 = vsel %vm1251, %v2908, %v2909
        %v2911 = vrot.slane %v2909, 4
        %v2912 = vrot.slane %v233, 5
        %v2913 = vsel %vm1251, %v2911, %v2912
        %s2914 = scalar_lea.vmem %s1, 256
        %v2915 = vld [vmem:[%s2914] sm:$0xf]
        %v2916 = vld [vmem:[%s2914 + $0x4] sm:$0xf]
        %v2917 = vld [vmem:[%s2914 + $0x8] sm:$0xf]
        %v2918 = vld [vmem:[%s2914 + $0xc] sm:$0xf]
        %v2919 = vld [vmem:[%s2914 + $0x10] sm:$0xf]
        %v2920 = vld [vmem:[%s2914 + $0x14] sm:$0xf]
        %v2921 = vld [vmem:[%s2914 + $0x18] sm:$0xf]
        %v2922 = vld [vmem:[%s2914 + $0x1c] sm:$0xf]
        %v2923 = vunpack.c.l.b16 %v2910
        %v2924 = vunpack.c.l.b16 %v2913
        %v2925 = vpack.c.b16 %v2924, %v2923
        %v2934 = vunpack.c.l.b16 %v2915
        %v2935 = vunpack.c.l.b16 %v2916
        %v2936 = vunpack.c.l.b16 %v2917
        %v2937 = vunpack.c.l.b16 %v2918
        %v2938 = vunpack.c.l.b16 %v2919
        %v2939 = vunpack.c.l.b16 %v2920
        %v2940 = vunpack.c.l.b16 %v2921
        %v2941 = vunpack.c.l.b16 %v2922
        %v2942 = vpack.c.b16 %v2935, %v2934
        %v2943 = vpack.c.b16 %v2937, %v2936
        %v2944 = vpack.c.b16 %v2939, %v2938
        %v2945 = vpack.c.b16 %v2941, %v2940
        %v2951 = vsel %vm710, %v2925, 0
        %2953 = vmatprep.subr.bf16.mxu0 0
        %2954 = vmatpush1.bf16.msra.mxu0 %v2942
        %2955 = vmatprep.subr.bf16.mxu0 0
        %2956 = vmatpush1.bf16.msra.mxu0 %v2943
        %2957 = vmatprep.subr.bf16.mxu0 0
        %2958 = vmatpush1.bf16.msra.mxu0 %v2944
        %2959 = vmatprep.subr.bf16.mxu0 0
        %2960 = vmatpush1.bf16.msra.mxu0 %v2945
        %2961 = vmatprep.subr.bf16.mxu0 0
        %2962 = vmatpush1.bf16.msra.mxu0 0
        %2963 = vmatprep.subr.bf16.mxu0 0
        %2964 = vmatpush1.bf16.msra.mxu0 0
        %2965 = vmatprep.subr.bf16.mxu0 0
        %2966 = vmatpush1.bf16.msra.mxu0 0
        %2967 = vmatprep.subr.bf16.mxu0 0
        %2968 = vmatpush1.bf16.msra.mxu0 0
        %2969 = vmatprep.subr.bf16.mxu0 0
        %2970 = vmatpush1.bf16.msra.mxu0 0
        %2971 = vmatprep.subr.bf16.mxu0 0
        %2972 = vmatpush1.bf16.msra.mxu0 0
        %2973 = vmatprep.subr.bf16.mxu0 0
        %2974 = vmatpush1.bf16.msra.mxu0 0
        %2975 = vmatprep.subr.bf16.mxu0 0
        %2976 = vmatpush1.bf16.msra.mxu0 0
        %2977 = vmatprep.subr.bf16.mxu0 0
        %2978 = vmatpush1.bf16.msra.mxu0 0
        %2979 = vmatprep.subr.bf16.mxu0 0
        %2980 = vmatpush1.bf16.msra.mxu0 0
        %2981 = vmatprep.subr.bf16.mxu0 0
        %2982 = vmatpush1.bf16.msra.mxu0 0
        %2983 = vmatprep.subr.bf16.mxu0 0
        %2984 = vmatpush1.bf16.msra.mxu0 0
        %2985 = vmatprep.mubr.bf16.mxu0 0
        %2986 = vmatmul.mubr.bf16.gmra.mrb[0].mxu0 %v1452
        %v2987 = vpop.f32.mrb[0].mxu0
        %v2988 = vadd.f32 0.0, %v2987
        %v2989 = vpop.f32.mrb[0].mxu0
        %v2990 = vpop.f32.mrb[0].mxu0
        %v2991 = vadd.f32 0.0, %v2990
        %v2992 = vpop.f32.mrb[0].mxu0
        %2993 = vmatprep.mubr.bf16.mxu0 0
        %2994 = vmatmul.mubr.bf16.gmra.mrb[0].mxu0 %v1455
        %v2995 = vpop.f32.mrb[0].mxu0
        %v2996 = vadd.f32 0.0, %v2995
        %v2997 = vpop.f32.mrb[0].mxu0
        %v2998 = vpop.f32.mrb[0].mxu0
        %v2999 = vadd.f32 0.0, %v2998
        %v3000 = vpop.f32.mrb[0].mxu0
        %3001 = vmatprep.mubr.bf16.mxu0 0
        %3002 = vmatmul.mubr.bf16.gmra.mrb[0].mxu0 %v1458
        %v3003 = vpop.f32.mrb[0].mxu0
        %v3004 = vadd.f32 0.0, %v3003
        %v3005 = vpop.f32.mrb[0].mxu0
        %v3006 = vpop.f32.mrb[0].mxu0
        %v3007 = vadd.f32 0.0, %v3006
        %v3008 = vpop.f32.mrb[0].mxu0
        %3009 = vmatprep.mubr.bf16.mxu0 0
        %3010 = vmatmul.mubr.bf16.gmra.mrb[0].mxu0 %v1461
        %v3011 = vpop.f32.mrb[0].mxu0
        %v3012 = vadd.f32 0.0, %v3011
        %v3013 = vpop.f32.mrb[0].mxu0
        %v3014 = vpop.f32.mrb[0].mxu0
        %v3015 = vadd.f32 0.0, %v3014
        %v3016 = vpop.f32.mrb[0].mxu0
        %3017 = vmatprep.mubr.bf16.mxu0 0
        %3018 = vmatmul.mubr.bf16.gmra.mrb[0].mxu0 %v1464
        %v3019 = vpop.f32.mrb[0].mxu0
        %v3020 = vadd.f32 0.0, %v3019
        %v3021 = vpop.f32.mrb[0].mxu0
        %v3022 = vpop.f32.mrb[0].mxu0
        %v3023 = vadd.f32 0.0, %v3022
        %v3024 = vpop.f32.mrb[0].mxu0
        %3025 = vmatprep.mubr.bf16.mxu0 0
        %3026 = vmatmul.mubr.bf16.gmra.mrb[0].mxu0 %v1467
        %v3027 = vpop.f32.mrb[0].mxu0
        %v3028 = vadd.f32 0.0, %v3027
        %v3029 = vpop.f32.mrb[0].mxu0
        %v3030 = vpop.f32.mrb[0].mxu0
        %v3031 = vadd.f32 0.0, %v3030
        %v3032 = vpop.f32.mrb[0].mxu0
        %3033 = vmatprep.mubr.bf16.mxu0 0
        %3034 = vmatmul.mubr.bf16.gmra.mrb[0].mxu0 %v1470
        %v3035 = vpop.f32.mrb[0].mxu0
        %v3036 = vadd.f32 0.0, %v3035
        %v3037 = vpop.f32.mrb[0].mxu0
        %v3038 = vpop.f32.mrb[0].mxu0
        %v3039 = vadd.f32 0.0, %v3038
        %v3040 = vpop.f32.mrb[0].mxu0
        %3041 = vmatprep.mubr.bf16.mxu0 0
        %3042 = vmatmul.mubr.bf16.gmra.mrb[0].mxu0 %v1473
        %v3043 = vpop.f32.mrb[0].mxu0
        %v3044 = vadd.f32 0.0, %v3043
        %v3045 = vpop.f32.mrb[0].mxu0
        %v3046 = vpop.f32.mrb[0].mxu0
        %v3047 = vadd.f32 0.0, %v3046
        %v3048 = vpop.f32.mrb[0].mxu0
        %3049 = vmatprep.mubr.bf16.mxu0 0
        %3050 = vmatmul.mubr.bf16.gmra.mrb[0].mxu0 %v1476
        %v3051 = vpop.f32.mrb[0].mxu0
        %v3052 = vadd.f32 0.0, %v3051
        %v3053 = vpop.f32.mrb[0].mxu0
        %v3054 = vpop.f32.mrb[0].mxu0
        %v3055 = vadd.f32 0.0, %v3054
        %v3056 = vpop.f32.mrb[0].mxu0
        %3057 = vmatprep.mubr.bf16.mxu0 0
        %3058 = vmatmul.mubr.bf16.gmra.mrb[0].mxu0 %v1479
        %v3059 = vpop.f32.mrb[0].mxu0
        %v3060 = vadd.f32 0.0, %v3059
        %v3061 = vpop.f32.mrb[0].mxu0
        %v3062 = vpop.f32.mrb[0].mxu0
        %v3063 = vadd.f32 0.0, %v3062
        %v3064 = vpop.f32.mrb[0].mxu0
        %3065 = vmatprep.mubr.bf16.mxu0 0
        %3066 = vmatmul.mubr.bf16.gmra.mrb[0].mxu0 %v1482
        %v3067 = vpop.f32.mrb[0].mxu0
        %v3068 = vadd.f32 0.0, %v3067
        %v3069 = vpop.f32.mrb[0].mxu0
        %v3070 = vpop.f32.mrb[0].mxu0
        %v3071 = vadd.f32 0.0, %v3070
        %v3072 = vpop.f32.mrb[0].mxu0
        %3073 = vmatprep.mubr.bf16.mxu0 0
        %3074 = vmatmul.mubr.bf16.gmra.mrb[0].mxu0 %v1485
        %v3075 = vpop.f32.mrb[0].mxu0
        %v3076 = vadd.f32 0.0, %v3075
        %v3077 = vpop.f32.mrb[0].mxu0
        %v3078 = vpop.f32.mrb[0].mxu0
        %v3079 = vadd.f32 0.0, %v3078
        %v3080 = vpop.f32.mrb[0].mxu0
        %3081 = vmatprep.mubr.bf16.mxu0 0
        %3082 = vmatmul.mubr.bf16.gmra.mrb[0].mxu0 %v1488
        %v3083 = vpop.f32.mrb[0].mxu0
        %v3084 = vadd.f32 0.0, %v3083
        %v3085 = vpop.f32.mrb[0].mxu0
        %v3086 = vpop.f32.mrb[0].mxu0
        %v3087 = vadd.f32 0.0, %v3086
        %v3088 = vpop.f32.mrb[0].mxu0
        %3089 = vmatprep.mubr.bf16.mxu0 0
        %3090 = vmatmul.mubr.bf16.gmra.mrb[0].mxu0 %v1491
        %v3091 = vpop.f32.mrb[0].mxu0
        %v3092 = vadd.f32 0.0, %v3091
        %v3093 = vpop.f32.mrb[0].mxu0
        %v3094 = vpop.f32.mrb[0].mxu0
        %v3095 = vadd.f32 0.0, %v3094
        %v3096 = vpop.f32.mrb[0].mxu0
        %3097 = vmatprep.mubr.bf16.mxu0 0
        %3098 = vmatmul.mubr.bf16.gmra.mrb[0].mxu0 %v2221
        %v3099 = vpop.f32.mrb[0].mxu0
        %v3100 = vadd.f32 0.0, %v3099
        %v3101 = vpop.f32.mrb[0].mxu0
        %v3102 = vpop.f32.mrb[0].mxu0
        %v3103 = vadd.f32 0.0, %v3102
        %v3104 = vpop.f32.mrb[0].mxu0
        %3105 = vmatprep.mubr.bf16.mxu0 0
        %3106 = vmatmul.mubr.bf16.gmra.mrb[0].mxu0 %v2951
        %v3107 = vpop.f32.mrb[0].mxu0
        %v3108 = vadd.f32 0.0, %v3107
        %v3109 = vpop.f32.mrb[0].mxu0
        %v3110 = vpop.f32.mrb[0].mxu0
        %v3111 = vadd.f32 0.0, %v3110
        %v3112 = vpop.f32.mrb[0].mxu0
        %3113 = vdwg.mxu0
        %v3114 = vadd.f32 %v2874, %v2988
        %v3115 = vadd.f32 %v2875, %v2991
        %v3116 = vadd.f32 %v2876, %v2996
        %v3117 = vadd.f32 %v2877, %v2999
        %v3118 = vadd.f32 %v2878, %v3004
        %v3119 = vadd.f32 %v2879, %v3007
        %v3120 = vadd.f32 %v2880, %v3012
        %v3121 = vadd.f32 %v2881, %v3015
        %v3122 = vadd.f32 %v2882, %v3020
        %v3123 = vadd.f32 %v2883, %v3023
        %v3124 = vadd.f32 %v2884, %v3028
        %v3125 = vadd.f32 %v2885, %v3031
        %v3126 = vadd.f32 %v2886, %v3036
        %v3127 = vadd.f32 %v2887, %v3039
        %v3128 = vadd.f32 %v2888, %v3044
        %v3129 = vadd.f32 %v2889, %v3047
        %v3130 = vadd.f32 %v2890, %v3052
        %v3131 = vadd.f32 %v2891, %v3055
        %v3132 = vadd.f32 %v2892, %v3060
        %v3133 = vadd.f32 %v2893, %v3063
        %v3134 = vadd.f32 %v2894, %v3068
        %v3135 = vadd.f32 %v2895, %v3071
        %v3136 = vadd.f32 %v2896, %v3076
        %v3137 = vadd.f32 %v2897, %v3079
        %v3138 = vadd.f32 %v2898, %v3084
        %v3139 = vadd.f32 %v2899, %v3087
        %v3140 = vadd.f32 %v2900, %v3092
        %v3141 = vadd.f32 %v2901, %v3095
        %v3142 = vadd.f32 %v2902, %v3100
        %v3143 = vadd.f32 %v2903, %v3103
        %v3144 = vadd.f32 %v2904, %v3108
        %v3145 = vadd.f32 %v2905, %v3111
        %v3146 = vpack.c.bf16 %v3115, %v3114
        %v3147 = vpack.c.bf16 %v3117, %v3116
        %v3148 = vpack.c.bf16 %v3119, %v3118
        %v3149 = vpack.c.bf16 %v3121, %v3120
        %v3150 = vpack.c.bf16 %v3123, %v3122
        %v3151 = vpack.c.bf16 %v3125, %v3124
        %v3152 = vpack.c.bf16 %v3127, %v3126
        %v3153 = vpack.c.bf16 %v3129, %v3128
        %v3154 = vpack.c.bf16 %v3131, %v3130
        %v3155 = vpack.c.bf16 %v3133, %v3132
        %v3156 = vpack.c.bf16 %v3135, %v3134
        %v3157 = vpack.c.bf16 %v3137, %v3136
        %v3158 = vpack.c.bf16 %v3139, %v3138
        %v3159 = vpack.c.bf16 %v3141, %v3140
        %v3160 = vpack.c.bf16 %v3143, %v3142
        %v3161 = vpack.c.bf16 %v3145, %v3144
        %v3178 = vunpack.c.l.b16 %v3146
        %v3179 = vunpack.c.h.b16 %v3146
        %v3180 = vunpack.c.l.b16 %v3147
        %v3181 = vunpack.c.h.b16 %v3147
        %v3182 = vunpack.c.l.b16 %v3148
        %v3183 = vunpack.c.h.b16 %v3148
        %v3184 = vunpack.c.l.b16 %v3149
        %v3185 = vunpack.c.h.b16 %v3149
        %v3186 = vunpack.c.l.b16 %v3150
        %v3187 = vunpack.c.h.b16 %v3150
        %v3188 = vunpack.c.l.b16 %v3151
        %v3189 = vunpack.c.h.b16 %v3151
        %v3190 = vunpack.c.l.b16 %v3152
        %v3191 = vunpack.c.h.b16 %v3152
        %v3192 = vunpack.c.l.b16 %v3153
        %v3193 = vunpack.c.h.b16 %v3153
        %v3194 = vunpack.c.l.b16 %v3154
        %v3195 = vunpack.c.h.b16 %v3154
        %v3196 = vunpack.c.l.b16 %v3155
        %v3197 = vunpack.c.h.b16 %v3155
        %v3198 = vunpack.c.l.b16 %v3156
        %v3199 = vunpack.c.h.b16 %v3156
        %v3200 = vunpack.c.l.b16 %v3157
        %v3201 = vunpack.c.h.b16 %v3157
        %v3202 = vunpack.c.l.b16 %v3158
        %v3203 = vunpack.c.h.b16 %v3158
        %v3204 = vunpack.c.l.b16 %v3159
        %v3205 = vunpack.c.h.b16 %v3159
        %v3206 = vunpack.c.l.b16 %v3160
        %v3207 = vunpack.c.h.b16 %v3160
        %v3208 = vunpack.c.l.b16 %v3161
        %v3209 = vunpack.c.h.b16 %v3161
        %v3210 = vpack.c.b16 %v3178, %v3178
        %v3211 = vpack.c.b16 %v3179, %v3179
        %v3212 = vpack.c.b16 %v3180, %v3180
        %v3213 = vpack.c.b16 %v3181, %v3181
        %v3214 = vpack.c.b16 %v3182, %v3182
        %v3215 = vpack.c.b16 %v3183, %v3183
        %v3216 = vpack.c.b16 %v3184, %v3184
        %v3217 = vpack.c.b16 %v3185, %v3185
        %v3218 = vpack.c.b16 %v3186, %v3186
        %v3219 = vpack.c.b16 %v3187, %v3187
        %v3220 = vpack.c.b16 %v3188, %v3188
        %v3221 = vpack.c.b16 %v3189, %v3189
        %v3222 = vpack.c.b16 %v3190, %v3190
        %v3223 = vpack.c.b16 %v3191, %v3191
        %v3224 = vpack.c.b16 %v3192, %v3192
        %v3225 = vpack.c.b16 %v3193, %v3193
        %v3226 = vpack.c.b16 %v3194, %v3194
        %v3227 = vpack.c.b16 %v3195, %v3195
        %v3228 = vpack.c.b16 %v3196, %v3196
        %v3229 = vpack.c.b16 %v3197, %v3197
        %v3230 = vpack.c.b16 %v3198, %v3198
        %v3231 = vpack.c.b16 %v3199, %v3199
        %v3232 = vpack.c.b16 %v3200, %v3200
        %v3233 = vpack.c.b16 %v3201, %v3201
        %v3234 = vpack.c.b16 %v3202, %v3202
        %v3235 = vpack.c.b16 %v3203, %v3203
        %v3236 = vpack.c.b16 %v3204, %v3204
        %v3237 = vpack.c.b16 %v3205, %v3205
        %v3238 = vpack.c.b16 %v3206, %v3206
        %v3239 = vpack.c.b16 %v3207, %v3207
        %v3240 = vpack.c.b16 %v3208, %v3208
        %v3241 = vpack.c.b16 %v3209, %v3209
        %vm3274 = vcmask 519168
        %3275 = vst.msk [vmem:[%s167] sm:$0xf] %vm3274, %v3210
        %3276 = vst.msk [vmem:[%s167 + $0x4] sm:$0xf] %vm3274, %v3211
        %3277 = vst.msk [vmem:[%s167 + $0x8] sm:$0xf] %vm3274, %v3212
        %3278 = vst.msk [vmem:[%s167 + $0xc] sm:$0xf] %vm3274, %v3213
        %3279 = vst.msk [vmem:[%s167 + $0x10] sm:$0xf] %vm3274, %v3214
        %3280 = vst.msk [vmem:[%s167 + $0x14] sm:$0xf] %vm3274, %v3215
        %3281 = vst.msk [vmem:[%s167 + $0x18] sm:$0xf] %vm3274, %v3216
        %3282 = vst.msk [vmem:[%s167 + $0x1c] sm:$0xf] %vm3274, %v3217
        %3283 = vst.msk [vmem:[%s167 + $0x20] sm:$0xf] %vm3274, %v3218
        %3284 = vst.msk [vmem:[%s167 + $0x24] sm:$0xf] %vm3274, %v3219
        %3285 = vst.msk [vmem:[%s167 + $0x28] sm:$0xf] %vm3274, %v3220
        %3286 = vst.msk [vmem:[%s167 + $0x2c] sm:$0xf] %vm3274, %v3221
        %3287 = vst.msk [vmem:[%s167 + $0x30] sm:$0xf] %vm3274, %v3222
        %3288 = vst.msk [vmem:[%s167 + $0x34] sm:$0xf] %vm3274, %v3223
        %3289 = vst.msk [vmem:[%s167 + $0x38] sm:$0xf] %vm3274, %v3224
        %3290 = vst.msk [vmem:[%s167 + $0x3c] sm:$0xf] %vm3274, %v3225
        %3291 = vst.msk [vmem:[%s167 + $0x40] sm:$0xf] %vm3274, %v3226
        %3292 = vst.msk [vmem:[%s167 + $0x44] sm:$0xf] %vm3274, %v3227
        %3293 = vst.msk [vmem:[%s167 + $0x48] sm:$0xf] %vm3274, %v3228
        %3294 = vst.msk [vmem:[%s167 + $0x4c] sm:$0xf] %vm3274, %v3229
        %3295 = vst.msk [vmem:[%s167 + $0x50] sm:$0xf] %vm3274, %v3230
        %3296 = vst.msk [vmem:[%s167 + $0x54] sm:$0xf] %vm3274, %v3231
        %3297 = vst.msk [vmem:[%s167 + $0x58] sm:$0xf] %vm3274, %v3232
        %3298 = vst.msk [vmem:[%s167 + $0x5c] sm:$0xf] %vm3274, %v3233
        %3299 = vst.msk [vmem:[%s167 + $0x60] sm:$0xf] %vm3274, %v3234
        %3300 = vst.msk [vmem:[%s167 + $0x64] sm:$0xf] %vm3274, %v3235
        %3301 = vst.msk [vmem:[%s167 + $0x68] sm:$0xf] %vm3274, %v3236
        %3302 = vst.msk [vmem:[%s167 + $0x6c] sm:$0xf] %vm3274, %v3237
        %3303 = vst.msk [vmem:[%s167 + $0x70] sm:$0xf] %vm3274, %v3238
        %3304 = vst.msk [vmem:[%s167 + $0x74] sm:$0xf] %vm3274, %v3239
        %3305 = vst.msk [vmem:[%s167 + $0x78] sm:$0xf] %vm3274, %v3240
        %3306 = vst.msk [vmem:[%s167 + $0x7c] sm:$0xf] %vm3274, %v3241
        %v3307 = vsel %vm710, %v3114, 0.0
        %v3308 = vsel %vm710, %v3115, 0.0
        %v3309 = vadd.f32 %v3307, %v3308
        %v3310 = vsel %vm710, %v3116, 0.0
        %v3311 = vadd.f32 %v3309, %v3310
        %v3312 = vsel %vm710, %v3117, 0.0
        %v3313 = vadd.f32 %v3311, %v3312
        %v3314 = vsel %vm710, %v3118, 0.0
        %v3315 = vadd.f32 %v3313, %v3314
        %v3316 = vsel %vm710, %v3119, 0.0
        %v3317 = vadd.f32 %v3315, %v3316
        %v3318 = vsel %vm710, %v3120, 0.0
        %v3319 = vadd.f32 %v3317, %v3318
        %v3320 = vsel %vm710, %v3121, 0.0
        %v3321 = vadd.f32 %v3319, %v3320
        %v3322 = vsel %vm710, %v3122, 0.0
        %v3323 = vadd.f32 %v3321, %v3322
        %v3324 = vsel %vm710, %v3123, 0.0
        %v3325 = vadd.f32 %v3323, %v3324
        %v3326 = vsel %vm710, %v3124, 0.0
        %v3327 = vadd.f32 %v3325, %v3326
        %v3328 = vsel %vm710, %v3125, 0.0
        %v3329 = vadd.f32 %v3327, %v3328
        %v3330 = vsel %vm710, %v3126, 0.0
        %v3331 = vadd.f32 %v3329, %v3330
        %v3332 = vsel %vm710, %v3127, 0.0
        %v3333 = vadd.f32 %v3331, %v3332
        %v3334 = vsel %vm710, %v3128, 0.0
        %v3335 = vadd.f32 %v3333, %v3334
        %v3336 = vsel %vm710, %v3129, 0.0
        %v3337 = vadd.f32 %v3335, %v3336
        %v3338 = vsel %vm710, %v3130, 0.0
        %v3339 = vadd.f32 %v3337, %v3338
        %v3340 = vsel %vm710, %v3131, 0.0
        %v3341 = vadd.f32 %v3339, %v3340
        %v3342 = vsel %vm710, %v3132, 0.0
        %v3343 = vadd.f32 %v3341, %v3342
        %v3344 = vsel %vm710, %v3133, 0.0
        %v3345 = vadd.f32 %v3343, %v3344
        %v3346 = vsel %vm710, %v3134, 0.0
        %v3347 = vadd.f32 %v3345, %v3346
        %v3348 = vsel %vm710, %v3135, 0.0
        %v3349 = vadd.f32 %v3347, %v3348
        %v3350 = vsel %vm710, %v3136, 0.0
        %v3351 = vadd.f32 %v3349, %v3350
        %v3352 = vsel %vm710, %v3137, 0.0
        %v3353 = vadd.f32 %v3351, %v3352
        %v3354 = vsel %vm710, %v3138, 0.0
        %v3355 = vadd.f32 %v3353, %v3354
        %v3356 = vsel %vm710, %v3139, 0.0
        %v3357 = vadd.f32 %v3355, %v3356
        %v3358 = vsel %vm710, %v3140, 0.0
        %v3359 = vadd.f32 %v3357, %v3358
        %v3360 = vsel %vm710, %v3141, 0.0
        %v3361 = vadd.f32 %v3359, %v3360
        %v3362 = vsel %vm710, %v3142, 0.0
        %v3363 = vadd.f32 %v3361, %v3362
        %v3364 = vsel %vm710, %v3143, 0.0
        %v3365 = vadd.f32 %v3363, %v3364
        %v3366 = vsel %vm710, %v3144, 0.0
        %v3367 = vadd.f32 %v3365, %v3366
        %v3368 = vsel %vm710, %v3145, 0.0
        %v3369 = vadd.f32 %v3367, %v3368
        %v3370 = vrot.slane %v3369, 4
        %v3371 = vadd.f32 %v3369, %v3370
        %v3372 = vrot.slane %v3371, 2
        %v3373 = vadd.f32 %v3371, %v3372
        %v3374 = vrot.slane %v3373, 1
        %v3375 = vadd.f32 %v3373, %v3374
        %v3376 = vmul.f32 %v3114, %v3114
        %v3377 = vmul.f32 %v3115, %v3115
        %v3378 = vmul.f32 %v3116, %v3116
        %v3379 = vmul.f32 %v3117, %v3117
        %v3380 = vmul.f32 %v3118, %v3118
        %v3381 = vmul.f32 %v3119, %v3119
        %v3382 = vmul.f32 %v3120, %v3120
        %v3383 = vmul.f32 %v3121, %v3121
        %v3384 = vmul.f32 %v3122, %v3122
        %v3385 = vmul.f32 %v3123, %v3123
        %v3386 = vmul.f32 %v3124, %v3124
        %v3387 = vmul.f32 %v3125, %v3125
        %v3388 = vmul.f32 %v3126, %v3126
        %v3389 = vmul.f32 %v3127, %v3127
        %v3390 = vmul.f32 %v3128, %v3128
        %v3391 = vmul.f32 %v3129, %v3129
        %v3392 = vmul.f32 %v3130, %v3130
        %v3393 = vmul.f32 %v3131, %v3131
        %v3394 = vmul.f32 %v3132, %v3132
        %v3395 = vmul.f32 %v3133, %v3133
        %v3396 = vmul.f32 %v3134, %v3134
        %v3397 = vmul.f32 %v3135, %v3135
        %v3398 = vmul.f32 %v3136, %v3136
        %v3399 = vmul.f32 %v3137, %v3137
        %v3400 = vmul.f32 %v3138, %v3138
        %v3401 = vmul.f32 %v3139, %v3139
        %v3402 = vmul.f32 %v3140, %v3140
        %v3403 = vmul.f32 %v3141, %v3141
        %v3404 = vmul.f32 %v3142, %v3142
        %v3405 = vmul.f32 %v3143, %v3143
        %v3406 = vmul.f32 %v3144, %v3144
        %v3407 = vmul.f32 %v3145, %v3145
        %v3408 = vsel %vm710, %v3376, 0.0
        %v3409 = vsel %vm710, %v3377, 0.0
        %v3410 = vadd.f32 %v3408, %v3409
        %v3411 = vsel %vm710, %v3378, 0.0
        %v3412 = vadd.f32 %v3410, %v3411
        %v3413 = vsel %vm710, %v3379, 0.0
        %v3414 = vadd.f32 %v3412, %v3413
        %v3415 = vsel %vm710, %v3380, 0.0
        %v3416 = vadd.f32 %v3414, %v3415
        %v3417 = vsel %vm710, %v3381, 0.0
        %v3418 = vadd.f32 %v3416, %v3417
        %v3419 = vsel %vm710, %v3382, 0.0
        %v3420 = vadd.f32 %v3418, %v3419
        %v3421 = vsel %vm710, %v3383, 0.0
        %v3422 = vadd.f32 %v3420, %v3421
        %v3423 = vsel %vm710, %v3384, 0.0
        %v3424 = vadd.f32 %v3422, %v3423
        %v3425 = vsel %vm710, %v3385, 0.0
        %v3426 = vadd.f32 %v3424, %v3425
        %v3427 = vsel %vm710, %v3386, 0.0
        %v3428 = vadd.f32 %v3426, %v3427
        %v3429 = vsel %vm710, %v3387, 0.0
        %v3430 = vadd.f32 %v3428, %v3429
        %v3431 = vsel %vm710, %v3388, 0.0
        %v3432 = vadd.f32 %v3430, %v3431
        %v3433 = vsel %vm710, %v3389, 0.0
        %v3434 = vadd.f32 %v3432, %v3433
        %v3435 = vsel %vm710, %v3390, 0.0
        %v3436 = vadd.f32 %v3434, %v3435
        %v3437 = vsel %vm710, %v3391, 0.0
        %v3438 = vadd.f32 %v3436, %v3437
        %v3439 = vsel %vm710, %v3392, 0.0
        %v3440 = vadd.f32 %v3438, %v3439
        %v3441 = vsel %vm710, %v3393, 0.0
        %v3442 = vadd.f32 %v3440, %v3441
        %v3443 = vsel %vm710, %v3394, 0.0
        %v3444 = vadd.f32 %v3442, %v3443
        %v3445 = vsel %vm710, %v3395, 0.0
        %v3446 = vadd.f32 %v3444, %v3445
        %v3447 = vsel %vm710, %v3396, 0.0
        %v3448 = vadd.f32 %v3446, %v3447
        %v3449 = vsel %vm710, %v3397, 0.0
        %v3450 = vadd.f32 %v3448, %v3449
        %v3451 = vsel %vm710, %v3398, 0.0
        %v3452 = vadd.f32 %v3450, %v3451
        %v3453 = vsel %vm710, %v3399, 0.0
        %v3454 = vadd.f32 %v3452, %v3453
        %v3455 = vsel %vm710, %v3400, 0.0
        %v3456 = vadd.f32 %v3454, %v3455
        %v3457 = vsel %vm710, %v3401, 0.0
        %v3458 = vadd.f32 %v3456, %v3457
        %v3459 = vsel %vm710, %v3402, 0.0
        %v3460 = vadd.f32 %v3458, %v3459
        %v3461 = vsel %vm710, %v3403, 0.0
        %v3462 = vadd.f32 %v3460, %v3461
        %v3463 = vsel %vm710, %v3404, 0.0
        %v3464 = vadd.f32 %v3462, %v3463
        %v3465 = vsel %vm710, %v3405, 0.0
        %v3466 = vadd.f32 %v3464, %v3465
        %v3467 = vsel %vm710, %v3406, 0.0
        %v3468 = vadd.f32 %v3466, %v3467
        %v3469 = vsel %vm710, %v3407, 0.0
        %v3470 = vadd.f32 %v3468, %v3469
        %v3471 = vrot.slane %v3470, 4
        %v3472 = vadd.f32 %v3470, %v3471
        %v3473 = vrot.slane %v3472, 2
        %v3474 = vadd.f32 %v3472, %v3473
        %v3475 = vrot.slane %v3474, 1
        %v3476 = vadd.f32 %v3474, %v3475
        %3478 = vrot.lane.b32.xlu0 %v3476, 64
        %v3479 = vpop.permute.xlu0 %3478
        %v3481 = vsel %vm710, %v3375, %v3479
        %3482 = vst [vmem:[%s173] sm:$0x1] %v3481
        %s3483 = sand.u32 %s76, 1
        %s3484 = scalar_lea.sflag [#allocation3], %s3483
        %s3485 = sand.u32 %s76, 1
        %s3486 = smul.addr %s3485, 128
        %s3487 = scalar_lea.vmem [#allocation2], %s3486
        %s3488 = sand.u32 %s102, 1
        %s3489 = scalar_lea.sflag [#allocation5], %s3488
        %s3490 = sand.u32 %s102, 1
        %s3491 = scalar_lea.vmem [#allocation4], %s3490
        // Predicated region
        $region29: #{tpu_custom_call.1} parent=27 // pred_check
          %p3492 = pneg %p86
        $region30: #{tpu_custom_call.1} parent=27 // pred_check_branch
          %3494 = sbr.rel (%p3492) target = $region32
        $region31: #{tpu_custom_call.1} parent=27 // pred_region
          %s3496 = ssub.s32 2048, 2048
          %3497 = vsyncadd %s3484, %s3496
          %s3498 = smul.addr %s21, 32
          %s3499 = smul.addr %s3498, 64
          %s3500 = scalar_lea.hbm %s2, %s3499
          %s3501 = sshll.u32 %s3487, 4
          %s3502 = int_to_ptr.vmem [resolvable:$true] %s3501
          %3507 = dma.vmem_to_hbm [thread:$0]  %s3502, 2048, %s3500, %s3484, 64, 64, 4
        $region32: #{tpu_custom_call.1} parent=27 // pred_fallthru
          _
        // Predicated region
        $region33: #{tpu_custom_call.1} parent=27 // pred_check
          %p3508 = pneg %p112
        $region34: #{tpu_custom_call.1} parent=27 // pred_check_branch
          %3510 = sbr.rel (%p3508) target = $region36
        $region35: #{tpu_custom_call.1} parent=27 // pred_region
          %s3512 = ssub.s32 16, 16
          %3513 = vsyncadd %s3489, %s3512
          %s3514 = smul.addr %s21, 16
          %s3515 = scalar_lea.hbm %s3, %s3514
          %s3517 = sshll.u32 %s3491, 4
          %s3518 = int_to_ptr.vmem [resolvable:$true] %s3517
          %3520 = dma.vmem_to_hbm [thread:$0]  %s3518, 16, %s3515, %s3489
        $region36: #{tpu_custom_call.1} parent=27 // pred_fallthru
          _
      $region28: #{tpu_custom_call.1} parent=5 // pred_fallthru
        _
      %p3521 = scmp.le.s32.totalorder 2, %s16
      // Predicated region
      $region37: #{tpu_custom_call.1} parent=5 // pred_check
        %p3522 = pneg %p3521
      $region38: #{tpu_custom_call.1} parent=5 // pred_check_branch
        %3524 = sbr.rel (%p3522) target = $region40
      $region39: #{tpu_custom_call.1} parent=5 // pred_region
        %s3525 = ssub.s32 %s16, 2
        // Predicated region
        $region41: #{tpu_custom_call.1} parent=39 // pred_check
          %p3526 = pneg %p92
        $region42: #{tpu_custom_call.1} parent=39 // pred_check_branch
          %3528 = sbr.rel (%p3526) target = $region44
        $region43: #{tpu_custom_call.1} parent=39 // pred_region
          %s3529 = sand.u32 %s77, 1
          %s3530 = scalar_lea.sflag [#allocation3], %s3529
          %s3531 = sand.u32 %s77, 1
          %s3532 = smul.addr %s3531, 128
          %s3533 = scalar_lea.vmem [#allocation2], %s3532
          %3534 = dma.done %s3530, 2048
        $region44: #{tpu_custom_call.1} parent=39 // pred_fallthru
          _
        // Predicated region
        $region45: #{tpu_custom_call.1} parent=39 // pred_check
          %p3535 = pneg %p118
        $region46: #{tpu_custom_call.1} parent=39 // pred_check_branch
          %3537 = sbr.rel (%p3535) target = $region48
        $region47: #{tpu_custom_call.1} parent=39 // pred_region
          %s3538 = sand.u32 %s103, 1
          %s3539 = scalar_lea.sflag [#allocation5], %s3538
          %s3540 = sand.u32 %s103, 1
          %s3541 = scalar_lea.vmem [#allocation4], %s3540
          %3542 = dma.done %s3539, 16
        $region48: #{tpu_custom_call.1} parent=39 // pred_fallthru
          _
      $region40: #{tpu_custom_call.1} parent=5 // pred_fallthru
        _
    $region6: #{tpu_custom_call.1} parent=1 // loop_footer
      %s20 = sadd.s32 1, %s16
    $region7: #{tpu_custom_call.1} parent=1 // loop_footer_branch
      %15 = sbr.rel target = $region3
    $region8: #{tpu_custom_call.1} parent=1 // loop_exit
      _
    %3543 = vsyncpa [#allocation3], 1
    %s3544 = scalar_lea.sflag [#allocation3], 1
    %3545 = vsyncpa %s3544, 1
    %3546 = vsyncpa [#allocation5], 1
    %s3547 = scalar_lea.sflag [#allocation5], 1
    %3548 = vsyncpa %s3547, 1

</llo_original>
